<compile_context>
chip_gen: v6e
topology: v6e:2x2x1
jax: 0.10.0
libtpu: 0.0.40
codegen_flags: <defaults>
</compile_context>

<pallas_src>
import functools
import math

import jax
import jax.numpy as jnp
from jax.experimental import pallas as pl
from jax.experimental.pallas import tpu as pltpu


# ------------------------------ fused kernel --------------------------------

def _fused_forward_kernel(*refs, B, S, H, nh, n_layers):
    """One straight-line kernel: emb-LN -> n_layers x encoder -> pooler -> heads.

    Everything is kept 2-D ([rows, lanes]) with static slices so every op is a
    plain VPU/MXU/XLU primitive; attention is unrolled over (batch, head) as
    tiny 2-D matmuls, which is free here since it all stays resident in VMEM.
    """
    hd = H // nh
    scale = 1.0 / math.sqrt(hd)

    it = iter(refs)
    emb_ref = next(it)            # (B*S, H)
    mask_ref = next(it)           # (B, S) float 1.0=keep / 0.0=pad
    lex_ref = next(it)            # (B, 1)
    emb_g = next(it)              # (1, H)
    emb_b = next(it)              # (1, H)
    layers = []
    for _ in range(n_layers):
        layers.append(dict(
            qkv_w=next(it), qkv_b=next(it),      # (H, 3H), (1, 3H)
            o_w=next(it), o_b=next(it),          # (H, H), (1, H)
            ln1_g=next(it), ln1_b=next(it),      # (1, H), (1, H)
            ff1_w=next(it), ff1_b=next(it),      # (H, F), (1, F)
            ff2_w=next(it), ff2_b=next(it),      # (F, H), (1, H)
            ln2_g=next(it), ln2_b=next(it),      # (1, H), (1, H)
        ))
    pool_w = next(it)             # (H, H)
    pool_b = next(it)             # (1, H)
    head_wh = next(it)            # (H, 3)   [cls | reg] rows for pooled
    head_wl = next(it)            # (1, 3)   [cls | reg] row for lexicon feature
    head_b = next(it)             # (1, 3)
    o_ref = next(it)              # (B, 3)

    def layernorm(x, g, b):
        mean = jnp.mean(x, axis=-1, keepdims=True)
        xc = x - mean
        var = jnp.mean(xc * xc, axis=-1, keepdims=True)
        return xc * jax.lax.rsqrt(var + 1e-12) * g[...] + b[...]   # BERT eps

    # Embedding LayerNorm (no residual, no zero-tensor DMA).
    x = layernorm(emb_ref[...], emb_g, emb_b)                      # (B*S, H)

    # Additive key-padding mask per batch row (HF-style -10000 bias).
    neg_bias = [(1.0 - mask_ref[b:b + 1, :]) * (-10000.0) for b in range(B)]

    for p in layers:
        # Fused QKV projection: one (B*S, H) @ (H, 3H) MXU pass.
        qkv = jnp.dot(x, p["qkv_w"][...],
                      preferred_element_type=jnp.float32) + p["qkv_b"][...]

        # Per-(batch, head) attention, fully unrolled as 2-D matmuls in VMEM.
        ctx_rows = []
        for b in range(B):
            head_ctx = []
            for h in range(nh):
                r0 = b * S
                q_bh = qkv[r0:r0 + S, h * hd:(h + 1) * hd]                 # (S, hd)
                k_bh = qkv[r0:r0 + S, H + h * hd:H + (h + 1) * hd]         # (S, hd)
                v_bh = qkv[r0:r0 + S, 2 * H + h * hd:2 * H + (h + 1) * hd]  # (S, hd)
                s = jnp.dot(q_bh, k_bh.T,
                            preferred_element_type=jnp.float32) * scale     # (S, S)
                s = s + neg_bias[b]                                         # broadcast (1,S)
                s = s - jnp.max(s, axis=-1, keepdims=True)
                pexp = jnp.exp(s)
                pexp = pexp / jnp.sum(pexp, axis=-1, keepdims=True)
                head_ctx.append(jnp.dot(pexp, v_bh,
                                        preferred_element_type=jnp.float32))  # (S, hd)
            ctx_rows.append(jnp.concatenate(head_ctx, axis=-1))             # (S, H)
        ctx = jnp.concatenate(ctx_rows, axis=0)                             # (B*S, H)

        # Output projection + residual + LN1.
        attn_out = jnp.dot(ctx, p["o_w"][...],
                           preferred_element_type=jnp.float32) + p["o_b"][...]
        x = layernorm(attn_out + x, p["ln1_g"], p["ln1_b"])

        # FFN (GELU) + residual + LN2.
        # TODO(synk): HF BERT uses exact erf-GELU; tanh-approximate GELU used here.
        ffh = jnp.dot(x, p["ff1_w"][...],
                      preferred_element_type=jnp.float32) + p["ff1_b"][...]
        ffh = jax.nn.gelu(ffh, approximate=True)
        ff = jnp.dot(ffh, p["ff2_w"][...],
                     preferred_element_type=jnp.float32) + p["ff2_b"][...]
        x = layernorm(ff + x, p["ln2_g"], p["ln2_b"])

    # Pooler on the [CLS] row of each batch element.
    cls_tok = jnp.concatenate([x[b * S:b * S + 1, :] for b in range(B)], axis=0)  # (B, H)
    pooled = jnp.tanh(jnp.dot(cls_tok, pool_w[...],
                              preferred_element_type=jnp.float32) + pool_b[...])

    # Dropout(0.3) is identity in eval mode.
    # Heads: [classifier | regressor] fused; lexicon feature folded in as a
    # rank-1 term instead of a 33-lane concat.
    out3 = (jnp.dot(pooled, head_wh[...], preferred_element_type=jnp.float32)
            + lex_ref[...] * head_wl[...] + head_b[...])                          # (B, 3)
    o_ref[...] = out3.astype(o_ref.dtype)


# ------------------------------ forward wrapper ------------------------------

def multitask_forward(params, input_ids, attention_mask, lexicon_feat, cfg):
    B, S = input_ids.shape
    H, nh, n_layers = cfg["hidden"], cfg["heads"], cfg["layers"]

    # Embedding gathers stay in plain JAX (glue).
    we = params["word_emb"][input_ids]                 # (B, S, H)
    pe = params["pos_emb"][:S][None, :, :]             # (1, S, H)
    te = params["type_emb"][0][None, None, :]          # token_type_ids == 0
    emb = (we + pe + te).reshape(B * S, H).astype(jnp.float32)

    mask = attention_mask.astype(jnp.float32)          # (B, S)
    lex = lexicon_feat.astype(jnp.float32)             # (B, 1)

    # Fused head weights: [classifier(2) | regressor(1)] -> (H, 3)/(1, 3)/(1, 3).
    head_wh = jnp.concatenate([params["cls_w"][:H], params["reg_w"][:H]], axis=1)
    head_wl = jnp.concatenate([params["cls_w"][H:], params["reg_w"][H:]], axis=1)
    head_b = jnp.concatenate([params["cls_b"], params["reg_b"]])[None, :]

    inputs = [emb, mask, lex,
              params["emb_ln_g"][None, :], params["emb_ln_b"][None, :]]
    for lp in params["layers"]:
        qkv_w = jnp.concatenate([lp["q_w"], lp["k_w"], lp["v_w"]], axis=1)   # (H, 3H)
        qkv_b = jnp.concatenate([lp["q_b"], lp["k_b"], lp["v_b"]])[None, :]  # (1, 3H)
        inputs += [qkv_w, qkv_b,
                   lp["o_w"], lp["o_b"][None, :],
                   lp["ln1_g"][None, :], lp["ln1_b"][None, :],
                   lp["ff1_w"], lp["ff1_b"][None, :],
                   lp["ff2_w"], lp["ff2_b"][None, :],
                   lp["ln2_g"][None, :], lp["ln2_b"][None, :]]
    inputs += [params["pooler_w"], params["pooler_b"][None, :],
               head_wh, head_wl, head_b]

    vmem_spec = pl.BlockSpec(memory_space=pltpu.MemorySpace.VMEM)
    out3 = pl.pallas_call(
        functools.partial(_fused_forward_kernel,
                          B=B, S=S, H=H, nh=nh, n_layers=n_layers),
        out_shape=jax.ShapeDtypeStruct((B, 3), jnp.float32),
        in_specs=[vmem_spec] * len(inputs),
        out_specs=vmem_spec,
    )(*inputs)

    logits = out3[:, :2]
    intensity = out3[:, 2]
    return logits, intensity


# ------------------------------- init / main --------------------------------

def init_params(key, cfg):
    H, F = cfg["hidden"], cfg["ffn"]
    V, P, L = cfg["vocab"], cfg["max_pos"], cfg["layers"]
    keys = iter(jax.random.split(key, 16 + 12 * L))

    def nrm(shape, scale=0.02):
        return scale * jax.random.normal(next(keys), shape, dtype=jnp.float32)

    params = {
        "word_emb": nrm((V, H)),
        "pos_emb": nrm((P, H)),
        "type_emb": nrm((2, H)),
        "emb_ln_g": jnp.ones((H,), jnp.float32),
        "emb_ln_b": jnp.zeros((H,), jnp.float32),
        "pooler_w": nrm((H, H)),
        "pooler_b": jnp.zeros((H,), jnp.float32),
        "cls_w": nrm((H + 1, 2)),
        "cls_b": jnp.zeros((2,), jnp.float32),
        "reg_w": nrm((H + 1, 1)),
        "reg_b": jnp.zeros((1,), jnp.float32),
        "layers": [],
    }
    for _ in range(L):
        params["layers"].append({
            "q_w": nrm((H, H)), "q_b": jnp.zeros((H,), jnp.float32),
            "k_w": nrm((H, H)), "k_b": jnp.zeros((H,), jnp.float32),
            "v_w": nrm((H, H)), "v_b": jnp.zeros((H,), jnp.float32),
            "o_w": nrm((H, H)), "o_b": jnp.zeros((H,), jnp.float32),
            "ln1_g": jnp.ones((H,), jnp.float32),
            "ln1_b": jnp.zeros((H,), jnp.float32),
            "ff1_w": nrm((H, F)), "ff1_b": jnp.zeros((F,), jnp.float32),
            "ff2_w": nrm((F, H)), "ff2_b": jnp.zeros((H,), jnp.float32),
            "ln2_g": jnp.ones((H,), jnp.float32),
            "ln2_b": jnp.zeros((H,), jnp.float32),
        })
    return params


if __name__ == "__main__":
    cfg = dict(hidden=32, heads=4, ffn=64, vocab=50, max_pos=16, layers=2)
    B, S = 2, 8

    key = jax.random.PRNGKey(0)
    k_ids, k_lex, k_params = jax.random.split(key, 3)
    input_ids = jax.random.randint(k_ids, (B, S), 0, cfg["vocab"], dtype=jnp.int32)
    attention_mask = jnp.array([[1, 1, 1, 1, 1, 1, 1, 1],
                                [1, 1, 1, 1, 1, 1, 0, 0]], dtype=jnp.int32)
    lexicon_feat = jax.random.normal(k_lex, (B, 1), dtype=jnp.float32)
    params = init_params(k_params, cfg)

    fwd = jax.jit(functools.partial(multitask_forward, cfg=cfg))
    logits, intensity = fwd(params, input_ids, attention_mask, lexicon_feat)
    jax.block_until_ready((logits, intensity))

    assert logits.shape == (B, 2), logits.shape
    assert intensity.shape == (B,), intensity.shape
    assert jnp.all(jnp.isfinite(logits)) and jnp.all(jnp.isfinite(intensity))
    print("KERNEL_OK")
</pallas_src>

<mosaic_0001>
module attributes {stable_mosaic.version = 11 : i64} {
  func.func @_fused_forward_kernel(%arg0: memref<16x32xf32, #tpu.memory_space<vmem>>, %arg1: memref<2x8xf32, #tpu.memory_space<vmem>>, %arg2: memref<2x1xf32, #tpu.memory_space<vmem>>, %arg3: memref<1x32xf32, #tpu.memory_space<vmem>>, %arg4: memref<1x32xf32, #tpu.memory_space<vmem>>, %arg5: memref<32x96xf32, #tpu.memory_space<vmem>>, %arg6: memref<1x96xf32, #tpu.memory_space<vmem>>, %arg7: memref<32x32xf32, #tpu.memory_space<vmem>>, %arg8: memref<1x32xf32, #tpu.memory_space<vmem>>, %arg9: memref<1x32xf32, #tpu.memory_space<vmem>>, %arg10: memref<1x32xf32, #tpu.memory_space<vmem>>, %arg11: memref<32x64xf32, #tpu.memory_space<vmem>>, %arg12: memref<1x64xf32, #tpu.memory_space<vmem>>, %arg13: memref<64x32xf32, #tpu.memory_space<vmem>>, %arg14: memref<1x32xf32, #tpu.memory_space<vmem>>, %arg15: memref<1x32xf32, #tpu.memory_space<vmem>>, %arg16: memref<1x32xf32, #tpu.memory_space<vmem>>, %arg17: memref<32x96xf32, #tpu.memory_space<vmem>>, %arg18: memref<1x96xf32, #tpu.memory_space<vmem>>, %arg19: memref<32x32xf32, #tpu.memory_space<vmem>>, %arg20: memref<1x32xf32, #tpu.memory_space<vmem>>, %arg21: memref<1x32xf32, #tpu.memory_space<vmem>>, %arg22: memref<1x32xf32, #tpu.memory_space<vmem>>, %arg23: memref<32x64xf32, #tpu.memory_space<vmem>>, %arg24: memref<1x64xf32, #tpu.memory_space<vmem>>, %arg25: memref<64x32xf32, #tpu.memory_space<vmem>>, %arg26: memref<1x32xf32, #tpu.memory_space<vmem>>, %arg27: memref<1x32xf32, #tpu.memory_space<vmem>>, %arg28: memref<1x32xf32, #tpu.memory_space<vmem>>, %arg29: memref<32x32xf32, #tpu.memory_space<vmem>>, %arg30: memref<1x32xf32, #tpu.memory_space<vmem>>, %arg31: memref<32x3xf32, #tpu.memory_space<vmem>>, %arg32: memref<1x3xf32, #tpu.memory_space<vmem>>, %arg33: memref<1x3xf32, #tpu.memory_space<vmem>>, %arg34: memref<2x3xf32, #tpu.memory_space<vmem>>) attributes {dimension_semantics = [], scalar_prefetch = 0 : i64, scratch_operands = 0 : i64, tpu.core_type = #tpu.core_type<tc>} {
    %c0 = arith.constant 0 : index
    %c0_0 = arith.constant 0 : index
    %0 = vector.load %arg0[%c0, %c0_0] : memref<16x32xf32, #tpu.memory_space<vmem>>, vector<16x32xf32>
    %cst = arith.constant dense<0.000000e+00> : vector<16xf32>
    %1 = vector.multi_reduction <add>, %0, %cst [1] : vector<16x32xf32> to vector<16xf32>
    %2 = vector.shape_cast %1 : vector<16xf32> to vector<16x1xf32>
    %cst_1 = arith.constant 3.200000e+01 : f32
    %3 = vector.broadcast %cst_1 : f32 to vector<16x1xf32>
    %4 = arith.divf %2, %3 : vector<16x1xf32>
    %5 = vector.broadcast %4 : vector<16x1xf32> to vector<16x32xf32>
    %6 = arith.subf %0, %5 : vector<16x32xf32>
    %7 = arith.mulf %6, %6 : vector<16x32xf32>
    %cst_2 = arith.constant dense<0.000000e+00> : vector<16xf32>
    %8 = vector.multi_reduction <add>, %7, %cst_2 [1] : vector<16x32xf32> to vector<16xf32>
    %9 = vector.shape_cast %8 : vector<16xf32> to vector<16x1xf32>
    %cst_3 = arith.constant 3.200000e+01 : f32
    %10 = vector.broadcast %cst_3 : f32 to vector<16x1xf32>
    %11 = arith.divf %9, %10 : vector<16x1xf32>
    %cst_4 = arith.constant 9.99999996E-13 : f32
    %12 = vector.broadcast %cst_4 : f32 to vector<16x1xf32>
    %13 = arith.addf %11, %12 : vector<16x1xf32>
    %14 = math.rsqrt %13 : vector<16x1xf32>
    %15 = vector.broadcast %14 : vector<16x1xf32> to vector<16x32xf32>
    %16 = arith.mulf %6, %15 : vector<16x32xf32>
    %c0_5 = arith.constant 0 : index
    %c0_6 = arith.constant 0 : index
    %17 = vector.load %arg3[%c0_5, %c0_6] : memref<1x32xf32, #tpu.memory_space<vmem>>, vector<1x32xf32>
    %18 = vector.broadcast %17 : vector<1x32xf32> to vector<16x32xf32>
    %19 = arith.mulf %16, %18 : vector<16x32xf32>
    %c0_7 = arith.constant 0 : index
    %c0_8 = arith.constant 0 : index
    %20 = vector.load %arg4[%c0_7, %c0_8] : memref<1x32xf32, #tpu.memory_space<vmem>>, vector<1x32xf32>
    %21 = vector.broadcast %20 : vector<1x32xf32> to vector<16x32xf32>
    %22 = arith.addf %19, %21 : vector<16x32xf32>
    %c0_9 = arith.constant 0 : index
    %c0_10 = arith.constant 0 : index
    %23 = vector.load %arg1[%c0_9, %c0_10] : memref<2x8xf32, #tpu.memory_space<vmem>>, vector<1x8xf32>
    %cst_11 = arith.constant 1.000000e+00 : f32
    %24 = vector.broadcast %cst_11 : f32 to vector<1x8xf32>
    %25 = arith.subf %24, %23 : vector<1x8xf32>
    %cst_12 = arith.constant -1.000000e+04 : f32
    %26 = vector.broadcast %cst_12 : f32 to vector<1x8xf32>
    %27 = arith.mulf %25, %26 : vector<1x8xf32>
    %c1 = arith.constant 1 : index
    %c0_13 = arith.constant 0 : index
    %28 = vector.load %arg1[%c1, %c0_13] : memref<2x8xf32, #tpu.memory_space<vmem>>, vector<1x8xf32>
    %cst_14 = arith.constant 1.000000e+00 : f32
    %29 = vector.broadcast %cst_14 : f32 to vector<1x8xf32>
    %30 = arith.subf %29, %28 : vector<1x8xf32>
    %cst_15 = arith.constant -1.000000e+04 : f32
    %31 = vector.broadcast %cst_15 : f32 to vector<1x8xf32>
    %32 = arith.mulf %30, %31 : vector<1x8xf32>
    %c0_16 = arith.constant 0 : index
    %c0_17 = arith.constant 0 : index
    %33 = vector.load %arg5[%c0_16, %c0_17] : memref<32x96xf32, #tpu.memory_space<vmem>>, vector<32x96xf32>
    %cst_18 = arith.constant dense<0.000000e+00> : vector<16x96xf32>
    %34 = tpu.matmul %22, %33, %cst_18 {dimension_numbers = #tpu.dot_dimension_numbers<[1], [0], [0], [1], [0, 0, 1, 1], [], []>} : vector<16x32xf32>, vector<32x96xf32>, vector<16x96xf32> -> vector<16x96xf32>
    %c0_19 = arith.constant 0 : index
    %c0_20 = arith.constant 0 : index
    %35 = vector.load %arg6[%c0_19, %c0_20] : memref<1x96xf32, #tpu.memory_space<vmem>>, vector<1x96xf32>
    %36 = vector.broadcast %35 : vector<1x96xf32> to vector<16x96xf32>
    %37 = arith.addf %34, %36 : vector<16x96xf32>
    %38 = vector.extract_strided_slice %37 {offsets = [0, 0], sizes = [8, 8], strides = [1, 1]} : vector<16x96xf32> to vector<8x8xf32>
    %39 = vector.extract_strided_slice %37 {offsets = [0, 32], sizes = [8, 8], strides = [1, 1]} : vector<16x96xf32> to vector<8x8xf32>
    %40 = vector.extract_strided_slice %37 {offsets = [0, 64], sizes = [8, 8], strides = [1, 1]} : vector<16x96xf32> to vector<8x8xf32>
    %41 = tpu.transpose %39, [1, 0] : vector<8x8xf32> -> vector<8x8xf32>
    %cst_21 = arith.constant dense<0.000000e+00> : vector<8x8xf32>
    %42 = tpu.matmul %38, %41, %cst_21 {dimension_numbers = #tpu.dot_dimension_numbers<[1], [0], [0], [1], [0, 0, 1, 1], [], []>} : vector<8x8xf32>, vector<8x8xf32>, vector<8x8xf32> -> vector<8x8xf32>
    %cst_22 = arith.constant 0.353553385 : f32
    %43 = vector.broadcast %cst_22 : f32 to vector<8x8xf32>
    %44 = arith.mulf %42, %43 : vector<8x8xf32>
    %45 = vector.broadcast %27 : vector<1x8xf32> to vector<8x8xf32>
    %46 = arith.addf %44, %45 : vector<8x8xf32>
    %cst_23 = arith.constant dense<0xFF800000> : vector<8xf32>
    %47 = vector.multi_reduction <maximumf>, %46, %cst_23 [1] : vector<8x8xf32> to vector<8xf32>
    %48 = vector.shape_cast %47 : vector<8xf32> to vector<8x1xf32>
    %49 = vector.broadcast %48 : vector<8x1xf32> to vector<8x8xf32>
    %50 = arith.subf %46, %49 : vector<8x8xf32>
    %51 = math.exp %50 : vector<8x8xf32>
    %cst_24 = arith.constant dense<0.000000e+00> : vector<8xf32>
    %52 = vector.multi_reduction <add>, %51, %cst_24 [1] : vector<8x8xf32> to vector<8xf32>
    %53 = vector.shape_cast %52 : vector<8xf32> to vector<8x1xf32>
    %54 = vector.broadcast %53 : vector<8x1xf32> to vector<8x8xf32>
    %55 = arith.divf %51, %54 : vector<8x8xf32>
    %cst_25 = arith.constant dense<0.000000e+00> : vector<8x8xf32>
    %56 = tpu.matmul %55, %40, %cst_25 {dimension_numbers = #tpu.dot_dimension_numbers<[1], [0], [0], [1], [0, 0, 1, 1], [], []>} : vector<8x8xf32>, vector<8x8xf32>, vector<8x8xf32> -> vector<8x8xf32>
    %57 = vector.extract_strided_slice %37 {offsets = [0, 8], sizes = [8, 8], strides = [1, 1]} : vector<16x96xf32> to vector<8x8xf32>
    %58 = vector.extract_strided_slice %37 {offsets = [0, 40], sizes = [8, 8], strides = [1, 1]} : vector<16x96xf32> to vector<8x8xf32>
    %59 = vector.extract_strided_slice %37 {offsets = [0, 72], sizes = [8, 8], strides = [1, 1]} : vector<16x96xf32> to vector<8x8xf32>
    %60 = tpu.transpose %58, [1, 0] : vector<8x8xf32> -> vector<8x8xf32>
    %cst_26 = arith.constant dense<0.000000e+00> : vector<8x8xf32>
    %61 = tpu.matmul %57, %60, %cst_26 {dimension_numbers = #tpu.dot_dimension_numbers<[1], [0], [0], [1], [0, 0, 1, 1], [], []>} : vector<8x8xf32>, vector<8x8xf32>, vector<8x8xf32> -> vector<8x8xf32>
    %cst_27 = arith.constant 0.353553385 : f32
    %62 = vector.broadcast %cst_27 : f32 to vector<8x8xf32>
    %63 = arith.mulf %61, %62 : vector<8x8xf32>
    %64 = vector.broadcast %27 : vector<1x8xf32> to vector<8x8xf32>
    %65 = arith.addf %63, %64 : vector<8x8xf32>
    %cst_28 = arith.constant dense<0xFF800000> : vector<8xf32>
    %66 = vector.multi_reduction <maximumf>, %65, %cst_28 [1] : vector<8x8xf32> to vector<8xf32>
    %67 = vector.shape_cast %66 : vector<8xf32> to vector<8x1xf32>
    %68 = vector.broadcast %67 : vector<8x1xf32> to vector<8x8xf32>
    %69 = arith.subf %65, %68 : vector<8x8xf32>
    %70 = math.exp %69 : vector<8x8xf32>
    %cst_29 = arith.constant dense<0.000000e+00> : vector<8xf32>
    %71 = vector.multi_reduction <add>, %70, %cst_29 [1] : vector<8x8xf32> to vector<8xf32>
    %72 = vector.shape_cast %71 : vector<8xf32> to vector<8x1xf32>
    %73 = vector.broadcast %72 : vector<8x1xf32> to vector<8x8xf32>
    %74 = arith.divf %70, %73 : vector<8x8xf32>
    %cst_30 = arith.constant dense<0.000000e+00> : vector<8x8xf32>
    %75 = tpu.matmul %74, %59, %cst_30 {dimension_numbers = #tpu.dot_dimension_numbers<[1], [0], [0], [1], [0, 0, 1, 1], [], []>} : vector<8x8xf32>, vector<8x8xf32>, vector<8x8xf32> -> vector<8x8xf32>
    %76 = vector.extract_strided_slice %37 {offsets = [0, 16], sizes = [8, 8], strides = [1, 1]} : vector<16x96xf32> to vector<8x8xf32>
    %77 = vector.extract_strided_slice %37 {offsets = [0, 48], sizes = [8, 8], strides = [1, 1]} : vector<16x96xf32> to vector<8x8xf32>
    %78 = vector.extract_strided_slice %37 {offsets = [0, 80], sizes = [8, 8], strides = [1, 1]} : vector<16x96xf32> to vector<8x8xf32>
    %79 = tpu.transpose %77, [1, 0] : vector<8x8xf32> -> vector<8x8xf32>
    %cst_31 = arith.constant dense<0.000000e+00> : vector<8x8xf32>
    %80 = tpu.matmul %76, %79, %cst_31 {dimension_numbers = #tpu.dot_dimension_numbers<[1], [0], [0], [1], [0, 0, 1, 1], [], []>} : vector<8x8xf32>, vector<8x8xf32>, vector<8x8xf32> -> vector<8x8xf32>
    %cst_32 = arith.constant 0.353553385 : f32
    %81 = vector.broadcast %cst_32 : f32 to vector<8x8xf32>
    %82 = arith.mulf %80, %81 : vector<8x8xf32>
    %83 = vector.broadcast %27 : vector<1x8xf32> to vector<8x8xf32>
    %84 = arith.addf %82, %83 : vector<8x8xf32>
    %cst_33 = arith.constant dense<0xFF800000> : vector<8xf32>
    %85 = vector.multi_reduction <maximumf>, %84, %cst_33 [1] : vector<8x8xf32> to vector<8xf32>
    %86 = vector.shape_cast %85 : vector<8xf32> to vector<8x1xf32>
    %87 = vector.broadcast %86 : vector<8x1xf32> to vector<8x8xf32>
    %88 = arith.subf %84, %87 : vector<8x8xf32>
    %89 = math.exp %88 : vector<8x8xf32>
    %cst_34 = arith.constant dense<0.000000e+00> : vector<8xf32>
    %90 = vector.multi_reduction <add>, %89, %cst_34 [1] : vector<8x8xf32> to vector<8xf32>
    %91 = vector.shape_cast %90 : vector<8xf32> to vector<8x1xf32>
    %92 = vector.broadcast %91 : vector<8x1xf32> to vector<8x8xf32>
    %93 = arith.divf %89, %92 : vector<8x8xf32>
    %cst_35 = arith.constant dense<0.000000e+00> : vector<8x8xf32>
    %94 = tpu.matmul %93, %78, %cst_35 {dimension_numbers = #tpu.dot_dimension_numbers<[1], [0], [0], [1], [0, 0, 1, 1], [], []>} : vector<8x8xf32>, vector<8x8xf32>, vector<8x8xf32> -> vector<8x8xf32>
    %95 = vector.extract_strided_slice %37 {offsets = [0, 24], sizes = [8, 8], strides = [1, 1]} : vector<16x96xf32> to vector<8x8xf32>
    %96 = vector.extract_strided_slice %37 {offsets = [0, 56], sizes = [8, 8], strides = [1, 1]} : vector<16x96xf32> to vector<8x8xf32>
    %97 = vector.extract_strided_slice %37 {offsets = [0, 88], sizes = [8, 8], strides = [1, 1]} : vector<16x96xf32> to vector<8x8xf32>
    %98 = tpu.transpose %96, [1, 0] : vector<8x8xf32> -> vector<8x8xf32>
    %cst_36 = arith.constant dense<0.000000e+00> : vector<8x8xf32>
    %99 = tpu.matmul %95, %98, %cst_36 {dimension_numbers = #tpu.dot_dimension_numbers<[1], [0], [0], [1], [0, 0, 1, 1], [], []>} : vector<8x8xf32>, vector<8x8xf32>, vector<8x8xf32> -> vector<8x8xf32>
    %cst_37 = arith.constant 0.353553385 : f32
    %100 = vector.broadcast %cst_37 : f32 to vector<8x8xf32>
    %101 = arith.mulf %99, %100 : vector<8x8xf32>
    %102 = vector.broadcast %27 : vector<1x8xf32> to vector<8x8xf32>
    %103 = arith.addf %101, %102 : vector<8x8xf32>
    %cst_38 = arith.constant dense<0xFF800000> : vector<8xf32>
    %104 = vector.multi_reduction <maximumf>, %103, %cst_38 [1] : vector<8x8xf32> to vector<8xf32>
    %105 = vector.shape_cast %104 : vector<8xf32> to vector<8x1xf32>
    %106 = vector.broadcast %105 : vector<8x1xf32> to vector<8x8xf32>
    %107 = arith.subf %103, %106 : vector<8x8xf32>
    %108 = math.exp %107 : vector<8x8xf32>
    %cst_39 = arith.constant dense<0.000000e+00> : vector<8xf32>
    %109 = vector.multi_reduction <add>, %108, %cst_39 [1] : vector<8x8xf32> to vector<8xf32>
    %110 = vector.shape_cast %109 : vector<8xf32> to vector<8x1xf32>
    %111 = vector.broadcast %110 : vector<8x1xf32> to vector<8x8xf32>
    %112 = arith.divf %108, %111 : vector<8x8xf32>
    %cst_40 = arith.constant dense<0.000000e+00> : vector<8x8xf32>
    %113 = tpu.matmul %112, %97, %cst_40 {dimension_numbers = #tpu.dot_dimension_numbers<[1], [0], [0], [1], [0, 0, 1, 1], [], []>} : vector<8x8xf32>, vector<8x8xf32>, vector<8x8xf32> -> vector<8x8xf32>
    %114 = tpu.concatenate %56, %75, %94, %113 in 1 : vector<8x8xf32>, vector<8x8xf32>, vector<8x8xf32>, vector<8x8xf32> -> vector<8x32xf32>
    %115 = vector.extract_strided_slice %37 {offsets = [8, 0], sizes = [8, 8], strides = [1, 1]} : vector<16x96xf32> to vector<8x8xf32>
    %116 = vector.extract_strided_slice %37 {offsets = [8, 32], sizes = [8, 8], strides = [1, 1]} : vector<16x96xf32> to vector<8x8xf32>
    %117 = vector.extract_strided_slice %37 {offsets = [8, 64], sizes = [8, 8], strides = [1, 1]} : vector<16x96xf32> to vector<8x8xf32>
    %118 = tpu.transpose %116, [1, 0] : vector<8x8xf32> -> vector<8x8xf32>
    %cst_41 = arith.constant dense<0.000000e+00> : vector<8x8xf32>
    %119 = tpu.matmul %115, %118, %cst_41 {dimension_numbers = #tpu.dot_dimension_numbers<[1], [0], [0], [1], [0, 0, 1, 1], [], []>} : vector<8x8xf32>, vector<8x8xf32>, vector<8x8xf32> -> vector<8x8xf32>
    %cst_42 = arith.constant 0.353553385 : f32
    %120 = vector.broadcast %cst_42 : f32 to vector<8x8xf32>
    %121 = arith.mulf %119, %120 : vector<8x8xf32>
    %122 = vector.broadcast %32 : vector<1x8xf32> to vector<8x8xf32>
    %123 = arith.addf %121, %122 : vector<8x8xf32>
    %cst_43 = arith.constant dense<0xFF800000> : vector<8xf32>
    %124 = vector.multi_reduction <maximumf>, %123, %cst_43 [1] : vector<8x8xf32> to vector<8xf32>
    %125 = vector.shape_cast %124 : vector<8xf32> to vector<8x1xf32>
    %126 = vector.broadcast %125 : vector<8x1xf32> to vector<8x8xf32>
    %127 = arith.subf %123, %126 : vector<8x8xf32>
    %128 = math.exp %127 : vector<8x8xf32>
    %cst_44 = arith.constant dense<0.000000e+00> : vector<8xf32>
    %129 = vector.multi_reduction <add>, %128, %cst_44 [1] : vector<8x8xf32> to vector<8xf32>
    %130 = vector.shape_cast %129 : vector<8xf32> to vector<8x1xf32>
    %131 = vector.broadcast %130 : vector<8x1xf32> to vector<8x8xf32>
    %132 = arith.divf %128, %131 : vector<8x8xf32>
    %cst_45 = arith.constant dense<0.000000e+00> : vector<8x8xf32>
    %133 = tpu.matmul %132, %117, %cst_45 {dimension_numbers = #tpu.dot_dimension_numbers<[1], [0], [0], [1], [0, 0, 1, 1], [], []>} : vector<8x8xf32>, vector<8x8xf32>, vector<8x8xf32> -> vector<8x8xf32>
    %134 = vector.extract_strided_slice %37 {offsets = [8, 8], sizes = [8, 8], strides = [1, 1]} : vector<16x96xf32> to vector<8x8xf32>
    %135 = vector.extract_strided_slice %37 {offsets = [8, 40], sizes = [8, 8], strides = [1, 1]} : vector<16x96xf32> to vector<8x8xf32>
    %136 = vector.extract_strided_slice %37 {offsets = [8, 72], sizes = [8, 8], strides = [1, 1]} : vector<16x96xf32> to vector<8x8xf32>
    %137 = tpu.transpose %135, [1, 0] : vector<8x8xf32> -> vector<8x8xf32>
    %cst_46 = arith.constant dense<0.000000e+00> : vector<8x8xf32>
    %138 = tpu.matmul %134, %137, %cst_46 {dimension_numbers = #tpu.dot_dimension_numbers<[1], [0], [0], [1], [0, 0, 1, 1], [], []>} : vector<8x8xf32>, vector<8x8xf32>, vector<8x8xf32> -> vector<8x8xf32>
    %cst_47 = arith.constant 0.353553385 : f32
    %139 = vector.broadcast %cst_47 : f32 to vector<8x8xf32>
    %140 = arith.mulf %138, %139 : vector<8x8xf32>
    %141 = vector.broadcast %32 : vector<1x8xf32> to vector<8x8xf32>
    %142 = arith.addf %140, %141 : vector<8x8xf32>
    %cst_48 = arith.constant dense<0xFF800000> : vector<8xf32>
    %143 = vector.multi_reduction <maximumf>, %142, %cst_48 [1] : vector<8x8xf32> to vector<8xf32>
    %144 = vector.shape_cast %143 : vector<8xf32> to vector<8x1xf32>
    %145 = vector.broadcast %144 : vector<8x1xf32> to vector<8x8xf32>
    %146 = arith.subf %142, %145 : vector<8x8xf32>
    %147 = math.exp %146 : vector<8x8xf32>
    %cst_49 = arith.constant dense<0.000000e+00> : vector<8xf32>
    %148 = vector.multi_reduction <add>, %147, %cst_49 [1] : vector<8x8xf32> to vector<8xf32>
    %149 = vector.shape_cast %148 : vector<8xf32> to vector<8x1xf32>
    %150 = vector.broadcast %149 : vector<8x1xf32> to vector<8x8xf32>
    %151 = arith.divf %147, %150 : vector<8x8xf32>
    %cst_50 = arith.constant dense<0.000000e+00> : vector<8x8xf32>
    %152 = tpu.matmul %151, %136, %cst_50 {dimension_numbers = #tpu.dot_dimension_numbers<[1], [0], [0], [1], [0, 0, 1, 1], [], []>} : vector<8x8xf32>, vector<8x8xf32>, vector<8x8xf32> -> vector<8x8xf32>
    %153 = vector.extract_strided_slice %37 {offsets = [8, 16], sizes = [8, 8], strides = [1, 1]} : vector<16x96xf32> to vector<8x8xf32>
    %154 = vector.extract_strided_slice %37 {offsets = [8, 48], sizes = [8, 8], strides = [1, 1]} : vector<16x96xf32> to vector<8x8xf32>
    %155 = vector.extract_strided_slice %37 {offsets = [8, 80], sizes = [8, 8], strides = [1, 1]} : vector<16x96xf32> to vector<8x8xf32>
    %156 = tpu.transpose %154, [1, 0] : vector<8x8xf32> -> vector<8x8xf32>
    %cst_51 = arith.constant dense<0.000000e+00> : vector<8x8xf32>
    %157 = tpu.matmul %153, %156, %cst_51 {dimension_numbers = #tpu.dot_dimension_numbers<[1], [0], [0], [1], [0, 0, 1, 1], [], []>} : vector<8x8xf32>, vector<8x8xf32>, vector<8x8xf32> -> vector<8x8xf32>
    %cst_52 = arith.constant 0.353553385 : f32
    %158 = vector.broadcast %cst_52 : f32 to vector<8x8xf32>
    %159 = arith.mulf %157, %158 : vector<8x8xf32>
    %160 = vector.broadcast %32 : vector<1x8xf32> to vector<8x8xf32>
    %161 = arith.addf %159, %160 : vector<8x8xf32>
    %cst_53 = arith.constant dense<0xFF800000> : vector<8xf32>
    %162 = vector.multi_reduction <maximumf>, %161, %cst_53 [1] : vector<8x8xf32> to vector<8xf32>
    %163 = vector.shape_cast %162 : vector<8xf32> to vector<8x1xf32>
    %164 = vector.broadcast %163 : vector<8x1xf32> to vector<8x8xf32>
    %165 = arith.subf %161, %164 : vector<8x8xf32>
    %166 = math.exp %165 : vector<8x8xf32>
    %cst_54 = arith.constant dense<0.000000e+00> : vector<8xf32>
    %167 = vector.multi_reduction <add>, %166, %cst_54 [1] : vector<8x8xf32> to vector<8xf32>
    %168 = vector.shape_cast %167 : vector<8xf32> to vector<8x1xf32>
    %169 = vector.broadcast %168 : vector<8x1xf32> to vector<8x8xf32>
    %170 = arith.divf %166, %169 : vector<8x8xf32>
    %cst_55 = arith.constant dense<0.000000e+00> : vector<8x8xf32>
    %171 = tpu.matmul %170, %155, %cst_55 {dimension_numbers = #tpu.dot_dimension_numbers<[1], [0], [0], [1], [0, 0, 1, 1], [], []>} : vector<8x8xf32>, vector<8x8xf32>, vector<8x8xf32> -> vector<8x8xf32>
    %172 = vector.extract_strided_slice %37 {offsets = [8, 24], sizes = [8, 8], strides = [1, 1]} : vector<16x96xf32> to vector<8x8xf32>
    %173 = vector.extract_strided_slice %37 {offsets = [8, 56], sizes = [8, 8], strides = [1, 1]} : vector<16x96xf32> to vector<8x8xf32>
    %174 = vector.extract_strided_slice %37 {offsets = [8, 88], sizes = [8, 8], strides = [1, 1]} : vector<16x96xf32> to vector<8x8xf32>
    %175 = tpu.transpose %173, [1, 0] : vector<8x8xf32> -> vector<8x8xf32>
    %cst_56 = arith.constant dense<0.000000e+00> : vector<8x8xf32>
    %176 = tpu.matmul %172, %175, %cst_56 {dimension_numbers = #tpu.dot_dimension_numbers<[1], [0], [0], [1], [0, 0, 1, 1], [], []>} : vector<8x8xf32>, vector<8x8xf32>, vector<8x8xf32> -> vector<8x8xf32>
    %cst_57 = arith.constant 0.353553385 : f32
    %177 = vector.broadcast %cst_57 : f32 to vector<8x8xf32>
    %178 = arith.mulf %176, %177 : vector<8x8xf32>
    %179 = vector.broadcast %32 : vector<1x8xf32> to vector<8x8xf32>
    %180 = arith.addf %178, %179 : vector<8x8xf32>
    %cst_58 = arith.constant dense<0xFF800000> : vector<8xf32>
    %181 = vector.multi_reduction <maximumf>, %180, %cst_58 [1] : vector<8x8xf32> to vector<8xf32>
    %182 = vector.shape_cast %181 : vector<8xf32> to vector<8x1xf32>
    %183 = vector.broadcast %182 : vector<8x1xf32> to vector<8x8xf32>
    %184 = arith.subf %180, %183 : vector<8x8xf32>
    %185 = math.exp %184 : vector<8x8xf32>
    %cst_59 = arith.constant dense<0.000000e+00> : vector<8xf32>
    %186 = vector.multi_reduction <add>, %185, %cst_59 [1] : vector<8x8xf32> to vector<8xf32>
    %187 = vector.shape_cast %186 : vector<8xf32> to vector<8x1xf32>
    %188 = vector.broadcast %187 : vector<8x1xf32> to vector<8x8xf32>
    %189 = arith.divf %185, %188 : vector<8x8xf32>
    %cst_60 = arith.constant dense<0.000000e+00> : vector<8x8xf32>
    %190 = tpu.matmul %189, %174, %cst_60 {dimension_numbers = #tpu.dot_dimension_numbers<[1], [0], [0], [1], [0, 0, 1, 1], [], []>} : vector<8x8xf32>, vector<8x8xf32>, vector<8x8xf32> -> vector<8x8xf32>
    %191 = tpu.concatenate %133, %152, %171, %190 in 1 : vector<8x8xf32>, vector<8x8xf32>, vector<8x8xf32>, vector<8x8xf32> -> vector<8x32xf32>
    %192 = tpu.concatenate %114, %191 in 0 : vector<8x32xf32>, vector<8x32xf32> -> vector<16x32xf32>
    %c0_61 = arith.constant 0 : index
    %c0_62 = arith.constant 0 : index
    %193 = vector.load %arg7[%c0_61, %c0_62] : memref<32x32xf32, #tpu.memory_space<vmem>>, vector<32x32xf32>
    %cst_63 = arith.constant dense<0.000000e+00> : vector<16x32xf32>
    %194 = tpu.matmul %192, %193, %cst_63 {dimension_numbers = #tpu.dot_dimension_numbers<[1], [0], [0], [1], [0, 0, 1, 1], [], []>} : vector<16x32xf32>, vector<32x32xf32>, vector<16x32xf32> -> vector<16x32xf32>
    %c0_64 = arith.constant 0 : index
    %c0_65 = arith.constant 0 : index
    %195 = vector.load %arg8[%c0_64, %c0_65] : memref<1x32xf32, #tpu.memory_space<vmem>>, vector<1x32xf32>
    %196 = vector.broadcast %195 : vector<1x32xf32> to vector<16x32xf32>
    %197 = arith.addf %194, %196 : vector<16x32xf32>
    %198 = arith.addf %197, %22 : vector<16x32xf32>
    %cst_66 = arith.constant dense<0.000000e+00> : vector<16xf32>
    %199 = vector.multi_reduction <add>, %198, %cst_66 [1] : vector<16x32xf32> to vector<16xf32>
    %200 = vector.shape_cast %199 : vector<16xf32> to vector<16x1xf32>
    %cst_67 = arith.constant 3.200000e+01 : f32
    %201 = vector.broadcast %cst_67 : f32 to vector<16x1xf32>
    %202 = arith.divf %200, %201 : vector<16x1xf32>
    %203 = vector.broadcast %202 : vector<16x1xf32> to vector<16x32xf32>
    %204 = arith.subf %198, %203 : vector<16x32xf32>
    %205 = arith.mulf %204, %204 : vector<16x32xf32>
    %cst_68 = arith.constant dense<0.000000e+00> : vector<16xf32>
    %206 = vector.multi_reduction <add>, %205, %cst_68 [1] : vector<16x32xf32> to vector<16xf32>
    %207 = vector.shape_cast %206 : vector<16xf32> to vector<16x1xf32>
    %cst_69 = arith.constant 3.200000e+01 : f32
    %208 = vector.broadcast %cst_69 : f32 to vector<16x1xf32>
    %209 = arith.divf %207, %208 : vector<16x1xf32>
    %cst_70 = arith.constant 9.99999996E-13 : f32
    %210 = vector.broadcast %cst_70 : f32 to vector<16x1xf32>
    %211 = arith.addf %209, %210 : vector<16x1xf32>
    %212 = math.rsqrt %211 : vector<16x1xf32>
    %213 = vector.broadcast %212 : vector<16x1xf32> to vector<16x32xf32>
    %214 = arith.mulf %204, %213 : vector<16x32xf32>
    %c0_71 = arith.constant 0 : index
    %c0_72 = arith.constant 0 : index
    %215 = vector.load %arg9[%c0_71, %c0_72] : memref<1x32xf32, #tpu.memory_space<vmem>>, vector<1x32xf32>
    %216 = vector.broadcast %215 : vector<1x32xf32> to vector<16x32xf32>
    %217 = arith.mulf %214, %216 : vector<16x32xf32>
    %c0_73 = arith.constant 0 : index
    %c0_74 = arith.constant 0 : index
    %218 = vector.load %arg10[%c0_73, %c0_74] : memref<1x32xf32, #tpu.memory_space<vmem>>, vector<1x32xf32>
    %219 = vector.broadcast %218 : vector<1x32xf32> to vector<16x32xf32>
    %220 = arith.addf %217, %219 : vector<16x32xf32>
    %c0_75 = arith.constant 0 : index
    %c0_76 = arith.constant 0 : index
    %221 = vector.load %arg11[%c0_75, %c0_76] : memref<32x64xf32, #tpu.memory_space<vmem>>, vector<32x64xf32>
    %cst_77 = arith.constant dense<0.000000e+00> : vector<16x64xf32>
    %222 = tpu.matmul %220, %221, %cst_77 {dimension_numbers = #tpu.dot_dimension_numbers<[1], [0], [0], [1], [0, 0, 1, 1], [], []>} : vector<16x32xf32>, vector<32x64xf32>, vector<16x64xf32> -> vector<16x64xf32>
    %c0_78 = arith.constant 0 : index
    %c0_79 = arith.constant 0 : index
    %223 = vector.load %arg12[%c0_78, %c0_79] : memref<1x64xf32, #tpu.memory_space<vmem>>, vector<1x64xf32>
    %224 = vector.broadcast %223 : vector<1x64xf32> to vector<16x64xf32>
    %225 = arith.addf %222, %224 : vector<16x64xf32>
    %226 = arith.mulf %225, %225 : vector<16x64xf32>
    %227 = arith.mulf %225, %226 : vector<16x64xf32>
    %cst_80 = arith.constant 4.471500e-02 : f32
    %228 = vector.broadcast %cst_80 : f32 to vector<16x64xf32>
    %229 = arith.mulf %228, %227 : vector<16x64xf32>
    %230 = arith.addf %225, %229 : vector<16x64xf32>
    %cst_81 = arith.constant 0.797884583 : f32
    %231 = vector.broadcast %cst_81 : f32 to vector<16x64xf32>
    %232 = arith.mulf %231, %230 : vector<16x64xf32>
    %233 = math.tanh %232 : vector<16x64xf32>
    %cst_82 = arith.constant 1.000000e+00 : f32
    %234 = vector.broadcast %cst_82 : f32 to vector<16x64xf32>
    %235 = arith.addf %234, %233 : vector<16x64xf32>
    %cst_83 = arith.constant 5.000000e-01 : f32
    %236 = vector.broadcast %cst_83 : f32 to vector<16x64xf32>
    %237 = arith.mulf %236, %235 : vector<16x64xf32>
    %238 = arith.mulf %225, %237 : vector<16x64xf32>
    %c0_84 = arith.constant 0 : index
    %c0_85 = arith.constant 0 : index
    %239 = vector.load %arg13[%c0_84, %c0_85] : memref<64x32xf32, #tpu.memory_space<vmem>>, vector<64x32xf32>
    %cst_86 = arith.constant dense<0.000000e+00> : vector<16x32xf32>
    %240 = tpu.matmul %238, %239, %cst_86 {dimension_numbers = #tpu.dot_dimension_numbers<[1], [0], [0], [1], [0, 0, 1, 1], [], []>} : vector<16x64xf32>, vector<64x32xf32>, vector<16x32xf32> -> vector<16x32xf32>
    %c0_87 = arith.constant 0 : index
    %c0_88 = arith.constant 0 : index
    %241 = vector.load %arg14[%c0_87, %c0_88] : memref<1x32xf32, #tpu.memory_space<vmem>>, vector<1x32xf32>
    %242 = vector.broadcast %241 : vector<1x32xf32> to vector<16x32xf32>
    %243 = arith.addf %240, %242 : vector<16x32xf32>
    %244 = arith.addf %243, %220 : vector<16x32xf32>
    %cst_89 = arith.constant dense<0.000000e+00> : vector<16xf32>
    %245 = vector.multi_reduction <add>, %244, %cst_89 [1] : vector<16x32xf32> to vector<16xf32>
    %246 = vector.shape_cast %245 : vector<16xf32> to vector<16x1xf32>
    %cst_90 = arith.constant 3.200000e+01 : f32
    %247 = vector.broadcast %cst_90 : f32 to vector<16x1xf32>
    %248 = arith.divf %246, %247 : vector<16x1xf32>
    %249 = vector.broadcast %248 : vector<16x1xf32> to vector<16x32xf32>
    %250 = arith.subf %244, %249 : vector<16x32xf32>
    %251 = arith.mulf %250, %250 : vector<16x32xf32>
    %cst_91 = arith.constant dense<0.000000e+00> : vector<16xf32>
    %252 = vector.multi_reduction <add>, %251, %cst_91 [1] : vector<16x32xf32> to vector<16xf32>
    %253 = vector.shape_cast %252 : vector<16xf32> to vector<16x1xf32>
    %cst_92 = arith.constant 3.200000e+01 : f32
    %254 = vector.broadcast %cst_92 : f32 to vector<16x1xf32>
    %255 = arith.divf %253, %254 : vector<16x1xf32>
    %cst_93 = arith.constant 9.99999996E-13 : f32
    %256 = vector.broadcast %cst_93 : f32 to vector<16x1xf32>
    %257 = arith.addf %255, %256 : vector<16x1xf32>
    %258 = math.rsqrt %257 : vector<16x1xf32>
    %259 = vector.broadcast %258 : vector<16x1xf32> to vector<16x32xf32>
    %260 = arith.mulf %250, %259 : vector<16x32xf32>
    %c0_94 = arith.constant 0 : index
    %c0_95 = arith.constant 0 : index
    %261 = vector.load %arg15[%c0_94, %c0_95] : memref<1x32xf32, #tpu.memory_space<vmem>>, vector<1x32xf32>
    %262 = vector.broadcast %261 : vector<1x32xf32> to vector<16x32xf32>
    %263 = arith.mulf %260, %262 : vector<16x32xf32>
    %c0_96 = arith.constant 0 : index
    %c0_97 = arith.constant 0 : index
    %264 = vector.load %arg16[%c0_96, %c0_97] : memref<1x32xf32, #tpu.memory_space<vmem>>, vector<1x32xf32>
    %265 = vector.broadcast %264 : vector<1x32xf32> to vector<16x32xf32>
    %266 = arith.addf %263, %265 : vector<16x32xf32>
    %c0_98 = arith.constant 0 : index
    %c0_99 = arith.constant 0 : index
    %267 = vector.load %arg17[%c0_98, %c0_99] : memref<32x96xf32, #tpu.memory_space<vmem>>, vector<32x96xf32>
    %cst_100 = arith.constant dense<0.000000e+00> : vector<16x96xf32>
    %268 = tpu.matmul %266, %267, %cst_100 {dimension_numbers = #tpu.dot_dimension_numbers<[1], [0], [0], [1], [0, 0, 1, 1], [], []>} : vector<16x32xf32>, vector<32x96xf32>, vector<16x96xf32> -> vector<16x96xf32>
    %c0_101 = arith.constant 0 : index
    %c0_102 = arith.constant 0 : index
    %269 = vector.load %arg18[%c0_101, %c0_102] : memref<1x96xf32, #tpu.memory_space<vmem>>, vector<1x96xf32>
    %270 = vector.broadcast %269 : vector<1x96xf32> to vector<16x96xf32>
    %271 = arith.addf %268, %270 : vector<16x96xf32>
    %272 = vector.extract_strided_slice %271 {offsets = [0, 0], sizes = [8, 8], strides = [1, 1]} : vector<16x96xf32> to vector<8x8xf32>
    %273 = vector.extract_strided_slice %271 {offsets = [0, 32], sizes = [8, 8], strides = [1, 1]} : vector<16x96xf32> to vector<8x8xf32>
    %274 = vector.extract_strided_slice %271 {offsets = [0, 64], sizes = [8, 8], strides = [1, 1]} : vector<16x96xf32> to vector<8x8xf32>
    %275 = tpu.transpose %273, [1, 0] : vector<8x8xf32> -> vector<8x8xf32>
    %cst_103 = arith.constant dense<0.000000e+00> : vector<8x8xf32>
    %276 = tpu.matmul %272, %275, %cst_103 {dimension_numbers = #tpu.dot_dimension_numbers<[1], [0], [0], [1], [0, 0, 1, 1], [], []>} : vector<8x8xf32>, vector<8x8xf32>, vector<8x8xf32> -> vector<8x8xf32>
    %cst_104 = arith.constant 0.353553385 : f32
    %277 = vector.broadcast %cst_104 : f32 to vector<8x8xf32>
    %278 = arith.mulf %276, %277 : vector<8x8xf32>
    %279 = vector.broadcast %27 : vector<1x8xf32> to vector<8x8xf32>
    %280 = arith.addf %278, %279 : vector<8x8xf32>
    %cst_105 = arith.constant dense<0xFF800000> : vector<8xf32>
    %281 = vector.multi_reduction <maximumf>, %280, %cst_105 [1] : vector<8x8xf32> to vector<8xf32>
    %282 = vector.shape_cast %281 : vector<8xf32> to vector<8x1xf32>
    %283 = vector.broadcast %282 : vector<8x1xf32> to vector<8x8xf32>
    %284 = arith.subf %280, %283 : vector<8x8xf32>
    %285 = math.exp %284 : vector<8x8xf32>
    %cst_106 = arith.constant dense<0.000000e+00> : vector<8xf32>
    %286 = vector.multi_reduction <add>, %285, %cst_106 [1] : vector<8x8xf32> to vector<8xf32>
    %287 = vector.shape_cast %286 : vector<8xf32> to vector<8x1xf32>
    %288 = vector.broadcast %287 : vector<8x1xf32> to vector<8x8xf32>
    %289 = arith.divf %285, %288 : vector<8x8xf32>
    %cst_107 = arith.constant dense<0.000000e+00> : vector<8x8xf32>
    %290 = tpu.matmul %289, %274, %cst_107 {dimension_numbers = #tpu.dot_dimension_numbers<[1], [0], [0], [1], [0, 0, 1, 1], [], []>} : vector<8x8xf32>, vector<8x8xf32>, vector<8x8xf32> -> vector<8x8xf32>
    %291 = vector.extract_strided_slice %271 {offsets = [0, 8], sizes = [8, 8], strides = [1, 1]} : vector<16x96xf32> to vector<8x8xf32>
    %292 = vector.extract_strided_slice %271 {offsets = [0, 40], sizes = [8, 8], strides = [1, 1]} : vector<16x96xf32> to vector<8x8xf32>
    %293 = vector.extract_strided_slice %271 {offsets = [0, 72], sizes = [8, 8], strides = [1, 1]} : vector<16x96xf32> to vector<8x8xf32>
    %294 = tpu.transpose %292, [1, 0] : vector<8x8xf32> -> vector<8x8xf32>
    %cst_108 = arith.constant dense<0.000000e+00> : vector<8x8xf32>
    %295 = tpu.matmul %291, %294, %cst_108 {dimension_numbers = #tpu.dot_dimension_numbers<[1], [0], [0], [1], [0, 0, 1, 1], [], []>} : vector<8x8xf32>, vector<8x8xf32>, vector<8x8xf32> -> vector<8x8xf32>
    %cst_109 = arith.constant 0.353553385 : f32
    %296 = vector.broadcast %cst_109 : f32 to vector<8x8xf32>
    %297 = arith.mulf %295, %296 : vector<8x8xf32>
    %298 = vector.broadcast %27 : vector<1x8xf32> to vector<8x8xf32>
    %299 = arith.addf %297, %298 : vector<8x8xf32>
    %cst_110 = arith.constant dense<0xFF800000> : vector<8xf32>
    %300 = vector.multi_reduction <maximumf>, %299, %cst_110 [1] : vector<8x8xf32> to vector<8xf32>
    %301 = vector.shape_cast %300 : vector<8xf32> to vector<8x1xf32>
    %302 = vector.broadcast %301 : vector<8x1xf32> to vector<8x8xf32>
    %303 = arith.subf %299, %302 : vector<8x8xf32>
    %304 = math.exp %303 : vector<8x8xf32>
    %cst_111 = arith.constant dense<0.000000e+00> : vector<8xf32>
    %305 = vector.multi_reduction <add>, %304, %cst_111 [1] : vector<8x8xf32> to vector<8xf32>
    %306 = vector.shape_cast %305 : vector<8xf32> to vector<8x1xf32>
    %307 = vector.broadcast %306 : vector<8x1xf32> to vector<8x8xf32>
    %308 = arith.divf %304, %307 : vector<8x8xf32>
    %cst_112 = arith.constant dense<0.000000e+00> : vector<8x8xf32>
    %309 = tpu.matmul %308, %293, %cst_112 {dimension_numbers = #tpu.dot_dimension_numbers<[1], [0], [0], [1], [0, 0, 1, 1], [], []>} : vector<8x8xf32>, vector<8x8xf32>, vector<8x8xf32> -> vector<8x8xf32>
    %310 = vector.extract_strided_slice %271 {offsets = [0, 16], sizes = [8, 8], strides = [1, 1]} : vector<16x96xf32> to vector<8x8xf32>
    %311 = vector.extract_strided_slice %271 {offsets = [0, 48], sizes = [8, 8], strides = [1, 1]} : vector<16x96xf32> to vector<8x8xf32>
    %312 = vector.extract_strided_slice %271 {offsets = [0, 80], sizes = [8, 8], strides = [1, 1]} : vector<16x96xf32> to vector<8x8xf32>
    %313 = tpu.transpose %311, [1, 0] : vector<8x8xf32> -> vector<8x8xf32>
    %cst_113 = arith.constant dense<0.000000e+00> : vector<8x8xf32>
    %314 = tpu.matmul %310, %313, %cst_113 {dimension_numbers = #tpu.dot_dimension_numbers<[1], [0], [0], [1], [0, 0, 1, 1], [], []>} : vector<8x8xf32>, vector<8x8xf32>, vector<8x8xf32> -> vector<8x8xf32>
    %cst_114 = arith.constant 0.353553385 : f32
    %315 = vector.broadcast %cst_114 : f32 to vector<8x8xf32>
    %316 = arith.mulf %314, %315 : vector<8x8xf32>
    %317 = vector.broadcast %27 : vector<1x8xf32> to vector<8x8xf32>
    %318 = arith.addf %316, %317 : vector<8x8xf32>
    %cst_115 = arith.constant dense<0xFF800000> : vector<8xf32>
    %319 = vector.multi_reduction <maximumf>, %318, %cst_115 [1] : vector<8x8xf32> to vector<8xf32>
    %320 = vector.shape_cast %319 : vector<8xf32> to vector<8x1xf32>
    %321 = vector.broadcast %320 : vector<8x1xf32> to vector<8x8xf32>
    %322 = arith.subf %318, %321 : vector<8x8xf32>
    %323 = math.exp %322 : vector<8x8xf32>
    %cst_116 = arith.constant dense<0.000000e+00> : vector<8xf32>
    %324 = vector.multi_reduction <add>, %323, %cst_116 [1] : vector<8x8xf32> to vector<8xf32>
    %325 = vector.shape_cast %324 : vector<8xf32> to vector<8x1xf32>
    %326 = vector.broadcast %325 : vector<8x1xf32> to vector<8x8xf32>
    %327 = arith.divf %323, %326 : vector<8x8xf32>
    %cst_117 = arith.constant dense<0.000000e+00> : vector<8x8xf32>
    %328 = tpu.matmul %327, %312, %cst_117 {dimension_numbers = #tpu.dot_dimension_numbers<[1], [0], [0], [1], [0, 0, 1, 1], [], []>} : vector<8x8xf32>, vector<8x8xf32>, vector<8x8xf32> -> vector<8x8xf32>
    %329 = vector.extract_strided_slice %271 {offsets = [0, 24], sizes = [8, 8], strides = [1, 1]} : vector<16x96xf32> to vector<8x8xf32>
    %330 = vector.extract_strided_slice %271 {offsets = [0, 56], sizes = [8, 8], strides = [1, 1]} : vector<16x96xf32> to vector<8x8xf32>
    %331 = vector.extract_strided_slice %271 {offsets = [0, 88], sizes = [8, 8], strides = [1, 1]} : vector<16x96xf32> to vector<8x8xf32>
    %332 = tpu.transpose %330, [1, 0] : vector<8x8xf32> -> vector<8x8xf32>
    %cst_118 = arith.constant dense<0.000000e+00> : vector<8x8xf32>
    %333 = tpu.matmul %329, %332, %cst_118 {dimension_numbers = #tpu.dot_dimension_numbers<[1], [0], [0], [1], [0, 0, 1, 1], [], []>} : vector<8x8xf32>, vector<8x8xf32>, vector<8x8xf32> -> vector<8x8xf32>
    %cst_119 = arith.constant 0.353553385 : f32
    %334 = vector.broadcast %cst_119 : f32 to vector<8x8xf32>
    %335 = arith.mulf %333, %334 : vector<8x8xf32>
    %336 = vector.broadcast %27 : vector<1x8xf32> to vector<8x8xf32>
    %337 = arith.addf %335, %336 : vector<8x8xf32>
    %cst_120 = arith.constant dense<0xFF800000> : vector<8xf32>
    %338 = vector.multi_reduction <maximumf>, %337, %cst_120 [1] : vector<8x8xf32> to vector<8xf32>
    %339 = vector.shape_cast %338 : vector<8xf32> to vector<8x1xf32>
    %340 = vector.broadcast %339 : vector<8x1xf32> to vector<8x8xf32>
    %341 = arith.subf %337, %340 : vector<8x8xf32>
    %342 = math.exp %341 : vector<8x8xf32>
    %cst_121 = arith.constant dense<0.000000e+00> : vector<8xf32>
    %343 = vector.multi_reduction <add>, %342, %cst_121 [1] : vector<8x8xf32> to vector<8xf32>
    %344 = vector.shape_cast %343 : vector<8xf32> to vector<8x1xf32>
    %345 = vector.broadcast %344 : vector<8x1xf32> to vector<8x8xf32>
    %346 = arith.divf %342, %345 : vector<8x8xf32>
    %cst_122 = arith.constant dense<0.000000e+00> : vector<8x8xf32>
    %347 = tpu.matmul %346, %331, %cst_122 {dimension_numbers = #tpu.dot_dimension_numbers<[1], [0], [0], [1], [0, 0, 1, 1], [], []>} : vector<8x8xf32>, vector<8x8xf32>, vector<8x8xf32> -> vector<8x8xf32>
    %348 = tpu.concatenate %290, %309, %328, %347 in 1 : vector<8x8xf32>, vector<8x8xf32>, vector<8x8xf32>, vector<8x8xf32> -> vector<8x32xf32>
    %349 = vector.extract_strided_slice %271 {offsets = [8, 0], sizes = [8, 8], strides = [1, 1]} : vector<16x96xf32> to vector<8x8xf32>
    %350 = vector.extract_strided_slice %271 {offsets = [8, 32], sizes = [8, 8], strides = [1, 1]} : vector<16x96xf32> to vector<8x8xf32>
    %351 = vector.extract_strided_slice %271 {offsets = [8, 64], sizes = [8, 8], strides = [1, 1]} : vector<16x96xf32> to vector<8x8xf32>
    %352 = tpu.transpose %350, [1, 0] : vector<8x8xf32> -> vector<8x8xf32>
    %cst_123 = arith.constant dense<0.000000e+00> : vector<8x8xf32>
    %353 = tpu.matmul %349, %352, %cst_123 {dimension_numbers = #tpu.dot_dimension_numbers<[1], [0], [0], [1], [0, 0, 1, 1], [], []>} : vector<8x8xf32>, vector<8x8xf32>, vector<8x8xf32> -> vector<8x8xf32>
    %cst_124 = arith.constant 0.353553385 : f32
    %354 = vector.broadcast %cst_124 : f32 to vector<8x8xf32>
    %355 = arith.mulf %353, %354 : vector<8x8xf32>
    %356 = vector.broadcast %32 : vector<1x8xf32> to vector<8x8xf32>
    %357 = arith.addf %355, %356 : vector<8x8xf32>
    %cst_125 = arith.constant dense<0xFF800000> : vector<8xf32>
    %358 = vector.multi_reduction <maximumf>, %357, %cst_125 [1] : vector<8x8xf32> to vector<8xf32>
    %359 = vector.shape_cast %358 : vector<8xf32> to vector<8x1xf32>
    %360 = vector.broadcast %359 : vector<8x1xf32> to vector<8x8xf32>
    %361 = arith.subf %357, %360 : vector<8x8xf32>
    %362 = math.exp %361 : vector<8x8xf32>
    %cst_126 = arith.constant dense<0.000000e+00> : vector<8xf32>
    %363 = vector.multi_reduction <add>, %362, %cst_126 [1] : vector<8x8xf32> to vector<8xf32>
    %364 = vector.shape_cast %363 : vector<8xf32> to vector<8x1xf32>
    %365 = vector.broadcast %364 : vector<8x1xf32> to vector<8x8xf32>
    %366 = arith.divf %362, %365 : vector<8x8xf32>
    %cst_127 = arith.constant dense<0.000000e+00> : vector<8x8xf32>
    %367 = tpu.matmul %366, %351, %cst_127 {dimension_numbers = #tpu.dot_dimension_numbers<[1], [0], [0], [1], [0, 0, 1, 1], [], []>} : vector<8x8xf32>, vector<8x8xf32>, vector<8x8xf32> -> vector<8x8xf32>
    %368 = vector.extract_strided_slice %271 {offsets = [8, 8], sizes = [8, 8], strides = [1, 1]} : vector<16x96xf32> to vector<8x8xf32>
    %369 = vector.extract_strided_slice %271 {offsets = [8, 40], sizes = [8, 8], strides = [1, 1]} : vector<16x96xf32> to vector<8x8xf32>
    %370 = vector.extract_strided_slice %271 {offsets = [8, 72], sizes = [8, 8], strides = [1, 1]} : vector<16x96xf32> to vector<8x8xf32>
    %371 = tpu.transpose %369, [1, 0] : vector<8x8xf32> -> vector<8x8xf32>
    %cst_128 = arith.constant dense<0.000000e+00> : vector<8x8xf32>
    %372 = tpu.matmul %368, %371, %cst_128 {dimension_numbers = #tpu.dot_dimension_numbers<[1], [0], [0], [1], [0, 0, 1, 1], [], []>} : vector<8x8xf32>, vector<8x8xf32>, vector<8x8xf32> -> vector<8x8xf32>
    %cst_129 = arith.constant 0.353553385 : f32
    %373 = vector.broadcast %cst_129 : f32 to vector<8x8xf32>
    %374 = arith.mulf %372, %373 : vector<8x8xf32>
    %375 = vector.broadcast %32 : vector<1x8xf32> to vector<8x8xf32>
    %376 = arith.addf %374, %375 : vector<8x8xf32>
    %cst_130 = arith.constant dense<0xFF800000> : vector<8xf32>
    %377 = vector.multi_reduction <maximumf>, %376, %cst_130 [1] : vector<8x8xf32> to vector<8xf32>
    %378 = vector.shape_cast %377 : vector<8xf32> to vector<8x1xf32>
    %379 = vector.broadcast %378 : vector<8x1xf32> to vector<8x8xf32>
    %380 = arith.subf %376, %379 : vector<8x8xf32>
    %381 = math.exp %380 : vector<8x8xf32>
    %cst_131 = arith.constant dense<0.000000e+00> : vector<8xf32>
    %382 = vector.multi_reduction <add>, %381, %cst_131 [1] : vector<8x8xf32> to vector<8xf32>
    %383 = vector.shape_cast %382 : vector<8xf32> to vector<8x1xf32>
    %384 = vector.broadcast %383 : vector<8x1xf32> to vector<8x8xf32>
    %385 = arith.divf %381, %384 : vector<8x8xf32>
    %cst_132 = arith.constant dense<0.000000e+00> : vector<8x8xf32>
    %386 = tpu.matmul %385, %370, %cst_132 {dimension_numbers = #tpu.dot_dimension_numbers<[1], [0], [0], [1], [0, 0, 1, 1], [], []>} : vector<8x8xf32>, vector<8x8xf32>, vector<8x8xf32> -> vector<8x8xf32>
    %387 = vector.extract_strided_slice %271 {offsets = [8, 16], sizes = [8, 8], strides = [1, 1]} : vector<16x96xf32> to vector<8x8xf32>
    %388 = vector.extract_strided_slice %271 {offsets = [8, 48], sizes = [8, 8], strides = [1, 1]} : vector<16x96xf32> to vector<8x8xf32>
    %389 = vector.extract_strided_slice %271 {offsets = [8, 80], sizes = [8, 8], strides = [1, 1]} : vector<16x96xf32> to vector<8x8xf32>
    %390 = tpu.transpose %388, [1, 0] : vector<8x8xf32> -> vector<8x8xf32>
    %cst_133 = arith.constant dense<0.000000e+00> : vector<8x8xf32>
    %391 = tpu.matmul %387, %390, %cst_133 {dimension_numbers = #tpu.dot_dimension_numbers<[1], [0], [0], [1], [0, 0, 1, 1], [], []>} : vector<8x8xf32>, vector<8x8xf32>, vector<8x8xf32> -> vector<8x8xf32>
    %cst_134 = arith.constant 0.353553385 : f32
    %392 = vector.broadcast %cst_134 : f32 to vector<8x8xf32>
    %393 = arith.mulf %391, %392 : vector<8x8xf32>
    %394 = vector.broadcast %32 : vector<1x8xf32> to vector<8x8xf32>
    %395 = arith.addf %393, %394 : vector<8x8xf32>
    %cst_135 = arith.constant dense<0xFF800000> : vector<8xf32>
    %396 = vector.multi_reduction <maximumf>, %395, %cst_135 [1] : vector<8x8xf32> to vector<8xf32>
    %397 = vector.shape_cast %396 : vector<8xf32> to vector<8x1xf32>
    %398 = vector.broadcast %397 : vector<8x1xf32> to vector<8x8xf32>
    %399 = arith.subf %395, %398 : vector<8x8xf32>
    %400 = math.exp %399 : vector<8x8xf32>
    %cst_136 = arith.constant dense<0.000000e+00> : vector<8xf32>
    %401 = vector.multi_reduction <add>, %400, %cst_136 [1] : vector<8x8xf32> to vector<8xf32>
    %402 = vector.shape_cast %401 : vector<8xf32> to vector<8x1xf32>
    %403 = vector.broadcast %402 : vector<8x1xf32> to vector<8x8xf32>
    %404 = arith.divf %400, %403 : vector<8x8xf32>
    %cst_137 = arith.constant dense<0.000000e+00> : vector<8x8xf32>
    %405 = tpu.matmul %404, %389, %cst_137 {dimension_numbers = #tpu.dot_dimension_numbers<[1], [0], [0], [1], [0, 0, 1, 1], [], []>} : vector<8x8xf32>, vector<8x8xf32>, vector<8x8xf32> -> vector<8x8xf32>
    %406 = vector.extract_strided_slice %271 {offsets = [8, 24], sizes = [8, 8], strides = [1, 1]} : vector<16x96xf32> to vector<8x8xf32>
    %407 = vector.extract_strided_slice %271 {offsets = [8, 56], sizes = [8, 8], strides = [1, 1]} : vector<16x96xf32> to vector<8x8xf32>
    %408 = vector.extract_strided_slice %271 {offsets = [8, 88], sizes = [8, 8], strides = [1, 1]} : vector<16x96xf32> to vector<8x8xf32>
    %409 = tpu.transpose %407, [1, 0] : vector<8x8xf32> -> vector<8x8xf32>
    %cst_138 = arith.constant dense<0.000000e+00> : vector<8x8xf32>
    %410 = tpu.matmul %406, %409, %cst_138 {dimension_numbers = #tpu.dot_dimension_numbers<[1], [0], [0], [1], [0, 0, 1, 1], [], []>} : vector<8x8xf32>, vector<8x8xf32>, vector<8x8xf32> -> vector<8x8xf32>
    %cst_139 = arith.constant 0.353553385 : f32
    %411 = vector.broadcast %cst_139 : f32 to vector<8x8xf32>
    %412 = arith.mulf %410, %411 : vector<8x8xf32>
    %413 = vector.broadcast %32 : vector<1x8xf32> to vector<8x8xf32>
    %414 = arith.addf %412, %413 : vector<8x8xf32>
    %cst_140 = arith.constant dense<0xFF800000> : vector<8xf32>
    %415 = vector.multi_reduction <maximumf>, %414, %cst_140 [1] : vector<8x8xf32> to vector<8xf32>
    %416 = vector.shape_cast %415 : vector<8xf32> to vector<8x1xf32>
    %417 = vector.broadcast %416 : vector<8x1xf32> to vector<8x8xf32>
    %418 = arith.subf %414, %417 : vector<8x8xf32>
    %419 = math.exp %418 : vector<8x8xf32>
    %cst_141 = arith.constant dense<0.000000e+00> : vector<8xf32>
    %420 = vector.multi_reduction <add>, %419, %cst_141 [1] : vector<8x8xf32> to vector<8xf32>
    %421 = vector.shape_cast %420 : vector<8xf32> to vector<8x1xf32>
    %422 = vector.broadcast %421 : vector<8x1xf32> to vector<8x8xf32>
    %423 = arith.divf %419, %422 : vector<8x8xf32>
    %cst_142 = arith.constant dense<0.000000e+00> : vector<8x8xf32>
    %424 = tpu.matmul %423, %408, %cst_142 {dimension_numbers = #tpu.dot_dimension_numbers<[1], [0], [0], [1], [0, 0, 1, 1], [], []>} : vector<8x8xf32>, vector<8x8xf32>, vector<8x8xf32> -> vector<8x8xf32>
    %425 = tpu.concatenate %367, %386, %405, %424 in 1 : vector<8x8xf32>, vector<8x8xf32>, vector<8x8xf32>, vector<8x8xf32> -> vector<8x32xf32>
    %426 = tpu.concatenate %348, %425 in 0 : vector<8x32xf32>, vector<8x32xf32> -> vector<16x32xf32>
    %c0_143 = arith.constant 0 : index
    %c0_144 = arith.constant 0 : index
    %427 = vector.load %arg19[%c0_143, %c0_144] : memref<32x32xf32, #tpu.memory_space<vmem>>, vector<32x32xf32>
    %cst_145 = arith.constant dense<0.000000e+00> : vector<16x32xf32>
    %428 = tpu.matmul %426, %427, %cst_145 {dimension_numbers = #tpu.dot_dimension_numbers<[1], [0], [0], [1], [0, 0, 1, 1], [], []>} : vector<16x32xf32>, vector<32x32xf32>, vector<16x32xf32> -> vector<16x32xf32>
    %c0_146 = arith.constant 0 : index
    %c0_147 = arith.constant 0 : index
    %429 = vector.load %arg20[%c0_146, %c0_147] : memref<1x32xf32, #tpu.memory_space<vmem>>, vector<1x32xf32>
    %430 = vector.broadcast %429 : vector<1x32xf32> to vector<16x32xf32>
    %431 = arith.addf %428, %430 : vector<16x32xf32>
    %432 = arith.addf %431, %266 : vector<16x32xf32>
    %cst_148 = arith.constant dense<0.000000e+00> : vector<16xf32>
    %433 = vector.multi_reduction <add>, %432, %cst_148 [1] : vector<16x32xf32> to vector<16xf32>
    %434 = vector.shape_cast %433 : vector<16xf32> to vector<16x1xf32>
    %cst_149 = arith.constant 3.200000e+01 : f32
    %435 = vector.broadcast %cst_149 : f32 to vector<16x1xf32>
    %436 = arith.divf %434, %435 : vector<16x1xf32>
    %437 = vector.broadcast %436 : vector<16x1xf32> to vector<16x32xf32>
    %438 = arith.subf %432, %437 : vector<16x32xf32>
    %439 = arith.mulf %438, %438 : vector<16x32xf32>
    %cst_150 = arith.constant dense<0.000000e+00> : vector<16xf32>
    %440 = vector.multi_reduction <add>, %439, %cst_150 [1] : vector<16x32xf32> to vector<16xf32>
    %441 = vector.shape_cast %440 : vector<16xf32> to vector<16x1xf32>
    %cst_151 = arith.constant 3.200000e+01 : f32
    %442 = vector.broadcast %cst_151 : f32 to vector<16x1xf32>
    %443 = arith.divf %441, %442 : vector<16x1xf32>
    %cst_152 = arith.constant 9.99999996E-13 : f32
    %444 = vector.broadcast %cst_152 : f32 to vector<16x1xf32>
    %445 = arith.addf %443, %444 : vector<16x1xf32>
    %446 = math.rsqrt %445 : vector<16x1xf32>
    %447 = vector.broadcast %446 : vector<16x1xf32> to vector<16x32xf32>
    %448 = arith.mulf %438, %447 : vector<16x32xf32>
    %c0_153 = arith.constant 0 : index
    %c0_154 = arith.constant 0 : index
    %449 = vector.load %arg21[%c0_153, %c0_154] : memref<1x32xf32, #tpu.memory_space<vmem>>, vector<1x32xf32>
    %450 = vector.broadcast %449 : vector<1x32xf32> to vector<16x32xf32>
    %451 = arith.mulf %448, %450 : vector<16x32xf32>
    %c0_155 = arith.constant 0 : index
    %c0_156 = arith.constant 0 : index
    %452 = vector.load %arg22[%c0_155, %c0_156] : memref<1x32xf32, #tpu.memory_space<vmem>>, vector<1x32xf32>
    %453 = vector.broadcast %452 : vector<1x32xf32> to vector<16x32xf32>
    %454 = arith.addf %451, %453 : vector<16x32xf32>
    %c0_157 = arith.constant 0 : index
    %c0_158 = arith.constant 0 : index
    %455 = vector.load %arg23[%c0_157, %c0_158] : memref<32x64xf32, #tpu.memory_space<vmem>>, vector<32x64xf32>
    %cst_159 = arith.constant dense<0.000000e+00> : vector<16x64xf32>
    %456 = tpu.matmul %454, %455, %cst_159 {dimension_numbers = #tpu.dot_dimension_numbers<[1], [0], [0], [1], [0, 0, 1, 1], [], []>} : vector<16x32xf32>, vector<32x64xf32>, vector<16x64xf32> -> vector<16x64xf32>
    %c0_160 = arith.constant 0 : index
    %c0_161 = arith.constant 0 : index
    %457 = vector.load %arg24[%c0_160, %c0_161] : memref<1x64xf32, #tpu.memory_space<vmem>>, vector<1x64xf32>
    %458 = vector.broadcast %457 : vector<1x64xf32> to vector<16x64xf32>
    %459 = arith.addf %456, %458 : vector<16x64xf32>
    %460 = arith.mulf %459, %459 : vector<16x64xf32>
    %461 = arith.mulf %459, %460 : vector<16x64xf32>
    %cst_162 = arith.constant 4.471500e-02 : f32
    %462 = vector.broadcast %cst_162 : f32 to vector<16x64xf32>
    %463 = arith.mulf %462, %461 : vector<16x64xf32>
    %464 = arith.addf %459, %463 : vector<16x64xf32>
    %cst_163 = arith.constant 0.797884583 : f32
    %465 = vector.broadcast %cst_163 : f32 to vector<16x64xf32>
    %466 = arith.mulf %465, %464 : vector<16x64xf32>
    %467 = math.tanh %466 : vector<16x64xf32>
    %cst_164 = arith.constant 1.000000e+00 : f32
    %468 = vector.broadcast %cst_164 : f32 to vector<16x64xf32>
    %469 = arith.addf %468, %467 : vector<16x64xf32>
    %cst_165 = arith.constant 5.000000e-01 : f32
    %470 = vector.broadcast %cst_165 : f32 to vector<16x64xf32>
    %471 = arith.mulf %470, %469 : vector<16x64xf32>
    %472 = arith.mulf %459, %471 : vector<16x64xf32>
    %c0_166 = arith.constant 0 : index
    %c0_167 = arith.constant 0 : index
    %473 = vector.load %arg25[%c0_166, %c0_167] : memref<64x32xf32, #tpu.memory_space<vmem>>, vector<64x32xf32>
    %cst_168 = arith.constant dense<0.000000e+00> : vector<16x32xf32>
    %474 = tpu.matmul %472, %473, %cst_168 {dimension_numbers = #tpu.dot_dimension_numbers<[1], [0], [0], [1], [0, 0, 1, 1], [], []>} : vector<16x64xf32>, vector<64x32xf32>, vector<16x32xf32> -> vector<16x32xf32>
    %c0_169 = arith.constant 0 : index
    %c0_170 = arith.constant 0 : index
    %475 = vector.load %arg26[%c0_169, %c0_170] : memref<1x32xf32, #tpu.memory_space<vmem>>, vector<1x32xf32>
    %476 = vector.broadcast %475 : vector<1x32xf32> to vector<16x32xf32>
    %477 = arith.addf %474, %476 : vector<16x32xf32>
    %478 = arith.addf %477, %454 : vector<16x32xf32>
    %cst_171 = arith.constant dense<0.000000e+00> : vector<16xf32>
    %479 = vector.multi_reduction <add>, %478, %cst_171 [1] : vector<16x32xf32> to vector<16xf32>
    %480 = vector.shape_cast %479 : vector<16xf32> to vector<16x1xf32>
    %cst_172 = arith.constant 3.200000e+01 : f32
    %481 = vector.broadcast %cst_172 : f32 to vector<16x1xf32>
    %482 = arith.divf %480, %481 : vector<16x1xf32>
    %483 = vector.broadcast %482 : vector<16x1xf32> to vector<16x32xf32>
    %484 = arith.subf %478, %483 : vector<16x32xf32>
    %485 = arith.mulf %484, %484 : vector<16x32xf32>
    %cst_173 = arith.constant dense<0.000000e+00> : vector<16xf32>
    %486 = vector.multi_reduction <add>, %485, %cst_173 [1] : vector<16x32xf32> to vector<16xf32>
    %487 = vector.shape_cast %486 : vector<16xf32> to vector<16x1xf32>
    %cst_174 = arith.constant 3.200000e+01 : f32
    %488 = vector.broadcast %cst_174 : f32 to vector<16x1xf32>
    %489 = arith.divf %487, %488 : vector<16x1xf32>
    %cst_175 = arith.constant 9.99999996E-13 : f32
    %490 = vector.broadcast %cst_175 : f32 to vector<16x1xf32>
    %491 = arith.addf %489, %490 : vector<16x1xf32>
    %492 = math.rsqrt %491 : vector<16x1xf32>
    %493 = vector.broadcast %492 : vector<16x1xf32> to vector<16x32xf32>
    %494 = arith.mulf %484, %493 : vector<16x32xf32>
    %c0_176 = arith.constant 0 : index
    %c0_177 = arith.constant 0 : index
    %495 = vector.load %arg27[%c0_176, %c0_177] : memref<1x32xf32, #tpu.memory_space<vmem>>, vector<1x32xf32>
    %496 = vector.broadcast %495 : vector<1x32xf32> to vector<16x32xf32>
    %497 = arith.mulf %494, %496 : vector<16x32xf32>
    %c0_178 = arith.constant 0 : index
    %c0_179 = arith.constant 0 : index
    %498 = vector.load %arg28[%c0_178, %c0_179] : memref<1x32xf32, #tpu.memory_space<vmem>>, vector<1x32xf32>
    %499 = vector.broadcast %498 : vector<1x32xf32> to vector<16x32xf32>
    %500 = arith.addf %497, %499 : vector<16x32xf32>
    %501 = vector.extract_strided_slice %500 {offsets = [0, 0], sizes = [1, 32], strides = [1, 1]} : vector<16x32xf32> to vector<1x32xf32>
    %502 = vector.extract_strided_slice %500 {offsets = [8, 0], sizes = [1, 32], strides = [1, 1]} : vector<16x32xf32> to vector<1x32xf32>
    %503 = tpu.concatenate %501, %502 in 0 : vector<1x32xf32>, vector<1x32xf32> -> vector<2x32xf32>
    %c0_180 = arith.constant 0 : index
    %c0_181 = arith.constant 0 : index
    %504 = vector.load %arg29[%c0_180, %c0_181] : memref<32x32xf32, #tpu.memory_space<vmem>>, vector<32x32xf32>
    %cst_182 = arith.constant dense<0.000000e+00> : vector<2x32xf32>
    %505 = tpu.matmul %503, %504, %cst_182 {dimension_numbers = #tpu.dot_dimension_numbers<[1], [0], [0], [1], [0, 0, 1, 1], [], []>} : vector<2x32xf32>, vector<32x32xf32>, vector<2x32xf32> -> vector<2x32xf32>
    %c0_183 = arith.constant 0 : index
    %c0_184 = arith.constant 0 : index
    %506 = vector.load %arg30[%c0_183, %c0_184] : memref<1x32xf32, #tpu.memory_space<vmem>>, vector<1x32xf32>
    %507 = vector.broadcast %506 : vector<1x32xf32> to vector<2x32xf32>
    %508 = arith.addf %505, %507 : vector<2x32xf32>
    %509 = math.tanh %508 : vector<2x32xf32>
    %c0_185 = arith.constant 0 : index
    %c0_186 = arith.constant 0 : index
    %510 = vector.load %arg31[%c0_185, %c0_186] : memref<32x3xf32, #tpu.memory_space<vmem>>, vector<32x3xf32>
    %cst_187 = arith.constant dense<0.000000e+00> : vector<2x3xf32>
    %511 = tpu.matmul %509, %510, %cst_187 {dimension_numbers = #tpu.dot_dimension_numbers<[1], [0], [0], [1], [0, 0, 1, 1], [], []>} : vector<2x32xf32>, vector<32x3xf32>, vector<2x3xf32> -> vector<2x3xf32>
    %c0_188 = arith.constant 0 : index
    %c0_189 = arith.constant 0 : index
    %512 = vector.load %arg2[%c0_188, %c0_189] : memref<2x1xf32, #tpu.memory_space<vmem>>, vector<2x1xf32>
    %c0_190 = arith.constant 0 : index
    %c0_191 = arith.constant 0 : index
    %513 = vector.load %arg32[%c0_190, %c0_191] : memref<1x3xf32, #tpu.memory_space<vmem>>, vector<1x3xf32>
    %514 = vector.broadcast %512 : vector<2x1xf32> to vector<2x3xf32>
    %515 = vector.broadcast %513 : vector<1x3xf32> to vector<2x3xf32>
    %516 = arith.mulf %514, %515 : vector<2x3xf32>
    %517 = arith.addf %511, %516 : vector<2x3xf32>
    %c0_192 = arith.constant 0 : index
    %c0_193 = arith.constant 0 : index
    %518 = vector.load %arg33[%c0_192, %c0_193] : memref<1x3xf32, #tpu.memory_space<vmem>>, vector<1x3xf32>
    %519 = vector.broadcast %518 : vector<1x3xf32> to vector<2x3xf32>
    %520 = arith.addf %517, %519 : vector<2x3xf32>
    %c0_194 = arith.constant 0 : index
    %c0_195 = arith.constant 0 : index
    %521 = vector.load %arg34[%c0_194, %c0_195] : memref<2x3xf32, #tpu.memory_space<vmem>>, vector<2x3xf32>
    tpu.vector_store %arg34[%c0_194, %c0_195], %520 {strides = array<i32>} : memref<2x3xf32, #tpu.memory_space<vmem>>, vector<2x3xf32>,
    return
  }
}

</mosaic_0001>

<llo_original>
// kernel: multitask_forward.1
$region0: #{multitask_forward.1}
  #allocation0 [shape = 'u32[]', space=smem, size = 0x4, offset = 0x4, fixed_abs, tag = 'smem constant byte address 0x4 - core index']
  #allocation1 [shape = 'u32[144,128]{1,0:T(1,128)}', space=vmem, size = 0x12000, scoped, tag = 'internal scratch']
  %s0 = inlined_call_operand.smem [shape: u32[35], index: -1, kind: input, shape index: {}]
  %s1 = sld [smem:[%s0]]
  %s2 = scalar_lea.smem %s0, 1
  %s3 = sld [smem:[%s2]]
  %s4 = scalar_lea.smem %s0, 2
  %s5 = sld [smem:[%s4]]
  %s6 = scalar_lea.smem %s0, 3
  %s7 = sld [smem:[%s6]]
  %s8 = scalar_lea.smem %s0, 4
  %s9 = sld [smem:[%s8]]
  %s10 = scalar_lea.smem %s0, 5
  %s11 = sld [smem:[%s10]]
  %s12 = scalar_lea.smem %s0, 6
  %s13 = sld [smem:[%s12]]
  %s14 = scalar_lea.smem %s0, 7
  %s15 = sld [smem:[%s14]]
  %s16 = scalar_lea.smem %s0, 8
  %s17 = sld [smem:[%s16]]
  %s18 = scalar_lea.smem %s0, 9
  %s19 = sld [smem:[%s18]]
  %s20 = scalar_lea.smem %s0, 10
  %s21 = sld [smem:[%s20]]
  %s22 = scalar_lea.smem %s0, 11
  %s23 = sld [smem:[%s22]]
  %s24 = scalar_lea.smem %s0, 12
  %s25 = sld [smem:[%s24]]
  %s26 = scalar_lea.smem %s0, 13
  %s27 = sld [smem:[%s26]]
  %s28 = scalar_lea.smem %s0, 14
  %s29 = sld [smem:[%s28]]
  %s30 = scalar_lea.smem %s0, 15
  %s31 = sld [smem:[%s30]]
  %s32 = scalar_lea.smem %s0, 16
  %s33 = sld [smem:[%s32]]
  %s34 = scalar_lea.smem %s0, 17
  %s35 = sld [smem:[%s34]]
  %s36 = scalar_lea.smem %s0, 18
  %s37 = sld [smem:[%s36]]
  %s38 = scalar_lea.smem %s0, 19
  %s39 = sld [smem:[%s38]]
  %s40 = scalar_lea.smem %s0, 20
  %s41 = sld [smem:[%s40]]
  %s42 = scalar_lea.smem %s0, 21
  %s43 = sld [smem:[%s42]]
  %s44 = scalar_lea.smem %s0, 22
  %s45 = sld [smem:[%s44]]
  %s46 = scalar_lea.smem %s0, 23
  %s47 = sld [smem:[%s46]]
  %s48 = scalar_lea.smem %s0, 24
  %s49 = sld [smem:[%s48]]
  %s50 = scalar_lea.smem %s0, 25
  %s51 = sld [smem:[%s50]]
  %s52 = scalar_lea.smem %s0, 26
  %s53 = sld [smem:[%s52]]
  %s54 = scalar_lea.smem %s0, 27
  %s55 = sld [smem:[%s54]]
  %s56 = scalar_lea.smem %s0, 28
  %s57 = sld [smem:[%s56]]
  %s58 = scalar_lea.smem %s0, 29
  %s59 = sld [smem:[%s58]]
  %s60 = scalar_lea.smem %s0, 30
  %s61 = sld [smem:[%s60]]
  %s62 = scalar_lea.smem %s0, 31
  %s63 = sld [smem:[%s62]]
  %s64 = scalar_lea.smem %s0, 32
  %s65 = sld [smem:[%s64]]
  %s66 = scalar_lea.smem %s0, 33
  %s67 = sld [smem:[%s66]]
  %s68 = scalar_lea.smem %s0, 34
  %s69 = sld [smem:[%s68]]
  %s70 = sld [smem:[#allocation0]]
  $region146: #{multitask_forward.1} parent=0
    _
  %s72 = ssub.s32 1, %s70
  %s73 = scalar_select 0, %s72, %s70
  // Predicated region
  $region2: #{multitask_forward.1} parent=0 // pred_check
    _
  $region3: #{multitask_forward.1} parent=0 // pred_check_branch
    %75 = sbr.rel (0) target = $region5
  $region4: #{multitask_forward.1} parent=0 // pred_region
    _
  $region5: #{multitask_forward.1} parent=0 // pred_fallthru
    _
  // Predicated region
  $region6: #{multitask_forward.1} parent=0 // pred_check
    _
  $region7: #{multitask_forward.1} parent=0 // pred_check_branch
    %77 = sbr.rel (0) target = $region9
  $region8: #{multitask_forward.1} parent=0 // pred_region
    _
  $region9: #{multitask_forward.1} parent=0 // pred_fallthru
    _
  // Predicated region
  $region10: #{multitask_forward.1} parent=0 // pred_check
    _
  $region11: #{multitask_forward.1} parent=0 // pred_check_branch
    %79 = sbr.rel (0) target = $region13
  $region12: #{multitask_forward.1} parent=0 // pred_region
    _
  $region13: #{multitask_forward.1} parent=0 // pred_fallthru
    _
  // Predicated region
  $region14: #{multitask_forward.1} parent=0 // pred_check
    _
  $region15: #{multitask_forward.1} parent=0 // pred_check_branch
    %81 = sbr.rel (0) target = $region17
  $region16: #{multitask_forward.1} parent=0 // pred_region
    _
  $region17: #{multitask_forward.1} parent=0 // pred_fallthru
    _
  // Predicated region
  $region18: #{multitask_forward.1} parent=0 // pred_check
    _
  $region19: #{multitask_forward.1} parent=0 // pred_check_branch
    %83 = sbr.rel (0) target = $region21
  $region20: #{multitask_forward.1} parent=0 // pred_region
    _
  $region21: #{multitask_forward.1} parent=0 // pred_fallthru
    _
  // Predicated region
  $region22: #{multitask_forward.1} parent=0 // pred_check
    _
  $region23: #{multitask_forward.1} parent=0 // pred_check_branch
    %85 = sbr.rel (0) target = $region25
  $region24: #{multitask_forward.1} parent=0 // pred_region
    _
  $region25: #{multitask_forward.1} parent=0 // pred_fallthru
    _
  // Predicated region
  $region26: #{multitask_forward.1} parent=0 // pred_check
    _
  $region27: #{multitask_forward.1} parent=0 // pred_check_branch
    %87 = sbr.rel (0) target = $region29
  $region28: #{multitask_forward.1} parent=0 // pred_region
    _
  $region29: #{multitask_forward.1} parent=0 // pred_fallthru
    _
  // Predicated region
  $region30: #{multitask_forward.1} parent=0 // pred_check
    _
  $region31: #{multitask_forward.1} parent=0 // pred_check_branch
    %89 = sbr.rel (0) target = $region33
  $region32: #{multitask_forward.1} parent=0 // pred_region
    _
  $region33: #{multitask_forward.1} parent=0 // pred_fallthru
    _
  // Predicated region
  $region34: #{multitask_forward.1} parent=0 // pred_check
    _
  $region35: #{multitask_forward.1} parent=0 // pred_check_branch
    %91 = sbr.rel (0) target = $region37
  $region36: #{multitask_forward.1} parent=0 // pred_region
    _
  $region37: #{multitask_forward.1} parent=0 // pred_fallthru
    _
  // Predicated region
  $region38: #{multitask_forward.1} parent=0 // pred_check
    _
  $region39: #{multitask_forward.1} parent=0 // pred_check_branch
    %93 = sbr.rel (0) target = $region41
  $region40: #{multitask_forward.1} parent=0 // pred_region
    _
  $region41: #{multitask_forward.1} parent=0 // pred_fallthru
    _
  // Predicated region
  $region42: #{multitask_forward.1} parent=0 // pred_check
    _
  $region43: #{multitask_forward.1} parent=0 // pred_check_branch
    %95 = sbr.rel (0) target = $region45
  $region44: #{multitask_forward.1} parent=0 // pred_region
    _
  $region45: #{multitask_forward.1} parent=0 // pred_fallthru
    _
  // Predicated region
  $region46: #{multitask_forward.1} parent=0 // pred_check
    _
  $region47: #{multitask_forward.1} parent=0 // pred_check_branch
    %97 = sbr.rel (0) target = $region49
  $region48: #{multitask_forward.1} parent=0 // pred_region
    _
  $region49: #{multitask_forward.1} parent=0 // pred_fallthru
    _
  // Predicated region
  $region50: #{multitask_forward.1} parent=0 // pred_check
    _
  $region51: #{multitask_forward.1} parent=0 // pred_check_branch
    %99 = sbr.rel (0) target = $region53
  $region52: #{multitask_forward.1} parent=0 // pred_region
    _
  $region53: #{multitask_forward.1} parent=0 // pred_fallthru
    _
  // Predicated region
  $region54: #{multitask_forward.1} parent=0 // pred_check
    _
  $region55: #{multitask_forward.1} parent=0 // pred_check_branch
    %101 = sbr.rel (0) target = $region57
  $region56: #{multitask_forward.1} parent=0 // pred_region
    _
  $region57: #{multitask_forward.1} parent=0 // pred_fallthru
    _
  // Predicated region
  $region58: #{multitask_forward.1} parent=0 // pred_check
    _
  $region59: #{multitask_forward.1} parent=0 // pred_check_branch
    %103 = sbr.rel (0) target = $region61
  $region60: #{multitask_forward.1} parent=0 // pred_region
    _
  $region61: #{multitask_forward.1} parent=0 // pred_fallthru
    _
  // Predicated region
  $region62: #{multitask_forward.1} parent=0 // pred_check
    _
  $region63: #{multitask_forward.1} parent=0 // pred_check_branch
    %105 = sbr.rel (0) target = $region65
  $region64: #{multitask_forward.1} parent=0 // pred_region
    _
  $region65: #{multitask_forward.1} parent=0 // pred_fallthru
    _
  // Predicated region
  $region66: #{multitask_forward.1} parent=0 // pred_check
    _
  $region67: #{multitask_forward.1} parent=0 // pred_check_branch
    %107 = sbr.rel (0) target = $region69
  $region68: #{multitask_forward.1} parent=0 // pred_region
    _
  $region69: #{multitask_forward.1} parent=0 // pred_fallthru
    _
  // Predicated region
  $region70: #{multitask_forward.1} parent=0 // pred_check
    _
  $region71: #{multitask_forward.1} parent=0 // pred_check_branch
    %109 = sbr.rel (0) target = $region73
  $region72: #{multitask_forward.1} parent=0 // pred_region
    _
  $region73: #{multitask_forward.1} parent=0 // pred_fallthru
    _
  // Predicated region
  $region74: #{multitask_forward.1} parent=0 // pred_check
    _
  $region75: #{multitask_forward.1} parent=0 // pred_check_branch
    %111 = sbr.rel (0) target = $region77
  $region76: #{multitask_forward.1} parent=0 // pred_region
    _
  $region77: #{multitask_forward.1} parent=0 // pred_fallthru
    _
  // Predicated region
  $region78: #{multitask_forward.1} parent=0 // pred_check
    _
  $region79: #{multitask_forward.1} parent=0 // pred_check_branch
    %113 = sbr.rel (0) target = $region81
  $region80: #{multitask_forward.1} parent=0 // pred_region
    _
  $region81: #{multitask_forward.1} parent=0 // pred_fallthru
    _
  // Predicated region
  $region82: #{multitask_forward.1} parent=0 // pred_check
    _
  $region83: #{multitask_forward.1} parent=0 // pred_check_branch
    %115 = sbr.rel (0) target = $region85
  $region84: #{multitask_forward.1} parent=0 // pred_region
    _
  $region85: #{multitask_forward.1} parent=0 // pred_fallthru
    _
  // Predicated region
  $region86: #{multitask_forward.1} parent=0 // pred_check
    _
  $region87: #{multitask_forward.1} parent=0 // pred_check_branch
    %117 = sbr.rel (0) target = $region89
  $region88: #{multitask_forward.1} parent=0 // pred_region
    _
  $region89: #{multitask_forward.1} parent=0 // pred_fallthru
    _
  // Predicated region
  $region90: #{multitask_forward.1} parent=0 // pred_check
    _
  $region91: #{multitask_forward.1} parent=0 // pred_check_branch
    %119 = sbr.rel (0) target = $region93
  $region92: #{multitask_forward.1} parent=0 // pred_region
    _
  $region93: #{multitask_forward.1} parent=0 // pred_fallthru
    _
  // Predicated region
  $region94: #{multitask_forward.1} parent=0 // pred_check
    _
  $region95: #{multitask_forward.1} parent=0 // pred_check_branch
    %121 = sbr.rel (0) target = $region97
  $region96: #{multitask_forward.1} parent=0 // pred_region
    _
  $region97: #{multitask_forward.1} parent=0 // pred_fallthru
    _
  // Predicated region
  $region98: #{multitask_forward.1} parent=0 // pred_check
    _
  $region99: #{multitask_forward.1} parent=0 // pred_check_branch
    %123 = sbr.rel (0) target = $region101
  $region100: #{multitask_forward.1} parent=0 // pred_region
    _
  $region101: #{multitask_forward.1} parent=0 // pred_fallthru
    _
  // Predicated region
  $region102: #{multitask_forward.1} parent=0 // pred_check
    _
  $region103: #{multitask_forward.1} parent=0 // pred_check_branch
    %125 = sbr.rel (0) target = $region105
  $region104: #{multitask_forward.1} parent=0 // pred_region
    _
  $region105: #{multitask_forward.1} parent=0 // pred_fallthru
    _
  // Predicated region
  $region106: #{multitask_forward.1} parent=0 // pred_check
    _
  $region107: #{multitask_forward.1} parent=0 // pred_check_branch
    %127 = sbr.rel (0) target = $region109
  $region108: #{multitask_forward.1} parent=0 // pred_region
    _
  $region109: #{multitask_forward.1} parent=0 // pred_fallthru
    _
  // Predicated region
  $region110: #{multitask_forward.1} parent=0 // pred_check
    _
  $region111: #{multitask_forward.1} parent=0 // pred_check_branch
    %129 = sbr.rel (0) target = $region113
  $region112: #{multitask_forward.1} parent=0 // pred_region
    _
  $region113: #{multitask_forward.1} parent=0 // pred_fallthru
    _
  // Predicated region
  $region114: #{multitask_forward.1} parent=0 // pred_check
    _
  $region115: #{multitask_forward.1} parent=0 // pred_check_branch
    %131 = sbr.rel (0) target = $region117
  $region116: #{multitask_forward.1} parent=0 // pred_region
    _
  $region117: #{multitask_forward.1} parent=0 // pred_fallthru
    _
  // Predicated region
  $region118: #{multitask_forward.1} parent=0 // pred_check
    _
  $region119: #{multitask_forward.1} parent=0 // pred_check_branch
    %133 = sbr.rel (0) target = $region121
  $region120: #{multitask_forward.1} parent=0 // pred_region
    _
  $region121: #{multitask_forward.1} parent=0 // pred_fallthru
    _
  // Predicated region
  $region122: #{multitask_forward.1} parent=0 // pred_check
    _
  $region123: #{multitask_forward.1} parent=0 // pred_check_branch
    %135 = sbr.rel (0) target = $region125
  $region124: #{multitask_forward.1} parent=0 // pred_region
    _
  $region125: #{multitask_forward.1} parent=0 // pred_fallthru
    _
  // Predicated region
  $region126: #{multitask_forward.1} parent=0 // pred_check
    _
  $region127: #{multitask_forward.1} parent=0 // pred_check_branch
    %137 = sbr.rel (0) target = $region129
  $region128: #{multitask_forward.1} parent=0 // pred_region
    _
  $region129: #{multitask_forward.1} parent=0 // pred_fallthru
    _
  // Predicated region
  $region130: #{multitask_forward.1} parent=0 // pred_check
    _
  $region131: #{multitask_forward.1} parent=0 // pred_check_branch
    %139 = sbr.rel (0) target = $region133
  $region132: #{multitask_forward.1} parent=0 // pred_region
    _
  $region133: #{multitask_forward.1} parent=0 // pred_fallthru
    _
  // Predicated region
  $region134: #{multitask_forward.1} parent=0 // pred_check
    _
  $region135: #{multitask_forward.1} parent=0 // pred_check_branch
    %141 = sbr.rel (0) target = $region137
  $region136: #{multitask_forward.1} parent=0 // pred_region
    _
  $region137: #{multitask_forward.1} parent=0 // pred_fallthru
    _
  %v142 = vld [vmem:[%s1] sm:$0xff]
  %v143 = vld [vmem:[%s1 + $0x8] sm:$0xff]
  %vm144 = vcmask 261120
  %v145 = vsel %vm144, %v142, 0.0
  %146 = vadd.xlane.f32.xlu0 %v145
  %v147 = vpop.xlane.xlu0 %146
  %v148 = vsel %vm144, %v143, 0.0
  %149 = vadd.xlane.f32.xlu0 %v148
  %v150 = vpop.xlane.xlu0 %149
  %v151 = vrcp.pop 32.0
  %v152 = vmul.f32 %v147, %v151
  %v153 = vmul.f32 %v150, %v151
  %v154 = vsub.f32 %v142, %v152
  %v155 = vsub.f32 %v143, %v153
  %v156 = vmul.f32 %v154, %v154
  %v157 = vmul.f32 %v155, %v155
  %v158 = vsel %vm144, %v156, 0.0
  %159 = vadd.xlane.f32.xlu0 %v158
  %v160 = vpop.xlane.xlu0 %159
  %v161 = vsel %vm144, %v157, 0.0
  %162 = vadd.xlane.f32.xlu0 %v161
  %v163 = vpop.xlane.xlu0 %162
  %v164 = vmul.f32 %v160, %v151
  %v165 = vmul.f32 %v163, %v151
  %v166 = vadd.f32 %v164, 1e-12
  %v167 = vadd.f32 %v165, 1e-12
  %v168 = vrsqrt.pop %v166
  %v169 = vrsqrt.pop %v167
  %v170 = vmul.f32 %v154, %v168
  %v171 = vmul.f32 %v155, %v169
  %v172 = vld [vmem:[%s7] sm:$0x1]
  %v174 = vlaneseq
  %v175 = vshrl.u32 %v174, 7
  %v176 = vsub.s32 0, %v175
  %v177 = vrot.slane %v172, %v176
  %v179 = vmul.f32 %v170, %v177
  %v180 = vmul.f32 %v171, %v177
  %v181 = vld [vmem:[%s9] sm:$0x1]
  %v183 = vlaneseq
  %v184 = vshrl.u32 %v183, 7
  %v185 = vsub.s32 0, %v184
  %v186 = vrot.slane %v181, %v185
  %v188 = vadd.f32 %v179, %v186
  %v189 = vadd.f32 %v180, %v186
  %v190 = vld [vmem:[%s3] sm:$0x1]
  %v191 = vsub.f32 1.0, %v190
  %v192 = vmul.f32 %v191, -10000.0
  %v193 = vld [vmem:[%s3 + $0x1] sm:$0x1]
  %v194 = vsub.f32 1.0, %v193
  %v195 = vmul.f32 %v194, -10000.0
  %v196 = vld [vmem:[%s11] sm:$0xff]
  %v197 = vld [vmem:[%s11 + $0x8] sm:$0xff]
  %v198 = vld [vmem:[%s11 + $0x10] sm:$0xff]
  %v199 = vld [vmem:[%s11 + $0x18] sm:$0xff]
  %v200 = vld [vmem:[%s13] sm:$0x1]
  %v202 = vlaneseq
  %v203 = vshrl.u32 %v202, 7
  %v204 = vsub.s32 0, %v203
  %v205 = vrot.slane %v200, %v204
  %v208 = vsel %vm144, %v188, 0
  %v211 = vsel %vm144, %v189, 0
  %213 = vmatprep.subr.mxu0 0.0
  %214 = vmatpush1.msra.mxu0 0.0
  %215 = vmatprep.subr.mxu0 0.0
  %216 = vmatpush1.msra.mxu0 0.0
  %217 = vmatprep.subr.mxu0 0.0
  %218 = vmatpush1.msra.mxu0 0.0
  %219 = vmatprep.subr.mxu0 0.0
  %220 = vmatpush1.msra.mxu0 0.0
  %221 = vmatprep.subr.mxu0 0.0
  %222 = vmatpush1.msra.mxu0 0.0
  %223 = vmatprep.subr.mxu0 0.0
  %224 = vmatpush1.msra.mxu0 0.0
  %225 = vmatprep.subr.mxu0 0.0
  %226 = vmatpush1.msra.mxu0 0.0
  %227 = vmatprep.subr.mxu0 0.0
  %228 = vmatpush1.msra.mxu0 0.0
  %229 = vmatprep.subr.mxu0 0.0
  %230 = vmatpush1.msra.mxu0 0.0
  %231 = vmatprep.subr.mxu0 0.0
  %232 = vmatpush1.msra.mxu0 0.0
  %233 = vmatprep.subr.mxu0 0.0
  %234 = vmatpush1.msra.mxu0 0.0
  %235 = vmatprep.subr.mxu0 0.0
  %236 = vmatpush1.msra.mxu0 0.0
  %237 = vmatprep.subr.mxu0 0.0
  %238 = vmatpush1.msra.mxu0 %v199
  %239 = vmatprep.subr.mxu0 0.0
  %240 = vmatpush1.msra.mxu0 %v198
  %241 = vmatprep.subr.mxu0 0.0
  %242 = vmatpush1.msra.mxu0 %v197
  %243 = vmatprep.subr.mxu0 0.0
  %244 = vmatpush1.msra.mxu0 %v196
  %245 = vmatprep.subr.mxu0 0.0
  %246 = vmatpush2.msra.mxu0 0.0
  %247 = vmatprep.subr.mxu0 0.0
  %248 = vmatpush2.msra.mxu0 0.0
  %249 = vmatprep.subr.mxu0 0.0
  %250 = vmatpush2.msra.mxu0 0.0
  %251 = vmatprep.subr.mxu0 0.0
  %252 = vmatpush2.msra.mxu0 0.0
  %253 = vmatprep.subr.mxu0 0.0
  %254 = vmatpush2.msra.mxu0 0.0
  %255 = vmatprep.subr.mxu0 0.0
  %256 = vmatpush2.msra.mxu0 0.0
  %257 = vmatprep.subr.mxu0 0.0
  %258 = vmatpush2.msra.mxu0 0.0
  %259 = vmatprep.subr.mxu0 0.0
  %260 = vmatpush2.msra.mxu0 0.0
  %261 = vmatprep.subr.mxu0 0.0
  %262 = vmatpush2.msra.mxu0 0.0
  %263 = vmatprep.subr.mxu0 0.0
  %264 = vmatpush2.msra.mxu0 0.0
  %265 = vmatprep.subr.mxu0 0.0
  %266 = vmatpush2.msra.mxu0 0.0
  %267 = vmatprep.subr.mxu0 0.0
  %268 = vmatpush2.msra.mxu0 0.0
  %269 = vmatprep.subr.mxu0 0.0
  %270 = vmatpush2.msra.mxu0 0.0
  %271 = vmatprep.subr.mxu0 0.0
  %272 = vmatpush2.msra.mxu0 0.0
  %273 = vmatprep.subr.mxu0 0.0
  %274 = vmatpush2.msra.mxu0 0.0
  %275 = vmatprep.subr.mxu0 0.0
  %276 = vmatpush2.msra.mxu0 0.0
  %277 = vmatprep.mubr.f32.mxu0 0.0
  %278 = vmatmul.mubr.f32.gmra.mxu0 %v208
  %v279 = vpop.f32.mrf.mxu0
  %v280 = vadd.f32 %v205, %v279
  %v281 = vpop.f32.mrf.mxu0
  %282 = vmatprep.mubr.f32.mxu0 0.0
  %283 = vmatmul.mubr.f32.gmra.mxu0 %v211
  %v284 = vpop.f32.mrf.mxu0
  %v285 = vadd.f32 %v205, %v284
  %v286 = vpop.f32.mrf.mxu0
  %287 = vdwg.mxu0
  %289 = vrot.lane.b32.xlu0 %v280, 96
  %v290 = vpop.permute.xlu0 %289
  %vm291 = vcmask 64512
  %v292 = vsel %vm291, %v280, 0
  %v294 = vsel %vm291, %v290, 0
  %296 = vmatprep.subr.mxu0 0.0
  %297 = vmatpush1.xpose.msra.mxu0 0.0
  %298 = vmatprep.subr.mxu0 0.0
  %299 = vmatpush1.xpose.msra.mxu0 0.0
  %300 = vmatprep.subr.mxu0 0.0
  %301 = vmatpush1.xpose.msra.mxu0 0.0
  %302 = vmatprep.subr.mxu0 0.0
  %303 = vmatpush1.xpose.msra.mxu0 0.0
  %304 = vmatprep.subr.mxu0 0.0
  %305 = vmatpush1.xpose.msra.mxu0 0.0
  %306 = vmatprep.subr.mxu0 0.0
  %307 = vmatpush1.xpose.msra.mxu0 0.0
  %308 = vmatprep.subr.mxu0 0.0
  %309 = vmatpush1.xpose.msra.mxu0 0.0
  %310 = vmatprep.subr.mxu0 0.0
  %311 = vmatpush1.xpose.msra.mxu0 0.0
  %312 = vmatprep.subr.mxu0 0.0
  %313 = vmatpush1.xpose.msra.mxu0 0.0
  %314 = vmatprep.subr.mxu0 0.0
  %315 = vmatpush1.xpose.msra.mxu0 0.0
  %316 = vmatprep.subr.mxu0 0.0
  %317 = vmatpush1.xpose.msra.mxu0 0.0
  %318 = vmatprep.subr.mxu0 0.0
  %319 = vmatpush1.xpose.msra.mxu0 0.0
  %320 = vmatprep.subr.mxu0 0.0
  %321 = vmatpush1.xpose.msra.mxu0 0.0
  %322 = vmatprep.subr.mxu0 0.0
  %323 = vmatpush1.xpose.msra.mxu0 0.0
  %324 = vmatprep.subr.mxu0 0.0
  %325 = vmatpush1.xpose.msra.mxu0 0.0
  %326 = vmatprep.subr.mxu0 0.0
  %327 = vmatpush1.xpose.msra.mxu0 %v294
  %328 = vmatprep.subr.mxu0 0.0
  %329 = vmatpush2.xpose.msra.mxu0 0.0
  %330 = vmatprep.subr.mxu0 0.0
  %331 = vmatpush2.xpose.msra.mxu0 0.0
  %332 = vmatprep.subr.mxu0 0.0
  %333 = vmatpush2.xpose.msra.mxu0 0.0
  %334 = vmatprep.subr.mxu0 0.0
  %335 = vmatpush2.xpose.msra.mxu0 0.0
  %336 = vmatprep.subr.mxu0 0.0
  %337 = vmatpush2.xpose.msra.mxu0 0.0
  %338 = vmatprep.subr.mxu0 0.0
  %339 = vmatpush2.xpose.msra.mxu0 0.0
  %340 = vmatprep.subr.mxu0 0.0
  %341 = vmatpush2.xpose.msra.mxu0 0.0
  %342 = vmatprep.subr.mxu0 0.0
  %343 = vmatpush2.xpose.msra.mxu0 0.0
  %344 = vmatprep.subr.mxu0 0.0
  %345 = vmatpush2.xpose.msra.mxu0 0.0
  %346 = vmatprep.subr.mxu0 0.0
  %347 = vmatpush2.xpose.msra.mxu0 0.0
  %348 = vmatprep.subr.mxu0 0.0
  %349 = vmatpush2.xpose.msra.mxu0 0.0
  %350 = vmatprep.subr.mxu0 0.0
  %351 = vmatpush2.xpose.msra.mxu0 0.0
  %352 = vmatprep.subr.mxu0 0.0
  %353 = vmatpush2.xpose.msra.mxu0 0.0
  %354 = vmatprep.subr.mxu0 0.0
  %355 = vmatpush2.xpose.msra.mxu0 0.0
  %356 = vmatprep.subr.mxu0 0.0
  %357 = vmatpush2.xpose.msra.mxu0 0.0
  %358 = vmatprep.subr.mxu0 0.0
  %359 = vmatpush2.xpose.msra.mxu0 0.0
  %360 = vmatprep.mubr.f32.mxu0 0.0
  %361 = vmatmul.mubr.f32.gmra.mxu0 %v292
  %v362 = vpop.f32.mrf.mxu0
  %v363 = vadd.f32 0.0, %v362
  %v364 = vpop.f32.mrf.mxu0
  %365 = vdwg.mxu0
  %v366 = vmul.f32 %v363, 0.35355338
  %v367 = vlaneseq
  %v368 = vshrl.u32 %v367, 7
  %v369 = vsub.s32 0, %v368
  %v370 = vrot.slane %v192, %v369
  %v371 = vadd.f32 %v366, %v370
  %v372 = vsel %vm291, %v371, -inf
  %373 = vmax.xlane.f32.xlu0 %v372
  %v374 = vpop.xlane.xlu0 %373
  %v375 = vsub.f32 %v371, %v374
  %v376 = vmul.f32 %v375, 1.442695
  %v377 = vpow.pop %v376
  %v378 = vsel %vm291, %v377, 0.0
  %379 = vadd.xlane.f32.xlu0 %v378
  %v380 = vpop.xlane.xlu0 %379
  %v381 = vrcp.pop %v380
  %v382 = vmul.f32 %v377, %v381
  %383 = vrot.lane.b32.xlu0 %v280, 64
  %v384 = vpop.permute.xlu0 %383
  %v387 = vsel %vm291, %v382, 0
  %389 = vmatprep.subr.mxu0 0.0
  %390 = vmatpush1.msra.mxu0 0.0
  %391 = vmatprep.subr.mxu0 0.0
  %392 = vmatpush1.msra.mxu0 0.0
  %393 = vmatprep.subr.mxu0 0.0
  %394 = vmatpush1.msra.mxu0 0.0
  %395 = vmatprep.subr.mxu0 0.0
  %396 = vmatpush1.msra.mxu0 0.0
  %397 = vmatprep.subr.mxu0 0.0
  %398 = vmatpush1.msra.mxu0 0.0
  %399 = vmatprep.subr.mxu0 0.0
  %400 = vmatpush1.msra.mxu0 0.0
  %401 = vmatprep.subr.mxu0 0.0
  %402 = vmatpush1.msra.mxu0 0.0
  %403 = vmatprep.subr.mxu0 0.0
  %404 = vmatpush1.msra.mxu0 0.0
  %405 = vmatprep.subr.mxu0 0.0
  %406 = vmatpush1.msra.mxu0 0.0
  %407 = vmatprep.subr.mxu0 0.0
  %408 = vmatpush1.msra.mxu0 0.0
  %409 = vmatprep.subr.mxu0 0.0
  %410 = vmatpush1.msra.mxu0 0.0
  %411 = vmatprep.subr.mxu0 0.0
  %412 = vmatpush1.msra.mxu0 0.0
  %413 = vmatprep.subr.mxu0 0.0
  %414 = vmatpush1.msra.mxu0 0.0
  %415 = vmatprep.subr.mxu0 0.0
  %416 = vmatpush1.msra.mxu0 0.0
  %417 = vmatprep.subr.mxu0 0.0
  %418 = vmatpush1.msra.mxu0 0.0
  %419 = vmatprep.subr.mxu0 0.0
  %420 = vmatpush1.msra.mxu0 %v384
  %421 = vmatprep.subr.mxu0 0.0
  %422 = vmatpush2.msra.mxu0 0.0
  %423 = vmatprep.subr.mxu0 0.0
  %424 = vmatpush2.msra.mxu0 0.0
  %425 = vmatprep.subr.mxu0 0.0
  %426 = vmatpush2.msra.mxu0 0.0
  %427 = vmatprep.subr.mxu0 0.0
  %428 = vmatpush2.msra.mxu0 0.0
  %429 = vmatprep.subr.mxu0 0.0
  %430 = vmatpush2.msra.mxu0 0.0
  %431 = vmatprep.subr.mxu0 0.0
  %432 = vmatpush2.msra.mxu0 0.0
  %433 = vmatprep.subr.mxu0 0.0
  %434 = vmatpush2.msra.mxu0 0.0
  %435 = vmatprep.subr.mxu0 0.0
  %436 = vmatpush2.msra.mxu0 0.0
  %437 = vmatprep.subr.mxu0 0.0
  %438 = vmatpush2.msra.mxu0 0.0
  %439 = vmatprep.subr.mxu0 0.0
  %440 = vmatpush2.msra.mxu0 0.0
  %441 = vmatprep.subr.mxu0 0.0
  %442 = vmatpush2.msra.mxu0 0.0
  %443 = vmatprep.subr.mxu0 0.0
  %444 = vmatpush2.msra.mxu0 0.0
  %445 = vmatprep.subr.mxu0 0.0
  %446 = vmatpush2.msra.mxu0 0.0
  %447 = vmatprep.subr.mxu0 0.0
  %448 = vmatpush2.msra.mxu0 0.0
  %449 = vmatprep.subr.mxu0 0.0
  %450 = vmatpush2.msra.mxu0 0.0
  %451 = vmatprep.subr.mxu0 0.0
  %452 = vmatpush2.msra.mxu0 0.0
  %453 = vmatprep.mubr.f32.mxu0 0.0
  %454 = vmatmul.mubr.f32.gmra.mxu0 %v387
  %v455 = vpop.f32.mrf.mxu0
  %v456 = vadd.f32 0.0, %v455
  %v457 = vpop.f32.mrf.mxu0
  %458 = vdwg.mxu0
  %459 = vrot.lane.b32.xlu0 %v280, 120
  %v460 = vpop.permute.xlu0 %459
  %461 = vrot.lane.b32.xlu0 %v280, 88
  %v462 = vpop.permute.xlu0 %461
  %v463 = vsel %vm291, %v460, 0
  %v465 = vsel %vm291, %v462, 0
  %467 = vmatprep.subr.mxu0 0.0
  %468 = vmatpush1.xpose.msra.mxu0 0.0
  %469 = vmatprep.subr.mxu0 0.0
  %470 = vmatpush1.xpose.msra.mxu0 0.0
  %471 = vmatprep.subr.mxu0 0.0
  %472 = vmatpush1.xpose.msra.mxu0 0.0
  %473 = vmatprep.subr.mxu0 0.0
  %474 = vmatpush1.xpose.msra.mxu0 0.0
  %475 = vmatprep.subr.mxu0 0.0
  %476 = vmatpush1.xpose.msra.mxu0 0.0
  %477 = vmatprep.subr.mxu0 0.0
  %478 = vmatpush1.xpose.msra.mxu0 0.0
  %479 = vmatprep.subr.mxu0 0.0
  %480 = vmatpush1.xpose.msra.mxu0 0.0
  %481 = vmatprep.subr.mxu0 0.0
  %482 = vmatpush1.xpose.msra.mxu0 0.0
  %483 = vmatprep.subr.mxu0 0.0
  %484 = vmatpush1.xpose.msra.mxu0 0.0
  %485 = vmatprep.subr.mxu0 0.0
  %486 = vmatpush1.xpose.msra.mxu0 0.0
  %487 = vmatprep.subr.mxu0 0.0
  %488 = vmatpush1.xpose.msra.mxu0 0.0
  %489 = vmatprep.subr.mxu0 0.0
  %490 = vmatpush1.xpose.msra.mxu0 0.0
  %491 = vmatprep.subr.mxu0 0.0
  %492 = vmatpush1.xpose.msra.mxu0 0.0
  %493 = vmatprep.subr.mxu0 0.0
  %494 = vmatpush1.xpose.msra.mxu0 0.0
  %495 = vmatprep.subr.mxu0 0.0
  %496 = vmatpush1.xpose.msra.mxu0 0.0
  %497 = vmatprep.subr.mxu0 0.0
  %498 = vmatpush1.xpose.msra.mxu0 %v465
  %499 = vmatprep.subr.mxu0 0.0
  %500 = vmatpush2.xpose.msra.mxu0 0.0
  %501 = vmatprep.subr.mxu0 0.0
  %502 = vmatpush2.xpose.msra.mxu0 0.0
  %503 = vmatprep.subr.mxu0 0.0
  %504 = vmatpush2.xpose.msra.mxu0 0.0
  %505 = vmatprep.subr.mxu0 0.0
  %506 = vmatpush2.xpose.msra.mxu0 0.0
  %507 = vmatprep.subr.mxu0 0.0
  %508 = vmatpush2.xpose.msra.mxu0 0.0
  %509 = vmatprep.subr.mxu0 0.0
  %510 = vmatpush2.xpose.msra.mxu0 0.0
  %511 = vmatprep.subr.mxu0 0.0
  %512 = vmatpush2.xpose.msra.mxu0 0.0
  %513 = vmatprep.subr.mxu0 0.0
  %514 = vmatpush2.xpose.msra.mxu0 0.0
  %515 = vmatprep.subr.mxu0 0.0
  %516 = vmatpush2.xpose.msra.mxu0 0.0
  %517 = vmatprep.subr.mxu0 0.0
  %518 = vmatpush2.xpose.msra.mxu0 0.0
  %519 = vmatprep.subr.mxu0 0.0
  %520 = vmatpush2.xpose.msra.mxu0 0.0
  %521 = vmatprep.subr.mxu0 0.0
  %522 = vmatpush2.xpose.msra.mxu0 0.0
  %523 = vmatprep.subr.mxu0 0.0
  %524 = vmatpush2.xpose.msra.mxu0 0.0
  %525 = vmatprep.subr.mxu0 0.0
  %526 = vmatpush2.xpose.msra.mxu0 0.0
  %527 = vmatprep.subr.mxu0 0.0
  %528 = vmatpush2.xpose.msra.mxu0 0.0
  %529 = vmatprep.subr.mxu0 0.0
  %530 = vmatpush2.xpose.msra.mxu0 0.0
  %531 = vmatprep.mubr.f32.mxu0 0.0
  %532 = vmatmul.mubr.f32.gmra.mxu0 %v463
  %v533 = vpop.f32.mrf.mxu0
  %v534 = vadd.f32 0.0, %v533
  %v535 = vpop.f32.mrf.mxu0
  %536 = vdwg.mxu0
  %v537 = vmul.f32 %v534, 0.35355338
  %v538 = vadd.f32 %v537, %v370
  %v539 = vsel %vm291, %v538, -inf
  %540 = vmax.xlane.f32.xlu0 %v539
  %v541 = vpop.xlane.xlu0 %540
  %v542 = vsub.f32 %v538, %v541
  %v543 = vmul.f32 %v542, 1.442695
  %v544 = vpow.pop %v543
  %v545 = vsel %vm291, %v544, 0.0
  %546 = vadd.xlane.f32.xlu0 %v545
  %v547 = vpop.xlane.xlu0 %546
  %v548 = vrcp.pop %v547
  %v549 = vmul.f32 %v544, %v548
  %550 = vrot.lane.b32.xlu0 %v280, 56
  %v551 = vpop.permute.xlu0 %550
  %v554 = vsel %vm291, %v549, 0
  %556 = vmatprep.subr.mxu0 0.0
  %557 = vmatpush1.msra.mxu0 0.0
  %558 = vmatprep.subr.mxu0 0.0
  %559 = vmatpush1.msra.mxu0 0.0
  %560 = vmatprep.subr.mxu0 0.0
  %561 = vmatpush1.msra.mxu0 0.0
  %562 = vmatprep.subr.mxu0 0.0
  %563 = vmatpush1.msra.mxu0 0.0
  %564 = vmatprep.subr.mxu0 0.0
  %565 = vmatpush1.msra.mxu0 0.0
  %566 = vmatprep.subr.mxu0 0.0
  %567 = vmatpush1.msra.mxu0 0.0
  %568 = vmatprep.subr.mxu0 0.0
  %569 = vmatpush1.msra.mxu0 0.0
  %570 = vmatprep.subr.mxu0 0.0
  %571 = vmatpush1.msra.mxu0 0.0
  %572 = vmatprep.subr.mxu0 0.0
  %573 = vmatpush1.msra.mxu0 0.0
  %574 = vmatprep.subr.mxu0 0.0
  %575 = vmatpush1.msra.mxu0 0.0
  %576 = vmatprep.subr.mxu0 0.0
  %577 = vmatpush1.msra.mxu0 0.0
  %578 = vmatprep.subr.mxu0 0.0
  %579 = vmatpush1.msra.mxu0 0.0
  %580 = vmatprep.subr.mxu0 0.0
  %581 = vmatpush1.msra.mxu0 0.0
  %582 = vmatprep.subr.mxu0 0.0
  %583 = vmatpush1.msra.mxu0 0.0
  %584 = vmatprep.subr.mxu0 0.0
  %585 = vmatpush1.msra.mxu0 0.0
  %586 = vmatprep.subr.mxu0 0.0
  %587 = vmatpush1.msra.mxu0 %v551
  %588 = vmatprep.subr.mxu0 0.0
  %589 = vmatpush2.msra.mxu0 0.0
  %590 = vmatprep.subr.mxu0 0.0
  %591 = vmatpush2.msra.mxu0 0.0
  %592 = vmatprep.subr.mxu0 0.0
  %593 = vmatpush2.msra.mxu0 0.0
  %594 = vmatprep.subr.mxu0 0.0
  %595 = vmatpush2.msra.mxu0 0.0
  %596 = vmatprep.subr.mxu0 0.0
  %597 = vmatpush2.msra.mxu0 0.0
  %598 = vmatprep.subr.mxu0 0.0
  %599 = vmatpush2.msra.mxu0 0.0
  %600 = vmatprep.subr.mxu0 0.0
  %601 = vmatpush2.msra.mxu0 0.0
  %602 = vmatprep.subr.mxu0 0.0
  %603 = vmatpush2.msra.mxu0 0.0
  %604 = vmatprep.subr.mxu0 0.0
  %605 = vmatpush2.msra.mxu0 0.0
  %606 = vmatprep.subr.mxu0 0.0
  %607 = vmatpush2.msra.mxu0 0.0
  %608 = vmatprep.subr.mxu0 0.0
  %609 = vmatpush2.msra.mxu0 0.0
  %610 = vmatprep.subr.mxu0 0.0
  %611 = vmatpush2.msra.mxu0 0.0
  %612 = vmatprep.subr.mxu0 0.0
  %613 = vmatpush2.msra.mxu0 0.0
  %614 = vmatprep.subr.mxu0 0.0
  %615 = vmatpush2.msra.mxu0 0.0
  %616 = vmatprep.subr.mxu0 0.0
  %617 = vmatpush2.msra.mxu0 0.0
  %618 = vmatprep.subr.mxu0 0.0
  %619 = vmatpush2.msra.mxu0 0.0
  %620 = vmatprep.mubr.f32.mxu0 0.0
  %621 = vmatmul.mubr.f32.gmra.mxu0 %v554
  %v622 = vpop.f32.mrf.mxu0
  %v623 = vadd.f32 0.0, %v622
  %v624 = vpop.f32.mrf.mxu0
  %625 = vdwg.mxu0
  %626 = vrot.lane.b32.xlu0 %v280, 112
  %v627 = vpop.permute.xlu0 %626
  %628 = vrot.lane.b32.xlu0 %v280, 80
  %v629 = vpop.permute.xlu0 %628
  %v630 = vsel %vm291, %v627, 0
  %v632 = vsel %vm291, %v629, 0
  %634 = vmatprep.subr.mxu0 0.0
  %635 = vmatpush1.xpose.msra.mxu0 0.0
  %636 = vmatprep.subr.mxu0 0.0
  %637 = vmatpush1.xpose.msra.mxu0 0.0
  %638 = vmatprep.subr.mxu0 0.0
  %639 = vmatpush1.xpose.msra.mxu0 0.0
  %640 = vmatprep.subr.mxu0 0.0
  %641 = vmatpush1.xpose.msra.mxu0 0.0
  %642 = vmatprep.subr.mxu0 0.0
  %643 = vmatpush1.xpose.msra.mxu0 0.0
  %644 = vmatprep.subr.mxu0 0.0
  %645 = vmatpush1.xpose.msra.mxu0 0.0
  %646 = vmatprep.subr.mxu0 0.0
  %647 = vmatpush1.xpose.msra.mxu0 0.0
  %648 = vmatprep.subr.mxu0 0.0
  %649 = vmatpush1.xpose.msra.mxu0 0.0
  %650 = vmatprep.subr.mxu0 0.0
  %651 = vmatpush1.xpose.msra.mxu0 0.0
  %652 = vmatprep.subr.mxu0 0.0
  %653 = vmatpush1.xpose.msra.mxu0 0.0
  %654 = vmatprep.subr.mxu0 0.0
  %655 = vmatpush1.xpose.msra.mxu0 0.0
  %656 = vmatprep.subr.mxu0 0.0
  %657 = vmatpush1.xpose.msra.mxu0 0.0
  %658 = vmatprep.subr.mxu0 0.0
  %659 = vmatpush1.xpose.msra.mxu0 0.0
  %660 = vmatprep.subr.mxu0 0.0
  %661 = vmatpush1.xpose.msra.mxu0 0.0
  %662 = vmatprep.subr.mxu0 0.0
  %663 = vmatpush1.xpose.msra.mxu0 0.0
  %664 = vmatprep.subr.mxu0 0.0
  %665 = vmatpush1.xpose.msra.mxu0 %v632
  %666 = vmatprep.subr.mxu0 0.0
  %667 = vmatpush2.xpose.msra.mxu0 0.0
  %668 = vmatprep.subr.mxu0 0.0
  %669 = vmatpush2.xpose.msra.mxu0 0.0
  %670 = vmatprep.subr.mxu0 0.0
  %671 = vmatpush2.xpose.msra.mxu0 0.0
  %672 = vmatprep.subr.mxu0 0.0
  %673 = vmatpush2.xpose.msra.mxu0 0.0
  %674 = vmatprep.subr.mxu0 0.0
  %675 = vmatpush2.xpose.msra.mxu0 0.0
  %676 = vmatprep.subr.mxu0 0.0
  %677 = vmatpush2.xpose.msra.mxu0 0.0
  %678 = vmatprep.subr.mxu0 0.0
  %679 = vmatpush2.xpose.msra.mxu0 0.0
  %680 = vmatprep.subr.mxu0 0.0
  %681 = vmatpush2.xpose.msra.mxu0 0.0
  %682 = vmatprep.subr.mxu0 0.0
  %683 = vmatpush2.xpose.msra.mxu0 0.0
  %684 = vmatprep.subr.mxu0 0.0
  %685 = vmatpush2.xpose.msra.mxu0 0.0
  %686 = vmatprep.subr.mxu0 0.0
  %687 = vmatpush2.xpose.msra.mxu0 0.0
  %688 = vmatprep.subr.mxu0 0.0
  %689 = vmatpush2.xpose.msra.mxu0 0.0
  %690 = vmatprep.subr.mxu0 0.0
  %691 = vmatpush2.xpose.msra.mxu0 0.0
  %692 = vmatprep.subr.mxu0 0.0
  %693 = vmatpush2.xpose.msra.mxu0 0.0
  %694 = vmatprep.subr.mxu0 0.0
  %695 = vmatpush2.xpose.msra.mxu0 0.0
  %696 = vmatprep.subr.mxu0 0.0
  %697 = vmatpush2.xpose.msra.mxu0 0.0
  %698 = vmatprep.mubr.f32.mxu0 0.0
  %699 = vmatmul.mubr.f32.gmra.mxu0 %v630
  %v700 = vpop.f32.mrf.mxu0
  %v701 = vadd.f32 0.0, %v700
  %v702 = vpop.f32.mrf.mxu0
  %703 = vdwg.mxu0
  %v704 = vmul.f32 %v701, 0.35355338
  %v705 = vadd.f32 %v704, %v370
  %v706 = vsel %vm291, %v705, -inf
  %707 = vmax.xlane.f32.xlu0 %v706
  %v708 = vpop.xlane.xlu0 %707
  %v709 = vsub.f32 %v705, %v708
  %v710 = vmul.f32 %v709, 1.442695
  %v711 = vpow.pop %v710
  %v712 = vsel %vm291, %v711, 0.0
  %713 = vadd.xlane.f32.xlu0 %v712
  %v714 = vpop.xlane.xlu0 %713
  %v715 = vrcp.pop %v714
  %v716 = vmul.f32 %v711, %v715
  %717 = vrot.lane.b32.xlu0 %v280, 48
  %v718 = vpop.permute.xlu0 %717
  %v721 = vsel %vm291, %v716, 0
  %723 = vmatprep.subr.mxu0 0.0
  %724 = vmatpush1.msra.mxu0 0.0
  %725 = vmatprep.subr.mxu0 0.0
  %726 = vmatpush1.msra.mxu0 0.0
  %727 = vmatprep.subr.mxu0 0.0
  %728 = vmatpush1.msra.mxu0 0.0
  %729 = vmatprep.subr.mxu0 0.0
  %730 = vmatpush1.msra.mxu0 0.0
  %731 = vmatprep.subr.mxu0 0.0
  %732 = vmatpush1.msra.mxu0 0.0
  %733 = vmatprep.subr.mxu0 0.0
  %734 = vmatpush1.msra.mxu0 0.0
  %735 = vmatprep.subr.mxu0 0.0
  %736 = vmatpush1.msra.mxu0 0.0
  %737 = vmatprep.subr.mxu0 0.0
  %738 = vmatpush1.msra.mxu0 0.0
  %739 = vmatprep.subr.mxu0 0.0
  %740 = vmatpush1.msra.mxu0 0.0
  %741 = vmatprep.subr.mxu0 0.0
  %742 = vmatpush1.msra.mxu0 0.0
  %743 = vmatprep.subr.mxu0 0.0
  %744 = vmatpush1.msra.mxu0 0.0
  %745 = vmatprep.subr.mxu0 0.0
  %746 = vmatpush1.msra.mxu0 0.0
  %747 = vmatprep.subr.mxu0 0.0
  %748 = vmatpush1.msra.mxu0 0.0
  %749 = vmatprep.subr.mxu0 0.0
  %750 = vmatpush1.msra.mxu0 0.0
  %751 = vmatprep.subr.mxu0 0.0
  %752 = vmatpush1.msra.mxu0 0.0
  %753 = vmatprep.subr.mxu0 0.0
  %754 = vmatpush1.msra.mxu0 %v718
  %755 = vmatprep.subr.mxu0 0.0
  %756 = vmatpush2.msra.mxu0 0.0
  %757 = vmatprep.subr.mxu0 0.0
  %758 = vmatpush2.msra.mxu0 0.0
  %759 = vmatprep.subr.mxu0 0.0
  %760 = vmatpush2.msra.mxu0 0.0
  %761 = vmatprep.subr.mxu0 0.0
  %762 = vmatpush2.msra.mxu0 0.0
  %763 = vmatprep.subr.mxu0 0.0
  %764 = vmatpush2.msra.mxu0 0.0
  %765 = vmatprep.subr.mxu0 0.0
  %766 = vmatpush2.msra.mxu0 0.0
  %767 = vmatprep.subr.mxu0 0.0
  %768 = vmatpush2.msra.mxu0 0.0
  %769 = vmatprep.subr.mxu0 0.0
  %770 = vmatpush2.msra.mxu0 0.0
  %771 = vmatprep.subr.mxu0 0.0
  %772 = vmatpush2.msra.mxu0 0.0
  %773 = vmatprep.subr.mxu0 0.0
  %774 = vmatpush2.msra.mxu0 0.0
  %775 = vmatprep.subr.mxu0 0.0
  %776 = vmatpush2.msra.mxu0 0.0
  %777 = vmatprep.subr.mxu0 0.0
  %778 = vmatpush2.msra.mxu0 0.0
  %779 = vmatprep.subr.mxu0 0.0
  %780 = vmatpush2.msra.mxu0 0.0
  %781 = vmatprep.subr.mxu0 0.0
  %782 = vmatpush2.msra.mxu0 0.0
  %783 = vmatprep.subr.mxu0 0.0
  %784 = vmatpush2.msra.mxu0 0.0
  %785 = vmatprep.subr.mxu0 0.0
  %786 = vmatpush2.msra.mxu0 0.0
  %787 = vmatprep.mubr.f32.mxu0 0.0
  %788 = vmatmul.mubr.f32.gmra.mxu0 %v721
  %v789 = vpop.f32.mrf.mxu0
  %v790 = vadd.f32 0.0, %v789
  %v791 = vpop.f32.mrf.mxu0
  %792 = vdwg.mxu0
  %793 = vrot.lane.b32.xlu0 %v280, 104
  %v794 = vpop.permute.xlu0 %793
  %795 = vrot.lane.b32.xlu0 %v280, 72
  %v796 = vpop.permute.xlu0 %795
  %v797 = vsel %vm291, %v794, 0
  %v799 = vsel %vm291, %v796, 0
  %801 = vmatprep.subr.mxu0 0.0
  %802 = vmatpush1.xpose.msra.mxu0 0.0
  %803 = vmatprep.subr.mxu0 0.0
  %804 = vmatpush1.xpose.msra.mxu0 0.0
  %805 = vmatprep.subr.mxu0 0.0
  %806 = vmatpush1.xpose.msra.mxu0 0.0
  %807 = vmatprep.subr.mxu0 0.0
  %808 = vmatpush1.xpose.msra.mxu0 0.0
  %809 = vmatprep.subr.mxu0 0.0
  %810 = vmatpush1.xpose.msra.mxu0 0.0
  %811 = vmatprep.subr.mxu0 0.0
  %812 = vmatpush1.xpose.msra.mxu0 0.0
  %813 = vmatprep.subr.mxu0 0.0
  %814 = vmatpush1.xpose.msra.mxu0 0.0
  %815 = vmatprep.subr.mxu0 0.0
  %816 = vmatpush1.xpose.msra.mxu0 0.0
  %817 = vmatprep.subr.mxu0 0.0
  %818 = vmatpush1.xpose.msra.mxu0 0.0
  %819 = vmatprep.subr.mxu0 0.0
  %820 = vmatpush1.xpose.msra.mxu0 0.0
  %821 = vmatprep.subr.mxu0 0.0
  %822 = vmatpush1.xpose.msra.mxu0 0.0
  %823 = vmatprep.subr.mxu0 0.0
  %824 = vmatpush1.xpose.msra.mxu0 0.0
  %825 = vmatprep.subr.mxu0 0.0
  %826 = vmatpush1.xpose.msra.mxu0 0.0
  %827 = vmatprep.subr.mxu0 0.0
  %828 = vmatpush1.xpose.msra.mxu0 0.0
  %829 = vmatprep.subr.mxu0 0.0
  %830 = vmatpush1.xpose.msra.mxu0 0.0
  %831 = vmatprep.subr.mxu0 0.0
  %832 = vmatpush1.xpose.msra.mxu0 %v799
  %833 = vmatprep.subr.mxu0 0.0
  %834 = vmatpush2.xpose.msra.mxu0 0.0
  %835 = vmatprep.subr.mxu0 0.0
  %836 = vmatpush2.xpose.msra.mxu0 0.0
  %837 = vmatprep.subr.mxu0 0.0
  %838 = vmatpush2.xpose.msra.mxu0 0.0
  %839 = vmatprep.subr.mxu0 0.0
  %840 = vmatpush2.xpose.msra.mxu0 0.0
  %841 = vmatprep.subr.mxu0 0.0
  %842 = vmatpush2.xpose.msra.mxu0 0.0
  %843 = vmatprep.subr.mxu0 0.0
  %844 = vmatpush2.xpose.msra.mxu0 0.0
  %845 = vmatprep.subr.mxu0 0.0
  %846 = vmatpush2.xpose.msra.mxu0 0.0
  %847 = vmatprep.subr.mxu0 0.0
  %848 = vmatpush2.xpose.msra.mxu0 0.0
  %849 = vmatprep.subr.mxu0 0.0
  %850 = vmatpush2.xpose.msra.mxu0 0.0
  %851 = vmatprep.subr.mxu0 0.0
  %852 = vmatpush2.xpose.msra.mxu0 0.0
  %853 = vmatprep.subr.mxu0 0.0
  %854 = vmatpush2.xpose.msra.mxu0 0.0
  %855 = vmatprep.subr.mxu0 0.0
  %856 = vmatpush2.xpose.msra.mxu0 0.0
  %857 = vmatprep.subr.mxu0 0.0
  %858 = vmatpush2.xpose.msra.mxu0 0.0
  %859 = vmatprep.subr.mxu0 0.0
  %860 = vmatpush2.xpose.msra.mxu0 0.0
  %861 = vmatprep.subr.mxu0 0.0
  %862 = vmatpush2.xpose.msra.mxu0 0.0
  %863 = vmatprep.subr.mxu0 0.0
  %864 = vmatpush2.xpose.msra.mxu0 0.0
  %865 = vmatprep.mubr.f32.mxu0 0.0
  %866 = vmatmul.mubr.f32.gmra.mxu0 %v797
  %v867 = vpop.f32.mrf.mxu0
  %v868 = vadd.f32 0.0, %v867
  %v869 = vpop.f32.mrf.mxu0
  %870 = vdwg.mxu0
  %v871 = vmul.f32 %v868, 0.35355338
  %v872 = vadd.f32 %v871, %v370
  %v873 = vsel %vm291, %v872, -inf
  %874 = vmax.xlane.f32.xlu0 %v873
  %v875 = vpop.xlane.xlu0 %874
  %v876 = vsub.f32 %v872, %v875
  %v877 = vmul.f32 %v876, 1.442695
  %v878 = vpow.pop %v877
  %v879 = vsel %vm291, %v878, 0.0
  %880 = vadd.xlane.f32.xlu0 %v879
  %v881 = vpop.xlane.xlu0 %880
  %v882 = vrcp.pop %v881
  %v883 = vmul.f32 %v878, %v882
  %884 = vrot.lane.b32.xlu0 %v280, 40
  %v885 = vpop.permute.xlu0 %884
  %v888 = vsel %vm291, %v883, 0
  %890 = vmatprep.subr.mxu0 0.0
  %891 = vmatpush1.msra.mxu0 0.0
  %892 = vmatprep.subr.mxu0 0.0
  %893 = vmatpush1.msra.mxu0 0.0
  %894 = vmatprep.subr.mxu0 0.0
  %895 = vmatpush1.msra.mxu0 0.0
  %896 = vmatprep.subr.mxu0 0.0
  %897 = vmatpush1.msra.mxu0 0.0
  %898 = vmatprep.subr.mxu0 0.0
  %899 = vmatpush1.msra.mxu0 0.0
  %900 = vmatprep.subr.mxu0 0.0
  %901 = vmatpush1.msra.mxu0 0.0
  %902 = vmatprep.subr.mxu0 0.0
  %903 = vmatpush1.msra.mxu0 0.0
  %904 = vmatprep.subr.mxu0 0.0
  %905 = vmatpush1.msra.mxu0 0.0
  %906 = vmatprep.subr.mxu0 0.0
  %907 = vmatpush1.msra.mxu0 0.0
  %908 = vmatprep.subr.mxu0 0.0
  %909 = vmatpush1.msra.mxu0 0.0
  %910 = vmatprep.subr.mxu0 0.0
  %911 = vmatpush1.msra.mxu0 0.0
  %912 = vmatprep.subr.mxu0 0.0
  %913 = vmatpush1.msra.mxu0 0.0
  %914 = vmatprep.subr.mxu0 0.0
  %915 = vmatpush1.msra.mxu0 0.0
  %916 = vmatprep.subr.mxu0 0.0
  %917 = vmatpush1.msra.mxu0 0.0
  %918 = vmatprep.subr.mxu0 0.0
  %919 = vmatpush1.msra.mxu0 0.0
  %920 = vmatprep.subr.mxu0 0.0
  %921 = vmatpush1.msra.mxu0 %v885
  %922 = vmatprep.subr.mxu0 0.0
  %923 = vmatpush2.msra.mxu0 0.0
  %924 = vmatprep.subr.mxu0 0.0
  %925 = vmatpush2.msra.mxu0 0.0
  %926 = vmatprep.subr.mxu0 0.0
  %927 = vmatpush2.msra.mxu0 0.0
  %928 = vmatprep.subr.mxu0 0.0
  %929 = vmatpush2.msra.mxu0 0.0
  %930 = vmatprep.subr.mxu0 0.0
  %931 = vmatpush2.msra.mxu0 0.0
  %932 = vmatprep.subr.mxu0 0.0
  %933 = vmatpush2.msra.mxu0 0.0
  %934 = vmatprep.subr.mxu0 0.0
  %935 = vmatpush2.msra.mxu0 0.0
  %936 = vmatprep.subr.mxu0 0.0
  %937 = vmatpush2.msra.mxu0 0.0
  %938 = vmatprep.subr.mxu0 0.0
  %939 = vmatpush2.msra.mxu0 0.0
  %940 = vmatprep.subr.mxu0 0.0
  %941 = vmatpush2.msra.mxu0 0.0
  %942 = vmatprep.subr.mxu0 0.0
  %943 = vmatpush2.msra.mxu0 0.0
  %944 = vmatprep.subr.mxu0 0.0
  %945 = vmatpush2.msra.mxu0 0.0
  %946 = vmatprep.subr.mxu0 0.0
  %947 = vmatpush2.msra.mxu0 0.0
  %948 = vmatprep.subr.mxu0 0.0
  %949 = vmatpush2.msra.mxu0 0.0
  %950 = vmatprep.subr.mxu0 0.0
  %951 = vmatpush2.msra.mxu0 0.0
  %952 = vmatprep.subr.mxu0 0.0
  %953 = vmatpush2.msra.mxu0 0.0
  %954 = vmatprep.mubr.f32.mxu0 0.0
  %955 = vmatmul.mubr.f32.gmra.mxu0 %v888
  %v956 = vpop.f32.mrf.mxu0
  %v957 = vadd.f32 0.0, %v956
  %v958 = vpop.f32.mrf.mxu0
  %959 = vdwg.mxu0
  %961 = vrot.lane.b32.xlu0 %v623, 8
  %v962 = vpop.permute.xlu0 %961
  %965 = vrot.lane.b32.xlu0 %v790, 16
  %v966 = vpop.permute.xlu0 %965
  %969 = vrot.lane.b32.xlu0 %v957, 24
  %v970 = vpop.permute.xlu0 %969
  %v972 = vsel %vm291, %v456, %v962
  %vm973 = vcmask 130048
  %v974 = vsel %vm973, %v972, %v966
  %vm975 = vcmask 195584
  %v976 = vsel %vm975, %v974, %v970
  %978 = vrot.lane.b32.xlu0 %v285, 96
  %v979 = vpop.permute.xlu0 %978
  %v980 = vsel %vm291, %v285, 0
  %v982 = vsel %vm291, %v979, 0
  %984 = vmatprep.subr.mxu0 0.0
  %985 = vmatpush1.xpose.msra.mxu0 0.0
  %986 = vmatprep.subr.mxu0 0.0
  %987 = vmatpush1.xpose.msra.mxu0 0.0
  %988 = vmatprep.subr.mxu0 0.0
  %989 = vmatpush1.xpose.msra.mxu0 0.0
  %990 = vmatprep.subr.mxu0 0.0
  %991 = vmatpush1.xpose.msra.mxu0 0.0
  %992 = vmatprep.subr.mxu0 0.0
  %993 = vmatpush1.xpose.msra.mxu0 0.0
  %994 = vmatprep.subr.mxu0 0.0
  %995 = vmatpush1.xpose.msra.mxu0 0.0
  %996 = vmatprep.subr.mxu0 0.0
  %997 = vmatpush1.xpose.msra.mxu0 0.0
  %998 = vmatprep.subr.mxu0 0.0
  %999 = vmatpush1.xpose.msra.mxu0 0.0
  %1000 = vmatprep.subr.mxu0 0.0
  %1001 = vmatpush1.xpose.msra.mxu0 0.0
  %1002 = vmatprep.subr.mxu0 0.0
  %1003 = vmatpush1.xpose.msra.mxu0 0.0
  %1004 = vmatprep.subr.mxu0 0.0
  %1005 = vmatpush1.xpose.msra.mxu0 0.0
  %1006 = vmatprep.subr.mxu0 0.0
  %1007 = vmatpush1.xpose.msra.mxu0 0.0
  %1008 = vmatprep.subr.mxu0 0.0
  %1009 = vmatpush1.xpose.msra.mxu0 0.0
  %1010 = vmatprep.subr.mxu0 0.0
  %1011 = vmatpush1.xpose.msra.mxu0 0.0
  %1012 = vmatprep.subr.mxu0 0.0
  %1013 = vmatpush1.xpose.msra.mxu0 0.0
  %1014 = vmatprep.subr.mxu0 0.0
  %1015 = vmatpush1.xpose.msra.mxu0 %v982
  %1016 = vmatprep.subr.mxu0 0.0
  %1017 = vmatpush2.xpose.msra.mxu0 0.0
  %1018 = vmatprep.subr.mxu0 0.0
  %1019 = vmatpush2.xpose.msra.mxu0 0.0
  %1020 = vmatprep.subr.mxu0 0.0
  %1021 = vmatpush2.xpose.msra.mxu0 0.0
  %1022 = vmatprep.subr.mxu0 0.0
  %1023 = vmatpush2.xpose.msra.mxu0 0.0
  %1024 = vmatprep.subr.mxu0 0.0
  %1025 = vmatpush2.xpose.msra.mxu0 0.0
  %1026 = vmatprep.subr.mxu0 0.0
  %1027 = vmatpush2.xpose.msra.mxu0 0.0
  %1028 = vmatprep.subr.mxu0 0.0
  %1029 = vmatpush2.xpose.msra.mxu0 0.0
  %1030 = vmatprep.subr.mxu0 0.0
  %1031 = vmatpush2.xpose.msra.mxu0 0.0
  %1032 = vmatprep.subr.mxu0 0.0
  %1033 = vmatpush2.xpose.msra.mxu0 0.0
  %1034 = vmatprep.subr.mxu0 0.0
  %1035 = vmatpush2.xpose.msra.mxu0 0.0
  %1036 = vmatprep.subr.mxu0 0.0
  %1037 = vmatpush2.xpose.msra.mxu0 0.0
  %1038 = vmatprep.subr.mxu0 0.0
  %1039 = vmatpush2.xpose.msra.mxu0 0.0
  %1040 = vmatprep.subr.mxu0 0.0
  %1041 = vmatpush2.xpose.msra.mxu0 0.0
  %1042 = vmatprep.subr.mxu0 0.0
  %1043 = vmatpush2.xpose.msra.mxu0 0.0
  %1044 = vmatprep.subr.mxu0 0.0
  %1045 = vmatpush2.xpose.msra.mxu0 0.0
  %1046 = vmatprep.subr.mxu0 0.0
  %1047 = vmatpush2.xpose.msra.mxu0 0.0
  %1048 = vmatprep.mubr.f32.mxu0 0.0
  %1049 = vmatmul.mubr.f32.gmra.mxu0 %v980
  %v1050 = vpop.f32.mrf.mxu0
  %v1051 = vadd.f32 0.0, %v1050
  %v1052 = vpop.f32.mrf.mxu0
  %1053 = vdwg.mxu0
  %v1054 = vmul.f32 %v1051, 0.35355338
  %v1055 = vlaneseq
  %v1056 = vshrl.u32 %v1055, 7
  %v1057 = vsub.s32 0, %v1056
  %v1058 = vrot.slane %v195, %v1057
  %v1059 = vadd.f32 %v1054, %v1058
  %v1060 = vsel %vm291, %v1059, -inf
  %1061 = vmax.xlane.f32.xlu0 %v1060
  %v1062 = vpop.xlane.xlu0 %1061
  %v1063 = vsub.f32 %v1059, %v1062
  %v1064 = vmul.f32 %v1063, 1.442695
  %v1065 = vpow.pop %v1064
  %v1066 = vsel %vm291, %v1065, 0.0
  %1067 = vadd.xlane.f32.xlu0 %v1066
  %v1068 = vpop.xlane.xlu0 %1067
  %v1069 = vrcp.pop %v1068
  %v1070 = vmul.f32 %v1065, %v1069
  %1071 = vrot.lane.b32.xlu0 %v285, 64
  %v1072 = vpop.permute.xlu0 %1071
  %v1075 = vsel %vm291, %v1070, 0
  %1077 = vmatprep.subr.mxu0 0.0
  %1078 = vmatpush1.msra.mxu0 0.0
  %1079 = vmatprep.subr.mxu0 0.0
  %1080 = vmatpush1.msra.mxu0 0.0
  %1081 = vmatprep.subr.mxu0 0.0
  %1082 = vmatpush1.msra.mxu0 0.0
  %1083 = vmatprep.subr.mxu0 0.0
  %1084 = vmatpush1.msra.mxu0 0.0
  %1085 = vmatprep.subr.mxu0 0.0
  %1086 = vmatpush1.msra.mxu0 0.0
  %1087 = vmatprep.subr.mxu0 0.0
  %1088 = vmatpush1.msra.mxu0 0.0
  %1089 = vmatprep.subr.mxu0 0.0
  %1090 = vmatpush1.msra.mxu0 0.0
  %1091 = vmatprep.subr.mxu0 0.0
  %1092 = vmatpush1.msra.mxu0 0.0
  %1093 = vmatprep.subr.mxu0 0.0
  %1094 = vmatpush1.msra.mxu0 0.0
  %1095 = vmatprep.subr.mxu0 0.0
  %1096 = vmatpush1.msra.mxu0 0.0
  %1097 = vmatprep.subr.mxu0 0.0
  %1098 = vmatpush1.msra.mxu0 0.0
  %1099 = vmatprep.subr.mxu0 0.0
  %1100 = vmatpush1.msra.mxu0 0.0
  %1101 = vmatprep.subr.mxu0 0.0
  %1102 = vmatpush1.msra.mxu0 0.0
  %1103 = vmatprep.subr.mxu0 0.0
  %1104 = vmatpush1.msra.mxu0 0.0
  %1105 = vmatprep.subr.mxu0 0.0
  %1106 = vmatpush1.msra.mxu0 0.0
  %1107 = vmatprep.subr.mxu0 0.0
  %1108 = vmatpush1.msra.mxu0 %v1072
  %1109 = vmatprep.subr.mxu0 0.0
  %1110 = vmatpush2.msra.mxu0 0.0
  %1111 = vmatprep.subr.mxu0 0.0
  %1112 = vmatpush2.msra.mxu0 0.0
  %1113 = vmatprep.subr.mxu0 0.0
  %1114 = vmatpush2.msra.mxu0 0.0
  %1115 = vmatprep.subr.mxu0 0.0
  %1116 = vmatpush2.msra.mxu0 0.0
  %1117 = vmatprep.subr.mxu0 0.0
  %1118 = vmatpush2.msra.mxu0 0.0
  %1119 = vmatprep.subr.mxu0 0.0
  %1120 = vmatpush2.msra.mxu0 0.0
  %1121 = vmatprep.subr.mxu0 0.0
  %1122 = vmatpush2.msra.mxu0 0.0
  %1123 = vmatprep.subr.mxu0 0.0
  %1124 = vmatpush2.msra.mxu0 0.0
  %1125 = vmatprep.subr.mxu0 0.0
  %1126 = vmatpush2.msra.mxu0 0.0
  %1127 = vmatprep.subr.mxu0 0.0
  %1128 = vmatpush2.msra.mxu0 0.0
  %1129 = vmatprep.subr.mxu0 0.0
  %1130 = vmatpush2.msra.mxu0 0.0
  %1131 = vmatprep.subr.mxu0 0.0
  %1132 = vmatpush2.msra.mxu0 0.0
  %1133 = vmatprep.subr.mxu0 0.0
  %1134 = vmatpush2.msra.mxu0 0.0
  %1135 = vmatprep.subr.mxu0 0.0
  %1136 = vmatpush2.msra.mxu0 0.0
  %1137 = vmatprep.subr.mxu0 0.0
  %1138 = vmatpush2.msra.mxu0 0.0
  %1139 = vmatprep.subr.mxu0 0.0
  %1140 = vmatpush2.msra.mxu0 0.0
  %1141 = vmatprep.mubr.f32.mxu0 0.0
  %1142 = vmatmul.mubr.f32.gmra.mxu0 %v1075
  %v1143 = vpop.f32.mrf.mxu0
  %v1144 = vadd.f32 0.0, %v1143
  %v1145 = vpop.f32.mrf.mxu0
  %1146 = vdwg.mxu0
  %1147 = vrot.lane.b32.xlu0 %v285, 120
  %v1148 = vpop.permute.xlu0 %1147
  %1149 = vrot.lane.b32.xlu0 %v285, 88
  %v1150 = vpop.permute.xlu0 %1149
  %v1151 = vsel %vm291, %v1148, 0
  %v1153 = vsel %vm291, %v1150, 0
  %1155 = vmatprep.subr.mxu0 0.0
  %1156 = vmatpush1.xpose.msra.mxu0 0.0
  %1157 = vmatprep.subr.mxu0 0.0
  %1158 = vmatpush1.xpose.msra.mxu0 0.0
  %1159 = vmatprep.subr.mxu0 0.0
  %1160 = vmatpush1.xpose.msra.mxu0 0.0
  %1161 = vmatprep.subr.mxu0 0.0
  %1162 = vmatpush1.xpose.msra.mxu0 0.0
  %1163 = vmatprep.subr.mxu0 0.0
  %1164 = vmatpush1.xpose.msra.mxu0 0.0
  %1165 = vmatprep.subr.mxu0 0.0
  %1166 = vmatpush1.xpose.msra.mxu0 0.0
  %1167 = vmatprep.subr.mxu0 0.0
  %1168 = vmatpush1.xpose.msra.mxu0 0.0
  %1169 = vmatprep.subr.mxu0 0.0
  %1170 = vmatpush1.xpose.msra.mxu0 0.0
  %1171 = vmatprep.subr.mxu0 0.0
  %1172 = vmatpush1.xpose.msra.mxu0 0.0
  %1173 = vmatprep.subr.mxu0 0.0
  %1174 = vmatpush1.xpose.msra.mxu0 0.0
  %1175 = vmatprep.subr.mxu0 0.0
  %1176 = vmatpush1.xpose.msra.mxu0 0.0
  %1177 = vmatprep.subr.mxu0 0.0
  %1178 = vmatpush1.xpose.msra.mxu0 0.0
  %1179 = vmatprep.subr.mxu0 0.0
  %1180 = vmatpush1.xpose.msra.mxu0 0.0
  %1181 = vmatprep.subr.mxu0 0.0
  %1182 = vmatpush1.xpose.msra.mxu0 0.0
  %1183 = vmatprep.subr.mxu0 0.0
  %1184 = vmatpush1.xpose.msra.mxu0 0.0
  %1185 = vmatprep.subr.mxu0 0.0
  %1186 = vmatpush1.xpose.msra.mxu0 %v1153
  %1187 = vmatprep.subr.mxu0 0.0
  %1188 = vmatpush2.xpose.msra.mxu0 0.0
  %1189 = vmatprep.subr.mxu0 0.0
  %1190 = vmatpush2.xpose.msra.mxu0 0.0
  %1191 = vmatprep.subr.mxu0 0.0
  %1192 = vmatpush2.xpose.msra.mxu0 0.0
  %1193 = vmatprep.subr.mxu0 0.0
  %1194 = vmatpush2.xpose.msra.mxu0 0.0
  %1195 = vmatprep.subr.mxu0 0.0
  %1196 = vmatpush2.xpose.msra.mxu0 0.0
  %1197 = vmatprep.subr.mxu0 0.0
  %1198 = vmatpush2.xpose.msra.mxu0 0.0
  %1199 = vmatprep.subr.mxu0 0.0
  %1200 = vmatpush2.xpose.msra.mxu0 0.0
  %1201 = vmatprep.subr.mxu0 0.0
  %1202 = vmatpush2.xpose.msra.mxu0 0.0
  %1203 = vmatprep.subr.mxu0 0.0
  %1204 = vmatpush2.xpose.msra.mxu0 0.0
  %1205 = vmatprep.subr.mxu0 0.0
  %1206 = vmatpush2.xpose.msra.mxu0 0.0
  %1207 = vmatprep.subr.mxu0 0.0
  %1208 = vmatpush2.xpose.msra.mxu0 0.0
  %1209 = vmatprep.subr.mxu0 0.0
  %1210 = vmatpush2.xpose.msra.mxu0 0.0
  %1211 = vmatprep.subr.mxu0 0.0
  %1212 = vmatpush2.xpose.msra.mxu0 0.0
  %1213 = vmatprep.subr.mxu0 0.0
  %1214 = vmatpush2.xpose.msra.mxu0 0.0
  %1215 = vmatprep.subr.mxu0 0.0
  %1216 = vmatpush2.xpose.msra.mxu0 0.0
  %1217 = vmatprep.subr.mxu0 0.0
  %1218 = vmatpush2.xpose.msra.mxu0 0.0
  %1219 = vmatprep.mubr.f32.mxu0 0.0
  %1220 = vmatmul.mubr.f32.gmra.mxu0 %v1151
  %v1221 = vpop.f32.mrf.mxu0
  %v1222 = vadd.f32 0.0, %v1221
  %v1223 = vpop.f32.mrf.mxu0
  %1224 = vdwg.mxu0
  %v1225 = vmul.f32 %v1222, 0.35355338
  %v1226 = vadd.f32 %v1225, %v1058
  %v1227 = vsel %vm291, %v1226, -inf
  %1228 = vmax.xlane.f32.xlu0 %v1227
  %v1229 = vpop.xlane.xlu0 %1228
  %v1230 = vsub.f32 %v1226, %v1229
  %v1231 = vmul.f32 %v1230, 1.442695
  %v1232 = vpow.pop %v1231
  %v1233 = vsel %vm291, %v1232, 0.0
  %1234 = vadd.xlane.f32.xlu0 %v1233
  %v1235 = vpop.xlane.xlu0 %1234
  %v1236 = vrcp.pop %v1235
  %v1237 = vmul.f32 %v1232, %v1236
  %1238 = vrot.lane.b32.xlu0 %v285, 56
  %v1239 = vpop.permute.xlu0 %1238
  %v1242 = vsel %vm291, %v1237, 0
  %1244 = vmatprep.subr.mxu0 0.0
  %1245 = vmatpush1.msra.mxu0 0.0
  %1246 = vmatprep.subr.mxu0 0.0
  %1247 = vmatpush1.msra.mxu0 0.0
  %1248 = vmatprep.subr.mxu0 0.0
  %1249 = vmatpush1.msra.mxu0 0.0
  %1250 = vmatprep.subr.mxu0 0.0
  %1251 = vmatpush1.msra.mxu0 0.0
  %1252 = vmatprep.subr.mxu0 0.0
  %1253 = vmatpush1.msra.mxu0 0.0
  %1254 = vmatprep.subr.mxu0 0.0
  %1255 = vmatpush1.msra.mxu0 0.0
  %1256 = vmatprep.subr.mxu0 0.0
  %1257 = vmatpush1.msra.mxu0 0.0
  %1258 = vmatprep.subr.mxu0 0.0
  %1259 = vmatpush1.msra.mxu0 0.0
  %1260 = vmatprep.subr.mxu0 0.0
  %1261 = vmatpush1.msra.mxu0 0.0
  %1262 = vmatprep.subr.mxu0 0.0
  %1263 = vmatpush1.msra.mxu0 0.0
  %1264 = vmatprep.subr.mxu0 0.0
  %1265 = vmatpush1.msra.mxu0 0.0
  %1266 = vmatprep.subr.mxu0 0.0
  %1267 = vmatpush1.msra.mxu0 0.0
  %1268 = vmatprep.subr.mxu0 0.0
  %1269 = vmatpush1.msra.mxu0 0.0
  %1270 = vmatprep.subr.mxu0 0.0
  %1271 = vmatpush1.msra.mxu0 0.0
  %1272 = vmatprep.subr.mxu0 0.0
  %1273 = vmatpush1.msra.mxu0 0.0
  %1274 = vmatprep.subr.mxu0 0.0
  %1275 = vmatpush1.msra.mxu0 %v1239
  %1276 = vmatprep.subr.mxu0 0.0
  %1277 = vmatpush2.msra.mxu0 0.0
  %1278 = vmatprep.subr.mxu0 0.0
  %1279 = vmatpush2.msra.mxu0 0.0
  %1280 = vmatprep.subr.mxu0 0.0
  %1281 = vmatpush2.msra.mxu0 0.0
  %1282 = vmatprep.subr.mxu0 0.0
  %1283 = vmatpush2.msra.mxu0 0.0
  %1284 = vmatprep.subr.mxu0 0.0
  %1285 = vmatpush2.msra.mxu0 0.0
  %1286 = vmatprep.subr.mxu0 0.0
  %1287 = vmatpush2.msra.mxu0 0.0
  %1288 = vmatprep.subr.mxu0 0.0
  %1289 = vmatpush2.msra.mxu0 0.0
  %1290 = vmatprep.subr.mxu0 0.0
  %1291 = vmatpush2.msra.mxu0 0.0
  %1292 = vmatprep.subr.mxu0 0.0
  %1293 = vmatpush2.msra.mxu0 0.0
  %1294 = vmatprep.subr.mxu0 0.0
  %1295 = vmatpush2.msra.mxu0 0.0
  %1296 = vmatprep.subr.mxu0 0.0
  %1297 = vmatpush2.msra.mxu0 0.0
  %1298 = vmatprep.subr.mxu0 0.0
  %1299 = vmatpush2.msra.mxu0 0.0
  %1300 = vmatprep.subr.mxu0 0.0
  %1301 = vmatpush2.msra.mxu0 0.0
  %1302 = vmatprep.subr.mxu0 0.0
  %1303 = vmatpush2.msra.mxu0 0.0
  %1304 = vmatprep.subr.mxu0 0.0
  %1305 = vmatpush2.msra.mxu0 0.0
  %1306 = vmatprep.subr.mxu0 0.0
  %1307 = vmatpush2.msra.mxu0 0.0
  %1308 = vmatprep.mubr.f32.mxu0 0.0
  %1309 = vmatmul.mubr.f32.gmra.mxu0 %v1242
  %v1310 = vpop.f32.mrf.mxu0
  %v1311 = vadd.f32 0.0, %v1310
  %v1312 = vpop.f32.mrf.mxu0
  %1313 = vdwg.mxu0
  %1314 = vrot.lane.b32.xlu0 %v285, 112
  %v1315 = vpop.permute.xlu0 %1314
  %1316 = vrot.lane.b32.xlu0 %v285, 80
  %v1317 = vpop.permute.xlu0 %1316
  %v1318 = vsel %vm291, %v1315, 0
  %v1320 = vsel %vm291, %v1317, 0
  %1322 = vmatprep.subr.mxu0 0.0
  %1323 = vmatpush1.xpose.msra.mxu0 0.0
  %1324 = vmatprep.subr.mxu0 0.0
  %1325 = vmatpush1.xpose.msra.mxu0 0.0
  %1326 = vmatprep.subr.mxu0 0.0
  %1327 = vmatpush1.xpose.msra.mxu0 0.0
  %1328 = vmatprep.subr.mxu0 0.0
  %1329 = vmatpush1.xpose.msra.mxu0 0.0
  %1330 = vmatprep.subr.mxu0 0.0
  %1331 = vmatpush1.xpose.msra.mxu0 0.0
  %1332 = vmatprep.subr.mxu0 0.0
  %1333 = vmatpush1.xpose.msra.mxu0 0.0
  %1334 = vmatprep.subr.mxu0 0.0
  %1335 = vmatpush1.xpose.msra.mxu0 0.0
  %1336 = vmatprep.subr.mxu0 0.0
  %1337 = vmatpush1.xpose.msra.mxu0 0.0
  %1338 = vmatprep.subr.mxu0 0.0
  %1339 = vmatpush1.xpose.msra.mxu0 0.0
  %1340 = vmatprep.subr.mxu0 0.0
  %1341 = vmatpush1.xpose.msra.mxu0 0.0
  %1342 = vmatprep.subr.mxu0 0.0
  %1343 = vmatpush1.xpose.msra.mxu0 0.0
  %1344 = vmatprep.subr.mxu0 0.0
  %1345 = vmatpush1.xpose.msra.mxu0 0.0
  %1346 = vmatprep.subr.mxu0 0.0
  %1347 = vmatpush1.xpose.msra.mxu0 0.0
  %1348 = vmatprep.subr.mxu0 0.0
  %1349 = vmatpush1.xpose.msra.mxu0 0.0
  %1350 = vmatprep.subr.mxu0 0.0
  %1351 = vmatpush1.xpose.msra.mxu0 0.0
  %1352 = vmatprep.subr.mxu0 0.0
  %1353 = vmatpush1.xpose.msra.mxu0 %v1320
  %1354 = vmatprep.subr.mxu0 0.0
  %1355 = vmatpush2.xpose.msra.mxu0 0.0
  %1356 = vmatprep.subr.mxu0 0.0
  %1357 = vmatpush2.xpose.msra.mxu0 0.0
  %1358 = vmatprep.subr.mxu0 0.0
  %1359 = vmatpush2.xpose.msra.mxu0 0.0
  %1360 = vmatprep.subr.mxu0 0.0
  %1361 = vmatpush2.xpose.msra.mxu0 0.0
  %1362 = vmatprep.subr.mxu0 0.0
  %1363 = vmatpush2.xpose.msra.mxu0 0.0
  %1364 = vmatprep.subr.mxu0 0.0
  %1365 = vmatpush2.xpose.msra.mxu0 0.0
  %1366 = vmatprep.subr.mxu0 0.0
  %1367 = vmatpush2.xpose.msra.mxu0 0.0
  %1368 = vmatprep.subr.mxu0 0.0
  %1369 = vmatpush2.xpose.msra.mxu0 0.0
  %1370 = vmatprep.subr.mxu0 0.0
  %1371 = vmatpush2.xpose.msra.mxu0 0.0
  %1372 = vmatprep.subr.mxu0 0.0
  %1373 = vmatpush2.xpose.msra.mxu0 0.0
  %1374 = vmatprep.subr.mxu0 0.0
  %1375 = vmatpush2.xpose.msra.mxu0 0.0
  %1376 = vmatprep.subr.mxu0 0.0
  %1377 = vmatpush2.xpose.msra.mxu0 0.0
  %1378 = vmatprep.subr.mxu0 0.0
  %1379 = vmatpush2.xpose.msra.mxu0 0.0
  %1380 = vmatprep.subr.mxu0 0.0
  %1381 = vmatpush2.xpose.msra.mxu0 0.0
  %1382 = vmatprep.subr.mxu0 0.0
  %1383 = vmatpush2.xpose.msra.mxu0 0.0
  %1384 = vmatprep.subr.mxu0 0.0
  %1385 = vmatpush2.xpose.msra.mxu0 0.0
  %1386 = vmatprep.mubr.f32.mxu0 0.0
  %1387 = vmatmul.mubr.f32.gmra.mxu0 %v1318
  %v1388 = vpop.f32.mrf.mxu0
  %v1389 = vadd.f32 0.0, %v1388
  %v1390 = vpop.f32.mrf.mxu0
  %1391 = vdwg.mxu0
  %v1392 = vmul.f32 %v1389, 0.35355338
  %v1393 = vadd.f32 %v1392, %v1058
  %v1394 = vsel %vm291, %v1393, -inf
  %1395 = vmax.xlane.f32.xlu0 %v1394
  %v1396 = vpop.xlane.xlu0 %1395
  %v1397 = vsub.f32 %v1393, %v1396
  %v1398 = vmul.f32 %v1397, 1.442695
  %v1399 = vpow.pop %v1398
  %v1400 = vsel %vm291, %v1399, 0.0
  %1401 = vadd.xlane.f32.xlu0 %v1400
  %v1402 = vpop.xlane.xlu0 %1401
  %v1403 = vrcp.pop %v1402
  %v1404 = vmul.f32 %v1399, %v1403
  %1405 = vrot.lane.b32.xlu0 %v285, 48
  %v1406 = vpop.permute.xlu0 %1405
  %v1409 = vsel %vm291, %v1404, 0
  %1411 = vmatprep.subr.mxu0 0.0
  %1412 = vmatpush1.msra.mxu0 0.0
  %1413 = vmatprep.subr.mxu0 0.0
  %1414 = vmatpush1.msra.mxu0 0.0
  %1415 = vmatprep.subr.mxu0 0.0
  %1416 = vmatpush1.msra.mxu0 0.0
  %1417 = vmatprep.subr.mxu0 0.0
  %1418 = vmatpush1.msra.mxu0 0.0
  %1419 = vmatprep.subr.mxu0 0.0
  %1420 = vmatpush1.msra.mxu0 0.0
  %1421 = vmatprep.subr.mxu0 0.0
  %1422 = vmatpush1.msra.mxu0 0.0
  %1423 = vmatprep.subr.mxu0 0.0
  %1424 = vmatpush1.msra.mxu0 0.0
  %1425 = vmatprep.subr.mxu0 0.0
  %1426 = vmatpush1.msra.mxu0 0.0
  %1427 = vmatprep.subr.mxu0 0.0
  %1428 = vmatpush1.msra.mxu0 0.0
  %1429 = vmatprep.subr.mxu0 0.0
  %1430 = vmatpush1.msra.mxu0 0.0
  %1431 = vmatprep.subr.mxu0 0.0
  %1432 = vmatpush1.msra.mxu0 0.0
  %1433 = vmatprep.subr.mxu0 0.0
  %1434 = vmatpush1.msra.mxu0 0.0
  %1435 = vmatprep.subr.mxu0 0.0
  %1436 = vmatpush1.msra.mxu0 0.0
  %1437 = vmatprep.subr.mxu0 0.0
  %1438 = vmatpush1.msra.mxu0 0.0
  %1439 = vmatprep.subr.mxu0 0.0
  %1440 = vmatpush1.msra.mxu0 0.0
  %1441 = vmatprep.subr.mxu0 0.0
  %1442 = vmatpush1.msra.mxu0 %v1406
  %1443 = vmatprep.subr.mxu0 0.0
  %1444 = vmatpush2.msra.mxu0 0.0
  %1445 = vmatprep.subr.mxu0 0.0
  %1446 = vmatpush2.msra.mxu0 0.0
  %1447 = vmatprep.subr.mxu0 0.0
  %1448 = vmatpush2.msra.mxu0 0.0
  %1449 = vmatprep.subr.mxu0 0.0
  %1450 = vmatpush2.msra.mxu0 0.0
  %1451 = vmatprep.subr.mxu0 0.0
  %1452 = vmatpush2.msra.mxu0 0.0
  %1453 = vmatprep.subr.mxu0 0.0
  %1454 = vmatpush2.msra.mxu0 0.0
  %1455 = vmatprep.subr.mxu0 0.0
  %1456 = vmatpush2.msra.mxu0 0.0
  %1457 = vmatprep.subr.mxu0 0.0
  %1458 = vmatpush2.msra.mxu0 0.0
  %1459 = vmatprep.subr.mxu0 0.0
  %1460 = vmatpush2.msra.mxu0 0.0
  %1461 = vmatprep.subr.mxu0 0.0
  %1462 = vmatpush2.msra.mxu0 0.0
  %1463 = vmatprep.subr.mxu0 0.0
  %1464 = vmatpush2.msra.mxu0 0.0
  %1465 = vmatprep.subr.mxu0 0.0
  %1466 = vmatpush2.msra.mxu0 0.0
  %1467 = vmatprep.subr.mxu0 0.0
  %1468 = vmatpush2.msra.mxu0 0.0
  %1469 = vmatprep.subr.mxu0 0.0
  %1470 = vmatpush2.msra.mxu0 0.0
  %1471 = vmatprep.subr.mxu0 0.0
  %1472 = vmatpush2.msra.mxu0 0.0
  %1473 = vmatprep.subr.mxu0 0.0
  %1474 = vmatpush2.msra.mxu0 0.0
  %1475 = vmatprep.mubr.f32.mxu0 0.0
  %1476 = vmatmul.mubr.f32.gmra.mxu0 %v1409
  %v1477 = vpop.f32.mrf.mxu0
  %v1478 = vadd.f32 0.0, %v1477
  %v1479 = vpop.f32.mrf.mxu0
  %1480 = vdwg.mxu0
  %1481 = vrot.lane.b32.xlu0 %v285, 104
  %v1482 = vpop.permute.xlu0 %1481
  %1483 = vrot.lane.b32.xlu0 %v285, 72
  %v1484 = vpop.permute.xlu0 %1483
  %v1485 = vsel %vm291, %v1482, 0
  %v1487 = vsel %vm291, %v1484, 0
  %1489 = vmatprep.subr.mxu0 0.0
  %1490 = vmatpush1.xpose.msra.mxu0 0.0
  %1491 = vmatprep.subr.mxu0 0.0
  %1492 = vmatpush1.xpose.msra.mxu0 0.0
  %1493 = vmatprep.subr.mxu0 0.0
  %1494 = vmatpush1.xpose.msra.mxu0 0.0
  %1495 = vmatprep.subr.mxu0 0.0
  %1496 = vmatpush1.xpose.msra.mxu0 0.0
  %1497 = vmatprep.subr.mxu0 0.0
  %1498 = vmatpush1.xpose.msra.mxu0 0.0
  %1499 = vmatprep.subr.mxu0 0.0
  %1500 = vmatpush1.xpose.msra.mxu0 0.0
  %1501 = vmatprep.subr.mxu0 0.0
  %1502 = vmatpush1.xpose.msra.mxu0 0.0
  %1503 = vmatprep.subr.mxu0 0.0
  %1504 = vmatpush1.xpose.msra.mxu0 0.0
  %1505 = vmatprep.subr.mxu0 0.0
  %1506 = vmatpush1.xpose.msra.mxu0 0.0
  %1507 = vmatprep.subr.mxu0 0.0
  %1508 = vmatpush1.xpose.msra.mxu0 0.0
  %1509 = vmatprep.subr.mxu0 0.0
  %1510 = vmatpush1.xpose.msra.mxu0 0.0
  %1511 = vmatprep.subr.mxu0 0.0
  %1512 = vmatpush1.xpose.msra.mxu0 0.0
  %1513 = vmatprep.subr.mxu0 0.0
  %1514 = vmatpush1.xpose.msra.mxu0 0.0
  %1515 = vmatprep.subr.mxu0 0.0
  %1516 = vmatpush1.xpose.msra.mxu0 0.0
  %1517 = vmatprep.subr.mxu0 0.0
  %1518 = vmatpush1.xpose.msra.mxu0 0.0
  %1519 = vmatprep.subr.mxu0 0.0
  %1520 = vmatpush1.xpose.msra.mxu0 %v1487
  %1521 = vmatprep.subr.mxu0 0.0
  %1522 = vmatpush2.xpose.msra.mxu0 0.0
  %1523 = vmatprep.subr.mxu0 0.0
  %1524 = vmatpush2.xpose.msra.mxu0 0.0
  %1525 = vmatprep.subr.mxu0 0.0
  %1526 = vmatpush2.xpose.msra.mxu0 0.0
  %1527 = vmatprep.subr.mxu0 0.0
  %1528 = vmatpush2.xpose.msra.mxu0 0.0
  %1529 = vmatprep.subr.mxu0 0.0
  %1530 = vmatpush2.xpose.msra.mxu0 0.0
  %1531 = vmatprep.subr.mxu0 0.0
  %1532 = vmatpush2.xpose.msra.mxu0 0.0
  %1533 = vmatprep.subr.mxu0 0.0
  %1534 = vmatpush2.xpose.msra.mxu0 0.0
  %1535 = vmatprep.subr.mxu0 0.0
  %1536 = vmatpush2.xpose.msra.mxu0 0.0
  %1537 = vmatprep.subr.mxu0 0.0
  %1538 = vmatpush2.xpose.msra.mxu0 0.0
  %1539 = vmatprep.subr.mxu0 0.0
  %1540 = vmatpush2.xpose.msra.mxu0 0.0
  %1541 = vmatprep.subr.mxu0 0.0
  %1542 = vmatpush2.xpose.msra.mxu0 0.0
  %1543 = vmatprep.subr.mxu0 0.0
  %1544 = vmatpush2.xpose.msra.mxu0 0.0
  %1545 = vmatprep.subr.mxu0 0.0
  %1546 = vmatpush2.xpose.msra.mxu0 0.0
  %1547 = vmatprep.subr.mxu0 0.0
  %1548 = vmatpush2.xpose.msra.mxu0 0.0
  %1549 = vmatprep.subr.mxu0 0.0
  %1550 = vmatpush2.xpose.msra.mxu0 0.0
  %1551 = vmatprep.subr.mxu0 0.0
  %1552 = vmatpush2.xpose.msra.mxu0 0.0
  %1553 = vmatprep.mubr.f32.mxu0 0.0
  %1554 = vmatmul.mubr.f32.gmra.mxu0 %v1485
  %v1555 = vpop.f32.mrf.mxu0
  %v1556 = vadd.f32 0.0, %v1555
  %v1557 = vpop.f32.mrf.mxu0
  %1558 = vdwg.mxu0
  %v1559 = vmul.f32 %v1556, 0.35355338
  %v1560 = vadd.f32 %v1559, %v1058
  %v1561 = vsel %vm291, %v1560, -inf
  %1562 = vmax.xlane.f32.xlu0 %v1561
  %v1563 = vpop.xlane.xlu0 %1562
  %v1564 = vsub.f32 %v1560, %v1563
  %v1565 = vmul.f32 %v1564, 1.442695
  %v1566 = vpow.pop %v1565
  %v1567 = vsel %vm291, %v1566, 0.0
  %1568 = vadd.xlane.f32.xlu0 %v1567
  %v1569 = vpop.xlane.xlu0 %1568
  %v1570 = vrcp.pop %v1569
  %v1571 = vmul.f32 %v1566, %v1570
  %1572 = vrot.lane.b32.xlu0 %v285, 40
  %v1573 = vpop.permute.xlu0 %1572
  %v1576 = vsel %vm291, %v1571, 0
  %1578 = vmatprep.subr.mxu0 0.0
  %1579 = vmatpush1.msra.mxu0 0.0
  %1580 = vmatprep.subr.mxu0 0.0
  %1581 = vmatpush1.msra.mxu0 0.0
  %1582 = vmatprep.subr.mxu0 0.0
  %1583 = vmatpush1.msra.mxu0 0.0
  %1584 = vmatprep.subr.mxu0 0.0
  %1585 = vmatpush1.msra.mxu0 0.0
  %1586 = vmatprep.subr.mxu0 0.0
  %1587 = vmatpush1.msra.mxu0 0.0
  %1588 = vmatprep.subr.mxu0 0.0
  %1589 = vmatpush1.msra.mxu0 0.0
  %1590 = vmatprep.subr.mxu0 0.0
  %1591 = vmatpush1.msra.mxu0 0.0
  %1592 = vmatprep.subr.mxu0 0.0
  %1593 = vmatpush1.msra.mxu0 0.0
  %1594 = vmatprep.subr.mxu0 0.0
  %1595 = vmatpush1.msra.mxu0 0.0
  %1596 = vmatprep.subr.mxu0 0.0
  %1597 = vmatpush1.msra.mxu0 0.0
  %1598 = vmatprep.subr.mxu0 0.0
  %1599 = vmatpush1.msra.mxu0 0.0
  %1600 = vmatprep.subr.mxu0 0.0
  %1601 = vmatpush1.msra.mxu0 0.0
  %1602 = vmatprep.subr.mxu0 0.0
  %1603 = vmatpush1.msra.mxu0 0.0
  %1604 = vmatprep.subr.mxu0 0.0
  %1605 = vmatpush1.msra.mxu0 0.0
  %1606 = vmatprep.subr.mxu0 0.0
  %1607 = vmatpush1.msra.mxu0 0.0
  %1608 = vmatprep.subr.mxu0 0.0
  %1609 = vmatpush1.msra.mxu0 %v1573
  %1610 = vmatprep.subr.mxu0 0.0
  %1611 = vmatpush2.msra.mxu0 0.0
  %1612 = vmatprep.subr.mxu0 0.0
  %1613 = vmatpush2.msra.mxu0 0.0
  %1614 = vmatprep.subr.mxu0 0.0
  %1615 = vmatpush2.msra.mxu0 0.0
  %1616 = vmatprep.subr.mxu0 0.0
  %1617 = vmatpush2.msra.mxu0 0.0
  %1618 = vmatprep.subr.mxu0 0.0
  %1619 = vmatpush2.msra.mxu0 0.0
  %1620 = vmatprep.subr.mxu0 0.0
  %1621 = vmatpush2.msra.mxu0 0.0
  %1622 = vmatprep.subr.mxu0 0.0
  %1623 = vmatpush2.msra.mxu0 0.0
  %1624 = vmatprep.subr.mxu0 0.0
  %1625 = vmatpush2.msra.mxu0 0.0
  %1626 = vmatprep.subr.mxu0 0.0
  %1627 = vmatpush2.msra.mxu0 0.0
  %1628 = vmatprep.subr.mxu0 0.0
  %1629 = vmatpush2.msra.mxu0 0.0
  %1630 = vmatprep.subr.mxu0 0.0
  %1631 = vmatpush2.msra.mxu0 0.0
  %1632 = vmatprep.subr.mxu0 0.0
  %1633 = vmatpush2.msra.mxu0 0.0
  %1634 = vmatprep.subr.mxu0 0.0
  %1635 = vmatpush2.msra.mxu0 0.0
  %1636 = vmatprep.subr.mxu0 0.0
  %1637 = vmatpush2.msra.mxu0 0.0
  %1638 = vmatprep.subr.mxu0 0.0
  %1639 = vmatpush2.msra.mxu0 0.0
  %1640 = vmatprep.subr.mxu0 0.0
  %1641 = vmatpush2.msra.mxu0 0.0
  %1642 = vmatprep.mubr.f32.mxu0 0.0
  %1643 = vmatmul.mubr.f32.gmra.mxu0 %v1576
  %v1644 = vpop.f32.mrf.mxu0
  %v1645 = vadd.f32 0.0, %v1644
  %v1646 = vpop.f32.mrf.mxu0
  %1647 = vdwg.mxu0
  %1649 = vrot.lane.b32.xlu0 %v1311, 8
  %v1650 = vpop.permute.xlu0 %1649
  %1653 = vrot.lane.b32.xlu0 %v1478, 16
  %v1654 = vpop.permute.xlu0 %1653
  %1657 = vrot.lane.b32.xlu0 %v1645, 24
  %v1658 = vpop.permute.xlu0 %1657
  %v1660 = vsel %vm291, %v1144, %v1650
  %v1661 = vsel %vm973, %v1660, %v1654
  %v1662 = vsel %vm975, %v1661, %v1658
  %v1663 = vld [vmem:[%s15] sm:$0xff]
  %v1664 = vld [vmem:[%s15 + $0x8] sm:$0xff]
  %v1665 = vld [vmem:[%s15 + $0x10] sm:$0xff]
  %v1666 = vld [vmem:[%s15 + $0x18] sm:$0xff]
  %v1667 = vld [vmem:[%s17] sm:$0x1]
  %v1669 = vlaneseq
  %v1670 = vshrl.u32 %v1669, 7
  %v1671 = vsub.s32 0, %v1670
  %v1672 = vrot.slane %v1667, %v1671
  %v1675 = vsel %vm144, %v976, 0
  %v1678 = vsel %vm144, %v1662, 0
  %1680 = vmatprep.subr.mxu0 0.0
  %1681 = vmatpush1.msra.mxu0 0.0
  %1682 = vmatprep.subr.mxu0 0.0
  %1683 = vmatpush1.msra.mxu0 0.0
  %1684 = vmatprep.subr.mxu0 0.0
  %1685 = vmatpush1.msra.mxu0 0.0
  %1686 = vmatprep.subr.mxu0 0.0
  %1687 = vmatpush1.msra.mxu0 0.0
  %1688 = vmatprep.subr.mxu0 0.0
  %1689 = vmatpush1.msra.mxu0 0.0
  %1690 = vmatprep.subr.mxu0 0.0
  %1691 = vmatpush1.msra.mxu0 0.0
  %1692 = vmatprep.subr.mxu0 0.0
  %1693 = vmatpush1.msra.mxu0 0.0
  %1694 = vmatprep.subr.mxu0 0.0
  %1695 = vmatpush1.msra.mxu0 0.0
  %1696 = vmatprep.subr.mxu0 0.0
  %1697 = vmatpush1.msra.mxu0 0.0
  %1698 = vmatprep.subr.mxu0 0.0
  %1699 = vmatpush1.msra.mxu0 0.0
  %1700 = vmatprep.subr.mxu0 0.0
  %1701 = vmatpush1.msra.mxu0 0.0
  %1702 = vmatprep.subr.mxu0 0.0
  %1703 = vmatpush1.msra.mxu0 0.0
  %1704 = vmatprep.subr.mxu0 0.0
  %1705 = vmatpush1.msra.mxu0 %v1666
  %1706 = vmatprep.subr.mxu0 0.0
  %1707 = vmatpush1.msra.mxu0 %v1665
  %1708 = vmatprep.subr.mxu0 0.0
  %1709 = vmatpush1.msra.mxu0 %v1664
  %1710 = vmatprep.subr.mxu0 0.0
  %1711 = vmatpush1.msra.mxu0 %v1663
  %1712 = vmatprep.subr.mxu0 0.0
  %1713 = vmatpush2.msra.mxu0 0.0
  %1714 = vmatprep.subr.mxu0 0.0
  %1715 = vmatpush2.msra.mxu0 0.0
  %1716 = vmatprep.subr.mxu0 0.0
  %1717 = vmatpush2.msra.mxu0 0.0
  %1718 = vmatprep.subr.mxu0 0.0
  %1719 = vmatpush2.msra.mxu0 0.0
  %1720 = vmatprep.subr.mxu0 0.0
  %1721 = vmatpush2.msra.mxu0 0.0
  %1722 = vmatprep.subr.mxu0 0.0
  %1723 = vmatpush2.msra.mxu0 0.0
  %1724 = vmatprep.subr.mxu0 0.0
  %1725 = vmatpush2.msra.mxu0 0.0
  %1726 = vmatprep.subr.mxu0 0.0
  %1727 = vmatpush2.msra.mxu0 0.0
  %1728 = vmatprep.subr.mxu0 0.0
  %1729 = vmatpush2.msra.mxu0 0.0
  %1730 = vmatprep.subr.mxu0 0.0
  %1731 = vmatpush2.msra.mxu0 0.0
  %1732 = vmatprep.subr.mxu0 0.0
  %1733 = vmatpush2.msra.mxu0 0.0
  %1734 = vmatprep.subr.mxu0 0.0
  %1735 = vmatpush2.msra.mxu0 0.0
  %1736 = vmatprep.subr.mxu0 0.0
  %1737 = vmatpush2.msra.mxu0 0.0
  %1738 = vmatprep.subr.mxu0 0.0
  %1739 = vmatpush2.msra.mxu0 0.0
  %1740 = vmatprep.subr.mxu0 0.0
  %1741 = vmatpush2.msra.mxu0 0.0
  %1742 = vmatprep.subr.mxu0 0.0
  %1743 = vmatpush2.msra.mxu0 0.0
  %1744 = vmatprep.mubr.f32.mxu0 0.0
  %1745 = vmatmul.mubr.f32.gmra.mxu0 %v1675
  %v1746 = vpop.f32.mrf.mxu0
  %v1747 = vadd.f32 %v1672, %v1746
  %v1748 = vpop.f32.mrf.mxu0
  %1749 = vmatprep.mubr.f32.mxu0 0.0
  %1750 = vmatmul.mubr.f32.gmra.mxu0 %v1678
  %v1751 = vpop.f32.mrf.mxu0
  %v1752 = vadd.f32 %v1672, %v1751
  %v1753 = vpop.f32.mrf.mxu0
  %1754 = vdwg.mxu0
  %v1755 = vadd.f32 %v1747, %v188
  %v1756 = vadd.f32 %v1752, %v189
  %v1757 = vsel %vm144, %v1755, 0.0
  %1758 = vadd.xlane.f32.xlu0 %v1757
  %v1759 = vpop.xlane.xlu0 %1758
  %v1760 = vsel %vm144, %v1756, 0.0
  %1761 = vadd.xlane.f32.xlu0 %v1760
  %v1762 = vpop.xlane.xlu0 %1761
  %v1763 = vmul.f32 %v1759, %v151
  %v1764 = vmul.f32 %v1762, %v151
  %v1765 = vsub.f32 %v1755, %v1763
  %v1766 = vsub.f32 %v1756, %v1764
  %v1767 = vmul.f32 %v1765, %v1765
  %v1768 = vmul.f32 %v1766, %v1766
  %v1769 = vsel %vm144, %v1767, 0.0
  %1770 = vadd.xlane.f32.xlu0 %v1769
  %v1771 = vpop.xlane.xlu0 %1770
  %v1772 = vsel %vm144, %v1768, 0.0
  %1773 = vadd.xlane.f32.xlu0 %v1772
  %v1774 = vpop.xlane.xlu0 %1773
  %v1775 = vmul.f32 %v1771, %v151
  %v1776 = vmul.f32 %v1774, %v151
  %v1777 = vadd.f32 %v1775, 1e-12
  %v1778 = vadd.f32 %v1776, 1e-12
  %v1779 = vrsqrt.pop %v1777
  %v1780 = vrsqrt.pop %v1778
  %v1781 = vmul.f32 %v1765, %v1779
  %v1782 = vmul.f32 %v1766, %v1780
  %v1783 = vld [vmem:[%s19] sm:$0x1]
  %v1785 = vlaneseq
  %v1786 = vshrl.u32 %v1785, 7
  %v1787 = vsub.s32 0, %v1786
  %v1788 = vrot.slane %v1783, %v1787
  %v1790 = vmul.f32 %v1781, %v1788
  %v1791 = vmul.f32 %v1782, %v1788
  %v1792 = vld [vmem:[%s21] sm:$0x1]
  %v1794 = vlaneseq
  %v1795 = vshrl.u32 %v1794, 7
  %v1796 = vsub.s32 0, %v1795
  %v1797 = vrot.slane %v1792, %v1796
  %v1799 = vadd.f32 %v1790, %v1797
  %v1800 = vadd.f32 %v1791, %v1797
  %v1801 = vld [vmem:[%s23] sm:$0xff]
  %v1802 = vld [vmem:[%s23 + $0x8] sm:$0xff]
  %v1803 = vld [vmem:[%s23 + $0x10] sm:$0xff]
  %v1804 = vld [vmem:[%s23 + $0x18] sm:$0xff]
  %v1805 = vld [vmem:[%s25] sm:$0x1]
  %v1807 = vlaneseq
  %v1808 = vshrl.u32 %v1807, 7
  %v1809 = vsub.s32 0, %v1808
  %v1810 = vrot.slane %v1805, %v1809
  %v1813 = vsel %vm144, %v1799, 0
  %v1816 = vsel %vm144, %v1800, 0
  %1818 = vmatprep.subr.mxu0 0.0
  %1819 = vmatpush1.msra.mxu0 0.0
  %1820 = vmatprep.subr.mxu0 0.0
  %1821 = vmatpush1.msra.mxu0 0.0
  %1822 = vmatprep.subr.mxu0 0.0
  %1823 = vmatpush1.msra.mxu0 0.0
  %1824 = vmatprep.subr.mxu0 0.0
  %1825 = vmatpush1.msra.mxu0 0.0
  %1826 = vmatprep.subr.mxu0 0.0
  %1827 = vmatpush1.msra.mxu0 0.0
  %1828 = vmatprep.subr.mxu0 0.0
  %1829 = vmatpush1.msra.mxu0 0.0
  %1830 = vmatprep.subr.mxu0 0.0
  %1831 = vmatpush1.msra.mxu0 0.0
  %1832 = vmatprep.subr.mxu0 0.0
  %1833 = vmatpush1.msra.mxu0 0.0
  %1834 = vmatprep.subr.mxu0 0.0
  %1835 = vmatpush1.msra.mxu0 0.0
  %1836 = vmatprep.subr.mxu0 0.0
  %1837 = vmatpush1.msra.mxu0 0.0
  %1838 = vmatprep.subr.mxu0 0.0
  %1839 = vmatpush1.msra.mxu0 0.0
  %1840 = vmatprep.subr.mxu0 0.0
  %1841 = vmatpush1.msra.mxu0 0.0
  %1842 = vmatprep.subr.mxu0 0.0
  %1843 = vmatpush1.msra.mxu0 %v1804
  %1844 = vmatprep.subr.mxu0 0.0
  %1845 = vmatpush1.msra.mxu0 %v1803
  %1846 = vmatprep.subr.mxu0 0.0
  %1847 = vmatpush1.msra.mxu0 %v1802
  %1848 = vmatprep.subr.mxu0 0.0
  %1849 = vmatpush1.msra.mxu0 %v1801
  %1850 = vmatprep.subr.mxu0 0.0
  %1851 = vmatpush2.msra.mxu0 0.0
  %1852 = vmatprep.subr.mxu0 0.0
  %1853 = vmatpush2.msra.mxu0 0.0
  %1854 = vmatprep.subr.mxu0 0.0
  %1855 = vmatpush2.msra.mxu0 0.0
  %1856 = vmatprep.subr.mxu0 0.0
  %1857 = vmatpush2.msra.mxu0 0.0
  %1858 = vmatprep.subr.mxu0 0.0
  %1859 = vmatpush2.msra.mxu0 0.0
  %1860 = vmatprep.subr.mxu0 0.0
  %1861 = vmatpush2.msra.mxu0 0.0
  %1862 = vmatprep.subr.mxu0 0.0
  %1863 = vmatpush2.msra.mxu0 0.0
  %1864 = vmatprep.subr.mxu0 0.0
  %1865 = vmatpush2.msra.mxu0 0.0
  %1866 = vmatprep.subr.mxu0 0.0
  %1867 = vmatpush2.msra.mxu0 0.0
  %1868 = vmatprep.subr.mxu0 0.0
  %1869 = vmatpush2.msra.mxu0 0.0
  %1870 = vmatprep.subr.mxu0 0.0
  %1871 = vmatpush2.msra.mxu0 0.0
  %1872 = vmatprep.subr.mxu0 0.0
  %1873 = vmatpush2.msra.mxu0 0.0
  %1874 = vmatprep.subr.mxu0 0.0
  %1875 = vmatpush2.msra.mxu0 0.0
  %1876 = vmatprep.subr.mxu0 0.0
  %1877 = vmatpush2.msra.mxu0 0.0
  %1878 = vmatprep.subr.mxu0 0.0
  %1879 = vmatpush2.msra.mxu0 0.0
  %1880 = vmatprep.subr.mxu0 0.0
  %1881 = vmatpush2.msra.mxu0 0.0
  %1882 = vmatprep.mubr.f32.mxu0 0.0
  %1883 = vmatmul.mubr.f32.gmra.mxu0 %v1813
  %v1884 = vpop.f32.mrf.mxu0
  %v1885 = vadd.f32 %v1810, %v1884
  %v1886 = vpop.f32.mrf.mxu0
  %1887 = vmatprep.mubr.f32.mxu0 0.0
  %1888 = vmatmul.mubr.f32.gmra.mxu0 %v1816
  %v1889 = vpop.f32.mrf.mxu0
  %v1890 = vadd.f32 %v1810, %v1889
  %v1891 = vpop.f32.mrf.mxu0
  %1892 = vdwg.mxu0
  %v1893 = vmul.f32 %v1885, %v1885
  %v1894 = vmul.f32 %v1890, %v1890
  %v1895 = vmul.f32 %v1885, %v1893
  %v1896 = vmul.f32 %v1890, %v1894
  %v1897 = vmul.f32 %v1895, 0.044715
  %v1898 = vmul.f32 %v1896, 0.044715
  %v1899 = vadd.f32 %v1885, %v1897
  %v1900 = vadd.f32 %v1890, %v1898
  %v1901 = vmul.f32 %v1899, 0.7978846
  %v1902 = vmul.f32 %v1900, 0.7978846
  %v1903 = vtanh.pop %v1901
  %v1904 = vtanh.pop %v1902
  %v1905 = vadd.f32 %v1903, 1.0
  %v1906 = vadd.f32 %v1904, 1.0
  %v1907 = vmul.f32 %v1905, 0.5
  %v1908 = vmul.f32 %v1906, 0.5
  %v1909 = vmul.f32 %v1885, %v1907
  %v1910 = vmul.f32 %v1890, %v1908
  %v1911 = vld [vmem:[%s27] sm:$0xff]
  %v1912 = vld [vmem:[%s27 + $0x8] sm:$0xff]
  %v1913 = vld [vmem:[%s27 + $0x10] sm:$0xff]
  %v1914 = vld [vmem:[%s27 + $0x18] sm:$0xff]
  %v1915 = vld [vmem:[%s27 + $0x20] sm:$0xff]
  %v1916 = vld [vmem:[%s27 + $0x28] sm:$0xff]
  %v1917 = vld [vmem:[%s27 + $0x30] sm:$0xff]
  %v1918 = vld [vmem:[%s27 + $0x38] sm:$0xff]
  %v1919 = vld [vmem:[%s29] sm:$0x1]
  %v1921 = vlaneseq
  %v1922 = vshrl.u32 %v1921, 7
  %v1923 = vsub.s32 0, %v1922
  %v1924 = vrot.slane %v1919, %v1923
  %vm1926 = vcmask 523264
  %v1928 = vsel %vm1926, %v1909, 0
  %v1931 = vsel %vm1926, %v1910, 0
  %1933 = vmatprep.subr.mxu0 0.0
  %1934 = vmatpush1.msra.mxu0 0.0
  %1935 = vmatprep.subr.mxu0 0.0
  %1936 = vmatpush1.msra.mxu0 0.0
  %1937 = vmatprep.subr.mxu0 0.0
  %1938 = vmatpush1.msra.mxu0 0.0
  %1939 = vmatprep.subr.mxu0 0.0
  %1940 = vmatpush1.msra.mxu0 0.0
  %1941 = vmatprep.subr.mxu0 0.0
  %1942 = vmatpush1.msra.mxu0 0.0
  %1943 = vmatprep.subr.mxu0 0.0
  %1944 = vmatpush1.msra.mxu0 0.0
  %1945 = vmatprep.subr.mxu0 0.0
  %1946 = vmatpush1.msra.mxu0 0.0
  %1947 = vmatprep.subr.mxu0 0.0
  %1948 = vmatpush1.msra.mxu0 0.0
  %1949 = vmatprep.subr.mxu0 0.0
  %1950 = vmatpush1.msra.mxu0 %v1918
  %1951 = vmatprep.subr.mxu0 0.0
  %1952 = vmatpush1.msra.mxu0 %v1917
  %1953 = vmatprep.subr.mxu0 0.0
  %1954 = vmatpush1.msra.mxu0 %v1916
  %1955 = vmatprep.subr.mxu0 0.0
  %1956 = vmatpush1.msra.mxu0 %v1915
  %1957 = vmatprep.subr.mxu0 0.0
  %1958 = vmatpush1.msra.mxu0 %v1914
  %1959 = vmatprep.subr.mxu0 0.0
  %1960 = vmatpush1.msra.mxu0 %v1913
  %1961 = vmatprep.subr.mxu0 0.0
  %1962 = vmatpush1.msra.mxu0 %v1912
  %1963 = vmatprep.subr.mxu0 0.0
  %1964 = vmatpush1.msra.mxu0 %v1911
  %1965 = vmatprep.subr.mxu0 0.0
  %1966 = vmatpush2.msra.mxu0 0.0
  %1967 = vmatprep.subr.mxu0 0.0
  %1968 = vmatpush2.msra.mxu0 0.0
  %1969 = vmatprep.subr.mxu0 0.0
  %1970 = vmatpush2.msra.mxu0 0.0
  %1971 = vmatprep.subr.mxu0 0.0
  %1972 = vmatpush2.msra.mxu0 0.0
  %1973 = vmatprep.subr.mxu0 0.0
  %1974 = vmatpush2.msra.mxu0 0.0
  %1975 = vmatprep.subr.mxu0 0.0
  %1976 = vmatpush2.msra.mxu0 0.0
  %1977 = vmatprep.subr.mxu0 0.0
  %1978 = vmatpush2.msra.mxu0 0.0
  %1979 = vmatprep.subr.mxu0 0.0
  %1980 = vmatpush2.msra.mxu0 0.0
  %1981 = vmatprep.subr.mxu0 0.0
  %1982 = vmatpush2.msra.mxu0 0.0
  %1983 = vmatprep.subr.mxu0 0.0
  %1984 = vmatpush2.msra.mxu0 0.0
  %1985 = vmatprep.subr.mxu0 0.0
  %1986 = vmatpush2.msra.mxu0 0.0
  %1987 = vmatprep.subr.mxu0 0.0
  %1988 = vmatpush2.msra.mxu0 0.0
  %1989 = vmatprep.subr.mxu0 0.0
  %1990 = vmatpush2.msra.mxu0 0.0
  %1991 = vmatprep.subr.mxu0 0.0
  %1992 = vmatpush2.msra.mxu0 0.0
  %1993 = vmatprep.subr.mxu0 0.0
  %1994 = vmatpush2.msra.mxu0 0.0
  %1995 = vmatprep.subr.mxu0 0.0
  %1996 = vmatpush2.msra.mxu0 0.0
  %1997 = vmatprep.mubr.f32.mxu0 0.0
  %1998 = vmatmul.mubr.f32.gmra.mxu0 %v1928
  %v1999 = vpop.f32.mrf.mxu0
  %v2000 = vadd.f32 %v1924, %v1999
  %v2001 = vpop.f32.mrf.mxu0
  %2002 = vmatprep.mubr.f32.mxu0 0.0
  %2003 = vmatmul.mubr.f32.gmra.mxu0 %v1931
  %v2004 = vpop.f32.mrf.mxu0
  %v2005 = vadd.f32 %v1924, %v2004
  %v2006 = vpop.f32.mrf.mxu0
  %2007 = vdwg.mxu0
  %v2008 = vadd.f32 %v2000, %v1799
  %v2009 = vadd.f32 %v2005, %v1800
  %v2010 = vsel %vm144, %v2008, 0.0
  %2011 = vadd.xlane.f32.xlu0 %v2010
  %v2012 = vpop.xlane.xlu0 %2011
  %v2013 = vsel %vm144, %v2009, 0.0
  %2014 = vadd.xlane.f32.xlu0 %v2013
  %v2015 = vpop.xlane.xlu0 %2014
  %v2016 = vmul.f32 %v2012, %v151
  %v2017 = vmul.f32 %v2015, %v151
  %v2018 = vsub.f32 %v2008, %v2016
  %v2019 = vsub.f32 %v2009, %v2017
  %v2020 = vmul.f32 %v2018, %v2018
  %v2021 = vmul.f32 %v2019, %v2019
  %v2022 = vsel %vm144, %v2020, 0.0
  %2023 = vadd.xlane.f32.xlu0 %v2022
  %v2024 = vpop.xlane.xlu0 %2023
  %v2025 = vsel %vm144, %v2021, 0.0
  %2026 = vadd.xlane.f32.xlu0 %v2025
  %v2027 = vpop.xlane.xlu0 %2026
  %v2028 = vmul.f32 %v2024, %v151
  %v2029 = vmul.f32 %v2027, %v151
  %v2030 = vadd.f32 %v2028, 1e-12
  %v2031 = vadd.f32 %v2029, 1e-12
  %v2032 = vrsqrt.pop %v2030
  %v2033 = vrsqrt.pop %v2031
  %v2034 = vmul.f32 %v2018, %v2032
  %v2035 = vmul.f32 %v2019, %v2033
  %v2036 = vld [vmem:[%s31] sm:$0x1]
  %v2038 = vlaneseq
  %v2039 = vshrl.u32 %v2038, 7
  %v2040 = vsub.s32 0, %v2039
  %v2041 = vrot.slane %v2036, %v2040
  %v2043 = vmul.f32 %v2034, %v2041
  %v2044 = vmul.f32 %v2035, %v2041
  %v2045 = vld [vmem:[%s33] sm:$0x1]
  %v2047 = vlaneseq
  %v2048 = vshrl.u32 %v2047, 7
  %v2049 = vsub.s32 0, %v2048
  %v2050 = vrot.slane %v2045, %v2049
  %v2052 = vadd.f32 %v2043, %v2050
  %v2053 = vadd.f32 %v2044, %v2050
  %v2054 = vld [vmem:[%s35] sm:$0xff]
  %v2055 = vld [vmem:[%s35 + $0x8] sm:$0xff]
  %v2056 = vld [vmem:[%s35 + $0x10] sm:$0xff]
  %v2057 = vld [vmem:[%s35 + $0x18] sm:$0xff]
  %v2058 = vld [vmem:[%s37] sm:$0x1]
  %v2060 = vlaneseq
  %v2061 = vshrl.u32 %v2060, 7
  %v2062 = vsub.s32 0, %v2061
  %v2063 = vrot.slane %v2058, %v2062
  %v2066 = vsel %vm144, %v2052, 0
  %v2069 = vsel %vm144, %v2053, 0
  %2071 = vmatprep.subr.mxu0 0.0
  %2072 = vmatpush1.msra.mxu0 0.0
  %2073 = vmatprep.subr.mxu0 0.0
  %2074 = vmatpush1.msra.mxu0 0.0
  %2075 = vmatprep.subr.mxu0 0.0
  %2076 = vmatpush1.msra.mxu0 0.0
  %2077 = vmatprep.subr.mxu0 0.0
  %2078 = vmatpush1.msra.mxu0 0.0
  %2079 = vmatprep.subr.mxu0 0.0
  %2080 = vmatpush1.msra.mxu0 0.0
  %2081 = vmatprep.subr.mxu0 0.0
  %2082 = vmatpush1.msra.mxu0 0.0
  %2083 = vmatprep.subr.mxu0 0.0
  %2084 = vmatpush1.msra.mxu0 0.0
  %2085 = vmatprep.subr.mxu0 0.0
  %2086 = vmatpush1.msra.mxu0 0.0
  %2087 = vmatprep.subr.mxu0 0.0
  %2088 = vmatpush1.msra.mxu0 0.0
  %2089 = vmatprep.subr.mxu0 0.0
  %2090 = vmatpush1.msra.mxu0 0.0
  %2091 = vmatprep.subr.mxu0 0.0
  %2092 = vmatpush1.msra.mxu0 0.0
  %2093 = vmatprep.subr.mxu0 0.0
  %2094 = vmatpush1.msra.mxu0 0.0
  %2095 = vmatprep.subr.mxu0 0.0
  %2096 = vmatpush1.msra.mxu0 %v2057
  %2097 = vmatprep.subr.mxu0 0.0
  %2098 = vmatpush1.msra.mxu0 %v2056
  %2099 = vmatprep.subr.mxu0 0.0
  %2100 = vmatpush1.msra.mxu0 %v2055
  %2101 = vmatprep.subr.mxu0 0.0
  %2102 = vmatpush1.msra.mxu0 %v2054
  %2103 = vmatprep.subr.mxu0 0.0
  %2104 = vmatpush2.msra.mxu0 0.0
  %2105 = vmatprep.subr.mxu0 0.0
  %2106 = vmatpush2.msra.mxu0 0.0
  %2107 = vmatprep.subr.mxu0 0.0
  %2108 = vmatpush2.msra.mxu0 0.0
  %2109 = vmatprep.subr.mxu0 0.0
  %2110 = vmatpush2.msra.mxu0 0.0
  %2111 = vmatprep.subr.mxu0 0.0
  %2112 = vmatpush2.msra.mxu0 0.0
  %2113 = vmatprep.subr.mxu0 0.0
  %2114 = vmatpush2.msra.mxu0 0.0
  %2115 = vmatprep.subr.mxu0 0.0
  %2116 = vmatpush2.msra.mxu0 0.0
  %2117 = vmatprep.subr.mxu0 0.0
  %2118 = vmatpush2.msra.mxu0 0.0
  %2119 = vmatprep.subr.mxu0 0.0
  %2120 = vmatpush2.msra.mxu0 0.0
  %2121 = vmatprep.subr.mxu0 0.0
  %2122 = vmatpush2.msra.mxu0 0.0
  %2123 = vmatprep.subr.mxu0 0.0
  %2124 = vmatpush2.msra.mxu0 0.0
  %2125 = vmatprep.subr.mxu0 0.0
  %2126 = vmatpush2.msra.mxu0 0.0
  %2127 = vmatprep.subr.mxu0 0.0
  %2128 = vmatpush2.msra.mxu0 0.0
  %2129 = vmatprep.subr.mxu0 0.0
  %2130 = vmatpush2.msra.mxu0 0.0
  %2131 = vmatprep.subr.mxu0 0.0
  %2132 = vmatpush2.msra.mxu0 0.0
  %2133 = vmatprep.subr.mxu0 0.0
  %2134 = vmatpush2.msra.mxu0 0.0
  %2135 = vmatprep.mubr.f32.mxu0 0.0
  %2136 = vmatmul.mubr.f32.gmra.mxu0 %v2066
  %v2137 = vpop.f32.mrf.mxu0
  %v2138 = vadd.f32 %v2063, %v2137
  %v2139 = vpop.f32.mrf.mxu0
  %2140 = vmatprep.mubr.f32.mxu0 0.0
  %2141 = vmatmul.mubr.f32.gmra.mxu0 %v2069
  %v2142 = vpop.f32.mrf.mxu0
  %v2143 = vadd.f32 %v2063, %v2142
  %v2144 = vpop.f32.mrf.mxu0
  %2145 = vdwg.mxu0
  %2147 = vrot.lane.b32.xlu0 %v2138, 96
  %v2148 = vpop.permute.xlu0 %2147
  %v2149 = vsel %vm291, %v2138, 0
  %v2151 = vsel %vm291, %v2148, 0
  %2153 = vmatprep.subr.mxu0 0.0
  %2154 = vmatpush1.xpose.msra.mxu0 0.0
  %2155 = vmatprep.subr.mxu0 0.0
  %2156 = vmatpush1.xpose.msra.mxu0 0.0
  %2157 = vmatprep.subr.mxu0 0.0
  %2158 = vmatpush1.xpose.msra.mxu0 0.0
  %2159 = vmatprep.subr.mxu0 0.0
  %2160 = vmatpush1.xpose.msra.mxu0 0.0
  %2161 = vmatprep.subr.mxu0 0.0
  %2162 = vmatpush1.xpose.msra.mxu0 0.0
  %2163 = vmatprep.subr.mxu0 0.0
  %2164 = vmatpush1.xpose.msra.mxu0 0.0
  %2165 = vmatprep.subr.mxu0 0.0
  %2166 = vmatpush1.xpose.msra.mxu0 0.0
  %2167 = vmatprep.subr.mxu0 0.0
  %2168 = vmatpush1.xpose.msra.mxu0 0.0
  %2169 = vmatprep.subr.mxu0 0.0
  %2170 = vmatpush1.xpose.msra.mxu0 0.0
  %2171 = vmatprep.subr.mxu0 0.0
  %2172 = vmatpush1.xpose.msra.mxu0 0.0
  %2173 = vmatprep.subr.mxu0 0.0
  %2174 = vmatpush1.xpose.msra.mxu0 0.0
  %2175 = vmatprep.subr.mxu0 0.0
  %2176 = vmatpush1.xpose.msra.mxu0 0.0
  %2177 = vmatprep.subr.mxu0 0.0
  %2178 = vmatpush1.xpose.msra.mxu0 0.0
  %2179 = vmatprep.subr.mxu0 0.0
  %2180 = vmatpush1.xpose.msra.mxu0 0.0
  %2181 = vmatprep.subr.mxu0 0.0
  %2182 = vmatpush1.xpose.msra.mxu0 0.0
  %2183 = vmatprep.subr.mxu0 0.0
  %2184 = vmatpush1.xpose.msra.mxu0 %v2151
  %2185 = vmatprep.subr.mxu0 0.0
  %2186 = vmatpush2.xpose.msra.mxu0 0.0
  %2187 = vmatprep.subr.mxu0 0.0
  %2188 = vmatpush2.xpose.msra.mxu0 0.0
  %2189 = vmatprep.subr.mxu0 0.0
  %2190 = vmatpush2.xpose.msra.mxu0 0.0
  %2191 = vmatprep.subr.mxu0 0.0
  %2192 = vmatpush2.xpose.msra.mxu0 0.0
  %2193 = vmatprep.subr.mxu0 0.0
  %2194 = vmatpush2.xpose.msra.mxu0 0.0
  %2195 = vmatprep.subr.mxu0 0.0
  %2196 = vmatpush2.xpose.msra.mxu0 0.0
  %2197 = vmatprep.subr.mxu0 0.0
  %2198 = vmatpush2.xpose.msra.mxu0 0.0
  %2199 = vmatprep.subr.mxu0 0.0
  %2200 = vmatpush2.xpose.msra.mxu0 0.0
  %2201 = vmatprep.subr.mxu0 0.0
  %2202 = vmatpush2.xpose.msra.mxu0 0.0
  %2203 = vmatprep.subr.mxu0 0.0
  %2204 = vmatpush2.xpose.msra.mxu0 0.0
  %2205 = vmatprep.subr.mxu0 0.0
  %2206 = vmatpush2.xpose.msra.mxu0 0.0
  %2207 = vmatprep.subr.mxu0 0.0
  %2208 = vmatpush2.xpose.msra.mxu0 0.0
  %2209 = vmatprep.subr.mxu0 0.0
  %2210 = vmatpush2.xpose.msra.mxu0 0.0
  %2211 = vmatprep.subr.mxu0 0.0
  %2212 = vmatpush2.xpose.msra.mxu0 0.0
  %2213 = vmatprep.subr.mxu0 0.0
  %2214 = vmatpush2.xpose.msra.mxu0 0.0
  %2215 = vmatprep.subr.mxu0 0.0
  %2216 = vmatpush2.xpose.msra.mxu0 0.0
  %2217 = vmatprep.mubr.f32.mxu0 0.0
  %2218 = vmatmul.mubr.f32.gmra.mxu0 %v2149
  %v2219 = vpop.f32.mrf.mxu0
  %v2220 = vadd.f32 0.0, %v2219
  %v2221 = vpop.f32.mrf.mxu0
  %2222 = vdwg.mxu0
  %v2223 = vmul.f32 %v2220, 0.35355338
  %v2224 = vadd.f32 %v2223, %v370
  %v2225 = vsel %vm291, %v2224, -inf
  %2226 = vmax.xlane.f32.xlu0 %v2225
  %v2227 = vpop.xlane.xlu0 %2226
  %v2228 = vsub.f32 %v2224, %v2227
  %v2229 = vmul.f32 %v2228, 1.442695
  %v2230 = vpow.pop %v2229
  %v2231 = vsel %vm291, %v2230, 0.0
  %2232 = vadd.xlane.f32.xlu0 %v2231
  %v2233 = vpop.xlane.xlu0 %2232
  %v2234 = vrcp.pop %v2233
  %v2235 = vmul.f32 %v2230, %v2234
  %2236 = vrot.lane.b32.xlu0 %v2138, 64
  %v2237 = vpop.permute.xlu0 %2236
  %v2240 = vsel %vm291, %v2235, 0
  %2242 = vmatprep.subr.mxu0 0.0
  %2243 = vmatpush1.msra.mxu0 0.0
  %2244 = vmatprep.subr.mxu0 0.0
  %2245 = vmatpush1.msra.mxu0 0.0
  %2246 = vmatprep.subr.mxu0 0.0
  %2247 = vmatpush1.msra.mxu0 0.0
  %2248 = vmatprep.subr.mxu0 0.0
  %2249 = vmatpush1.msra.mxu0 0.0
  %2250 = vmatprep.subr.mxu0 0.0
  %2251 = vmatpush1.msra.mxu0 0.0
  %2252 = vmatprep.subr.mxu0 0.0
  %2253 = vmatpush1.msra.mxu0 0.0
  %2254 = vmatprep.subr.mxu0 0.0
  %2255 = vmatpush1.msra.mxu0 0.0
  %2256 = vmatprep.subr.mxu0 0.0
  %2257 = vmatpush1.msra.mxu0 0.0
  %2258 = vmatprep.subr.mxu0 0.0
  %2259 = vmatpush1.msra.mxu0 0.0
  %2260 = vmatprep.subr.mxu0 0.0
  %2261 = vmatpush1.msra.mxu0 0.0
  %2262 = vmatprep.subr.mxu0 0.0
  %2263 = vmatpush1.msra.mxu0 0.0
  %2264 = vmatprep.subr.mxu0 0.0
  %2265 = vmatpush1.msra.mxu0 0.0
  %2266 = vmatprep.subr.mxu0 0.0
  %2267 = vmatpush1.msra.mxu0 0.0
  %2268 = vmatprep.subr.mxu0 0.0
  %2269 = vmatpush1.msra.mxu0 0.0
  %2270 = vmatprep.subr.mxu0 0.0
  %2271 = vmatpush1.msra.mxu0 0.0
  %2272 = vmatprep.subr.mxu0 0.0
  %2273 = vmatpush1.msra.mxu0 %v2237
  %2274 = vmatprep.subr.mxu0 0.0
  %2275 = vmatpush2.msra.mxu0 0.0
  %2276 = vmatprep.subr.mxu0 0.0
  %2277 = vmatpush2.msra.mxu0 0.0
  %2278 = vmatprep.subr.mxu0 0.0
  %2279 = vmatpush2.msra.mxu0 0.0
  %2280 = vmatprep.subr.mxu0 0.0
  %2281 = vmatpush2.msra.mxu0 0.0
  %2282 = vmatprep.subr.mxu0 0.0
  %2283 = vmatpush2.msra.mxu0 0.0
  %2284 = vmatprep.subr.mxu0 0.0
  %2285 = vmatpush2.msra.mxu0 0.0
  %2286 = vmatprep.subr.mxu0 0.0
  %2287 = vmatpush2.msra.mxu0 0.0
  %2288 = vmatprep.subr.mxu0 0.0
  %2289 = vmatpush2.msra.mxu0 0.0
  %2290 = vmatprep.subr.mxu0 0.0
  %2291 = vmatpush2.msra.mxu0 0.0
  %2292 = vmatprep.subr.mxu0 0.0
  %2293 = vmatpush2.msra.mxu0 0.0
  %2294 = vmatprep.subr.mxu0 0.0
  %2295 = vmatpush2.msra.mxu0 0.0
  %2296 = vmatprep.subr.mxu0 0.0
  %2297 = vmatpush2.msra.mxu0 0.0
  %2298 = vmatprep.subr.mxu0 0.0
  %2299 = vmatpush2.msra.mxu0 0.0
  %2300 = vmatprep.subr.mxu0 0.0
  %2301 = vmatpush2.msra.mxu0 0.0
  %2302 = vmatprep.subr.mxu0 0.0
  %2303 = vmatpush2.msra.mxu0 0.0
  %2304 = vmatprep.subr.mxu0 0.0
  %2305 = vmatpush2.msra.mxu0 0.0
  %2306 = vmatprep.mubr.f32.mxu0 0.0
  %2307 = vmatmul.mubr.f32.gmra.mxu0 %v2240
  %v2308 = vpop.f32.mrf.mxu0
  %v2309 = vadd.f32 0.0, %v2308
  %v2310 = vpop.f32.mrf.mxu0
  %2311 = vdwg.mxu0
  %2312 = vrot.lane.b32.xlu0 %v2138, 120
  %v2313 = vpop.permute.xlu0 %2312
  %2314 = vrot.lane.b32.xlu0 %v2138, 88
  %v2315 = vpop.permute.xlu0 %2314
  %v2316 = vsel %vm291, %v2313, 0
  %v2318 = vsel %vm291, %v2315, 0
  %2320 = vmatprep.subr.mxu0 0.0
  %2321 = vmatpush1.xpose.msra.mxu0 0.0
  %2322 = vmatprep.subr.mxu0 0.0
  %2323 = vmatpush1.xpose.msra.mxu0 0.0
  %2324 = vmatprep.subr.mxu0 0.0
  %2325 = vmatpush1.xpose.msra.mxu0 0.0
  %2326 = vmatprep.subr.mxu0 0.0
  %2327 = vmatpush1.xpose.msra.mxu0 0.0
  %2328 = vmatprep.subr.mxu0 0.0
  %2329 = vmatpush1.xpose.msra.mxu0 0.0
  %2330 = vmatprep.subr.mxu0 0.0
  %2331 = vmatpush1.xpose.msra.mxu0 0.0
  %2332 = vmatprep.subr.mxu0 0.0
  %2333 = vmatpush1.xpose.msra.mxu0 0.0
  %2334 = vmatprep.subr.mxu0 0.0
  %2335 = vmatpush1.xpose.msra.mxu0 0.0
  %2336 = vmatprep.subr.mxu0 0.0
  %2337 = vmatpush1.xpose.msra.mxu0 0.0
  %2338 = vmatprep.subr.mxu0 0.0
  %2339 = vmatpush1.xpose.msra.mxu0 0.0
  %2340 = vmatprep.subr.mxu0 0.0
  %2341 = vmatpush1.xpose.msra.mxu0 0.0
  %2342 = vmatprep.subr.mxu0 0.0
  %2343 = vmatpush1.xpose.msra.mxu0 0.0
  %2344 = vmatprep.subr.mxu0 0.0
  %2345 = vmatpush1.xpose.msra.mxu0 0.0
  %2346 = vmatprep.subr.mxu0 0.0
  %2347 = vmatpush1.xpose.msra.mxu0 0.0
  %2348 = vmatprep.subr.mxu0 0.0
  %2349 = vmatpush1.xpose.msra.mxu0 0.0
  %2350 = vmatprep.subr.mxu0 0.0
  %2351 = vmatpush1.xpose.msra.mxu0 %v2318
  %2352 = vmatprep.subr.mxu0 0.0
  %2353 = vmatpush2.xpose.msra.mxu0 0.0
  %2354 = vmatprep.subr.mxu0 0.0
  %2355 = vmatpush2.xpose.msra.mxu0 0.0
  %2356 = vmatprep.subr.mxu0 0.0
  %2357 = vmatpush2.xpose.msra.mxu0 0.0
  %2358 = vmatprep.subr.mxu0 0.0
  %2359 = vmatpush2.xpose.msra.mxu0 0.0
  %2360 = vmatprep.subr.mxu0 0.0
  %2361 = vmatpush2.xpose.msra.mxu0 0.0
  %2362 = vmatprep.subr.mxu0 0.0
  %2363 = vmatpush2.xpose.msra.mxu0 0.0
  %2364 = vmatprep.subr.mxu0 0.0
  %2365 = vmatpush2.xpose.msra.mxu0 0.0
  %2366 = vmatprep.subr.mxu0 0.0
  %2367 = vmatpush2.xpose.msra.mxu0 0.0
  %2368 = vmatprep.subr.mxu0 0.0
  %2369 = vmatpush2.xpose.msra.mxu0 0.0
  %2370 = vmatprep.subr.mxu0 0.0
  %2371 = vmatpush2.xpose.msra.mxu0 0.0
  %2372 = vmatprep.subr.mxu0 0.0
  %2373 = vmatpush2.xpose.msra.mxu0 0.0
  %2374 = vmatprep.subr.mxu0 0.0
  %2375 = vmatpush2.xpose.msra.mxu0 0.0
  %2376 = vmatprep.subr.mxu0 0.0
  %2377 = vmatpush2.xpose.msra.mxu0 0.0
  %2378 = vmatprep.subr.mxu0 0.0
  %2379 = vmatpush2.xpose.msra.mxu0 0.0
  %2380 = vmatprep.subr.mxu0 0.0
  %2381 = vmatpush2.xpose.msra.mxu0 0.0
  %2382 = vmatprep.subr.mxu0 0.0
  %2383 = vmatpush2.xpose.msra.mxu0 0.0
  %2384 = vmatprep.mubr.f32.mxu0 0.0
  %2385 = vmatmul.mubr.f32.gmra.mxu0 %v2316
  %v2386 = vpop.f32.mrf.mxu0
  %v2387 = vadd.f32 0.0, %v2386
  %v2388 = vpop.f32.mrf.mxu0
  %2389 = vdwg.mxu0
  %v2390 = vmul.f32 %v2387, 0.35355338
  %v2391 = vadd.f32 %v2390, %v370
  %v2392 = vsel %vm291, %v2391, -inf
  %2393 = vmax.xlane.f32.xlu0 %v2392
  %v2394 = vpop.xlane.xlu0 %2393
  %v2395 = vsub.f32 %v2391, %v2394
  %v2396 = vmul.f32 %v2395, 1.442695
  %v2397 = vpow.pop %v2396
  %v2398 = vsel %vm291, %v2397, 0.0
  %2399 = vadd.xlane.f32.xlu0 %v2398
  %v2400 = vpop.xlane.xlu0 %2399
  %v2401 = vrcp.pop %v2400
  %v2402 = vmul.f32 %v2397, %v2401
  %2403 = vrot.lane.b32.xlu0 %v2138, 56
  %v2404 = vpop.permute.xlu0 %2403
  %v2407 = vsel %vm291, %v2402, 0
  %2409 = vmatprep.subr.mxu0 0.0
  %2410 = vmatpush1.msra.mxu0 0.0
  %2411 = vmatprep.subr.mxu0 0.0
  %2412 = vmatpush1.msra.mxu0 0.0
  %2413 = vmatprep.subr.mxu0 0.0
  %2414 = vmatpush1.msra.mxu0 0.0
  %2415 = vmatprep.subr.mxu0 0.0
  %2416 = vmatpush1.msra.mxu0 0.0
  %2417 = vmatprep.subr.mxu0 0.0
  %2418 = vmatpush1.msra.mxu0 0.0
  %2419 = vmatprep.subr.mxu0 0.0
  %2420 = vmatpush1.msra.mxu0 0.0
  %2421 = vmatprep.subr.mxu0 0.0
  %2422 = vmatpush1.msra.mxu0 0.0
  %2423 = vmatprep.subr.mxu0 0.0
  %2424 = vmatpush1.msra.mxu0 0.0
  %2425 = vmatprep.subr.mxu0 0.0
  %2426 = vmatpush1.msra.mxu0 0.0
  %2427 = vmatprep.subr.mxu0 0.0
  %2428 = vmatpush1.msra.mxu0 0.0
  %2429 = vmatprep.subr.mxu0 0.0
  %2430 = vmatpush1.msra.mxu0 0.0
  %2431 = vmatprep.subr.mxu0 0.0
  %2432 = vmatpush1.msra.mxu0 0.0
  %2433 = vmatprep.subr.mxu0 0.0
  %2434 = vmatpush1.msra.mxu0 0.0
  %2435 = vmatprep.subr.mxu0 0.0
  %2436 = vmatpush1.msra.mxu0 0.0
  %2437 = vmatprep.subr.mxu0 0.0
  %2438 = vmatpush1.msra.mxu0 0.0
  %2439 = vmatprep.subr.mxu0 0.0
  %2440 = vmatpush1.msra.mxu0 %v2404
  %2441 = vmatprep.subr.mxu0 0.0
  %2442 = vmatpush2.msra.mxu0 0.0
  %2443 = vmatprep.subr.mxu0 0.0
  %2444 = vmatpush2.msra.mxu0 0.0
  %2445 = vmatprep.subr.mxu0 0.0
  %2446 = vmatpush2.msra.mxu0 0.0
  %2447 = vmatprep.subr.mxu0 0.0
  %2448 = vmatpush2.msra.mxu0 0.0
  %2449 = vmatprep.subr.mxu0 0.0
  %2450 = vmatpush2.msra.mxu0 0.0
  %2451 = vmatprep.subr.mxu0 0.0
  %2452 = vmatpush2.msra.mxu0 0.0
  %2453 = vmatprep.subr.mxu0 0.0
  %2454 = vmatpush2.msra.mxu0 0.0
  %2455 = vmatprep.subr.mxu0 0.0
  %2456 = vmatpush2.msra.mxu0 0.0
  %2457 = vmatprep.subr.mxu0 0.0
  %2458 = vmatpush2.msra.mxu0 0.0
  %2459 = vmatprep.subr.mxu0 0.0
  %2460 = vmatpush2.msra.mxu0 0.0
  %2461 = vmatprep.subr.mxu0 0.0
  %2462 = vmatpush2.msra.mxu0 0.0
  %2463 = vmatprep.subr.mxu0 0.0
  %2464 = vmatpush2.msra.mxu0 0.0
  %2465 = vmatprep.subr.mxu0 0.0
  %2466 = vmatpush2.msra.mxu0 0.0
  %2467 = vmatprep.subr.mxu0 0.0
  %2468 = vmatpush2.msra.mxu0 0.0
  %2469 = vmatprep.subr.mxu0 0.0
  %2470 = vmatpush2.msra.mxu0 0.0
  %2471 = vmatprep.subr.mxu0 0.0
  %2472 = vmatpush2.msra.mxu0 0.0
  %2473 = vmatprep.mubr.f32.mxu0 0.0
  %2474 = vmatmul.mubr.f32.gmra.mxu0 %v2407
  %v2475 = vpop.f32.mrf.mxu0
  %v2476 = vadd.f32 0.0, %v2475
  %v2477 = vpop.f32.mrf.mxu0
  %2478 = vdwg.mxu0
  %2479 = vrot.lane.b32.xlu0 %v2138, 112
  %v2480 = vpop.permute.xlu0 %2479
  %2481 = vrot.lane.b32.xlu0 %v2138, 80
  %v2482 = vpop.permute.xlu0 %2481
  %v2483 = vsel %vm291, %v2480, 0
  %v2485 = vsel %vm291, %v2482, 0
  %2487 = vmatprep.subr.mxu0 0.0
  %2488 = vmatpush1.xpose.msra.mxu0 0.0
  %2489 = vmatprep.subr.mxu0 0.0
  %2490 = vmatpush1.xpose.msra.mxu0 0.0
  %2491 = vmatprep.subr.mxu0 0.0
  %2492 = vmatpush1.xpose.msra.mxu0 0.0
  %2493 = vmatprep.subr.mxu0 0.0
  %2494 = vmatpush1.xpose.msra.mxu0 0.0
  %2495 = vmatprep.subr.mxu0 0.0
  %2496 = vmatpush1.xpose.msra.mxu0 0.0
  %2497 = vmatprep.subr.mxu0 0.0
  %2498 = vmatpush1.xpose.msra.mxu0 0.0
  %2499 = vmatprep.subr.mxu0 0.0
  %2500 = vmatpush1.xpose.msra.mxu0 0.0
  %2501 = vmatprep.subr.mxu0 0.0
  %2502 = vmatpush1.xpose.msra.mxu0 0.0
  %2503 = vmatprep.subr.mxu0 0.0
  %2504 = vmatpush1.xpose.msra.mxu0 0.0
  %2505 = vmatprep.subr.mxu0 0.0
  %2506 = vmatpush1.xpose.msra.mxu0 0.0
  %2507 = vmatprep.subr.mxu0 0.0
  %2508 = vmatpush1.xpose.msra.mxu0 0.0
  %2509 = vmatprep.subr.mxu0 0.0
  %2510 = vmatpush1.xpose.msra.mxu0 0.0
  %2511 = vmatprep.subr.mxu0 0.0
  %2512 = vmatpush1.xpose.msra.mxu0 0.0
  %2513 = vmatprep.subr.mxu0 0.0
  %2514 = vmatpush1.xpose.msra.mxu0 0.0
  %2515 = vmatprep.subr.mxu0 0.0
  %2516 = vmatpush1.xpose.msra.mxu0 0.0
  %2517 = vmatprep.subr.mxu0 0.0
  %2518 = vmatpush1.xpose.msra.mxu0 %v2485
  %2519 = vmatprep.subr.mxu0 0.0
  %2520 = vmatpush2.xpose.msra.mxu0 0.0
  %2521 = vmatprep.subr.mxu0 0.0
  %2522 = vmatpush2.xpose.msra.mxu0 0.0
  %2523 = vmatprep.subr.mxu0 0.0
  %2524 = vmatpush2.xpose.msra.mxu0 0.0
  %2525 = vmatprep.subr.mxu0 0.0
  %2526 = vmatpush2.xpose.msra.mxu0 0.0
  %2527 = vmatprep.subr.mxu0 0.0
  %2528 = vmatpush2.xpose.msra.mxu0 0.0
  %2529 = vmatprep.subr.mxu0 0.0
  %2530 = vmatpush2.xpose.msra.mxu0 0.0
  %2531 = vmatprep.subr.mxu0 0.0
  %2532 = vmatpush2.xpose.msra.mxu0 0.0
  %2533 = vmatprep.subr.mxu0 0.0
  %2534 = vmatpush2.xpose.msra.mxu0 0.0
  %2535 = vmatprep.subr.mxu0 0.0
  %2536 = vmatpush2.xpose.msra.mxu0 0.0
  %2537 = vmatprep.subr.mxu0 0.0
  %2538 = vmatpush2.xpose.msra.mxu0 0.0
  %2539 = vmatprep.subr.mxu0 0.0
  %2540 = vmatpush2.xpose.msra.mxu0 0.0
  %2541 = vmatprep.subr.mxu0 0.0
  %2542 = vmatpush2.xpose.msra.mxu0 0.0
  %2543 = vmatprep.subr.mxu0 0.0
  %2544 = vmatpush2.xpose.msra.mxu0 0.0
  %2545 = vmatprep.subr.mxu0 0.0
  %2546 = vmatpush2.xpose.msra.mxu0 0.0
  %2547 = vmatprep.subr.mxu0 0.0
  %2548 = vmatpush2.xpose.msra.mxu0 0.0
  %2549 = vmatprep.subr.mxu0 0.0
  %2550 = vmatpush2.xpose.msra.mxu0 0.0
  %2551 = vmatprep.mubr.f32.mxu0 0.0
  %2552 = vmatmul.mubr.f32.gmra.mxu0 %v2483
  %v2553 = vpop.f32.mrf.mxu0
  %v2554 = vadd.f32 0.0, %v2553
  %v2555 = vpop.f32.mrf.mxu0
  %2556 = vdwg.mxu0
  %v2557 = vmul.f32 %v2554, 0.35355338
  %v2558 = vadd.f32 %v2557, %v370
  %v2559 = vsel %vm291, %v2558, -inf
  %2560 = vmax.xlane.f32.xlu0 %v2559
  %v2561 = vpop.xlane.xlu0 %2560
  %v2562 = vsub.f32 %v2558, %v2561
  %v2563 = vmul.f32 %v2562, 1.442695
  %v2564 = vpow.pop %v2563
  %v2565 = vsel %vm291, %v2564, 0.0
  %2566 = vadd.xlane.f32.xlu0 %v2565
  %v2567 = vpop.xlane.xlu0 %2566
  %v2568 = vrcp.pop %v2567
  %v2569 = vmul.f32 %v2564, %v2568
  %2570 = vrot.lane.b32.xlu0 %v2138, 48
  %v2571 = vpop.permute.xlu0 %2570
  %v2574 = vsel %vm291, %v2569, 0
  %2576 = vmatprep.subr.mxu0 0.0
  %2577 = vmatpush1.msra.mxu0 0.0
  %2578 = vmatprep.subr.mxu0 0.0
  %2579 = vmatpush1.msra.mxu0 0.0
  %2580 = vmatprep.subr.mxu0 0.0
  %2581 = vmatpush1.msra.mxu0 0.0
  %2582 = vmatprep.subr.mxu0 0.0
  %2583 = vmatpush1.msra.mxu0 0.0
  %2584 = vmatprep.subr.mxu0 0.0
  %2585 = vmatpush1.msra.mxu0 0.0
  %2586 = vmatprep.subr.mxu0 0.0
  %2587 = vmatpush1.msra.mxu0 0.0
  %2588 = vmatprep.subr.mxu0 0.0
  %2589 = vmatpush1.msra.mxu0 0.0
  %2590 = vmatprep.subr.mxu0 0.0
  %2591 = vmatpush1.msra.mxu0 0.0
  %2592 = vmatprep.subr.mxu0 0.0
  %2593 = vmatpush1.msra.mxu0 0.0
  %2594 = vmatprep.subr.mxu0 0.0
  %2595 = vmatpush1.msra.mxu0 0.0
  %2596 = vmatprep.subr.mxu0 0.0
  %2597 = vmatpush1.msra.mxu0 0.0
  %2598 = vmatprep.subr.mxu0 0.0
  %2599 = vmatpush1.msra.mxu0 0.0
  %2600 = vmatprep.subr.mxu0 0.0
  %2601 = vmatpush1.msra.mxu0 0.0
  %2602 = vmatprep.subr.mxu0 0.0
  %2603 = vmatpush1.msra.mxu0 0.0
  %2604 = vmatprep.subr.mxu0 0.0
  %2605 = vmatpush1.msra.mxu0 0.0
  %2606 = vmatprep.subr.mxu0 0.0
  %2607 = vmatpush1.msra.mxu0 %v2571
  %2608 = vmatprep.subr.mxu0 0.0
  %2609 = vmatpush2.msra.mxu0 0.0
  %2610 = vmatprep.subr.mxu0 0.0
  %2611 = vmatpush2.msra.mxu0 0.0
  %2612 = vmatprep.subr.mxu0 0.0
  %2613 = vmatpush2.msra.mxu0 0.0
  %2614 = vmatprep.subr.mxu0 0.0
  %2615 = vmatpush2.msra.mxu0 0.0
  %2616 = vmatprep.subr.mxu0 0.0
  %2617 = vmatpush2.msra.mxu0 0.0
  %2618 = vmatprep.subr.mxu0 0.0
  %2619 = vmatpush2.msra.mxu0 0.0
  %2620 = vmatprep.subr.mxu0 0.0
  %2621 = vmatpush2.msra.mxu0 0.0
  %2622 = vmatprep.subr.mxu0 0.0
  %2623 = vmatpush2.msra.mxu0 0.0
  %2624 = vmatprep.subr.mxu0 0.0
  %2625 = vmatpush2.msra.mxu0 0.0
  %2626 = vmatprep.subr.mxu0 0.0
  %2627 = vmatpush2.msra.mxu0 0.0
  %2628 = vmatprep.subr.mxu0 0.0
  %2629 = vmatpush2.msra.mxu0 0.0
  %2630 = vmatprep.subr.mxu0 0.0
  %2631 = vmatpush2.msra.mxu0 0.0
  %2632 = vmatprep.subr.mxu0 0.0
  %2633 = vmatpush2.msra.mxu0 0.0
  %2634 = vmatprep.subr.mxu0 0.0
  %2635 = vmatpush2.msra.mxu0 0.0
  %2636 = vmatprep.subr.mxu0 0.0
  %2637 = vmatpush2.msra.mxu0 0.0
  %2638 = vmatprep.subr.mxu0 0.0
  %2639 = vmatpush2.msra.mxu0 0.0
  %2640 = vmatprep.mubr.f32.mxu0 0.0
  %2641 = vmatmul.mubr.f32.gmra.mxu0 %v2574
  %v2642 = vpop.f32.mrf.mxu0
  %v2643 = vadd.f32 0.0, %v2642
  %v2644 = vpop.f32.mrf.mxu0
  %2645 = vdwg.mxu0
  %2646 = vrot.lane.b32.xlu0 %v2138, 104
  %v2647 = vpop.permute.xlu0 %2646
  %2648 = vrot.lane.b32.xlu0 %v2138, 72
  %v2649 = vpop.permute.xlu0 %2648
  %v2650 = vsel %vm291, %v2647, 0
  %v2652 = vsel %vm291, %v2649, 0
  %2654 = vmatprep.subr.mxu0 0.0
  %2655 = vmatpush1.xpose.msra.mxu0 0.0
  %2656 = vmatprep.subr.mxu0 0.0
  %2657 = vmatpush1.xpose.msra.mxu0 0.0
  %2658 = vmatprep.subr.mxu0 0.0
  %2659 = vmatpush1.xpose.msra.mxu0 0.0
  %2660 = vmatprep.subr.mxu0 0.0
  %2661 = vmatpush1.xpose.msra.mxu0 0.0
  %2662 = vmatprep.subr.mxu0 0.0
  %2663 = vmatpush1.xpose.msra.mxu0 0.0
  %2664 = vmatprep.subr.mxu0 0.0
  %2665 = vmatpush1.xpose.msra.mxu0 0.0
  %2666 = vmatprep.subr.mxu0 0.0
  %2667 = vmatpush1.xpose.msra.mxu0 0.0
  %2668 = vmatprep.subr.mxu0 0.0
  %2669 = vmatpush1.xpose.msra.mxu0 0.0
  %2670 = vmatprep.subr.mxu0 0.0
  %2671 = vmatpush1.xpose.msra.mxu0 0.0
  %2672 = vmatprep.subr.mxu0 0.0
  %2673 = vmatpush1.xpose.msra.mxu0 0.0
  %2674 = vmatprep.subr.mxu0 0.0
  %2675 = vmatpush1.xpose.msra.mxu0 0.0
  %2676 = vmatprep.subr.mxu0 0.0
  %2677 = vmatpush1.xpose.msra.mxu0 0.0
  %2678 = vmatprep.subr.mxu0 0.0
  %2679 = vmatpush1.xpose.msra.mxu0 0.0
  %2680 = vmatprep.subr.mxu0 0.0
  %2681 = vmatpush1.xpose.msra.mxu0 0.0
  %2682 = vmatprep.subr.mxu0 0.0
  %2683 = vmatpush1.xpose.msra.mxu0 0.0
  %2684 = vmatprep.subr.mxu0 0.0
  %2685 = vmatpush1.xpose.msra.mxu0 %v2652
  %2686 = vmatprep.subr.mxu0 0.0
  %2687 = vmatpush2.xpose.msra.mxu0 0.0
  %2688 = vmatprep.subr.mxu0 0.0
  %2689 = vmatpush2.xpose.msra.mxu0 0.0
  %2690 = vmatprep.subr.mxu0 0.0
  %2691 = vmatpush2.xpose.msra.mxu0 0.0
  %2692 = vmatprep.subr.mxu0 0.0
  %2693 = vmatpush2.xpose.msra.mxu0 0.0
  %2694 = vmatprep.subr.mxu0 0.0
  %2695 = vmatpush2.xpose.msra.mxu0 0.0
  %2696 = vmatprep.subr.mxu0 0.0
  %2697 = vmatpush2.xpose.msra.mxu0 0.0
  %2698 = vmatprep.subr.mxu0 0.0
  %2699 = vmatpush2.xpose.msra.mxu0 0.0
  %2700 = vmatprep.subr.mxu0 0.0
  %2701 = vmatpush2.xpose.msra.mxu0 0.0
  %2702 = vmatprep.subr.mxu0 0.0
  %2703 = vmatpush2.xpose.msra.mxu0 0.0
  %2704 = vmatprep.subr.mxu0 0.0
  %2705 = vmatpush2.xpose.msra.mxu0 0.0
  %2706 = vmatprep.subr.mxu0 0.0
  %2707 = vmatpush2.xpose.msra.mxu0 0.0
  %2708 = vmatprep.subr.mxu0 0.0
  %2709 = vmatpush2.xpose.msra.mxu0 0.0
  %2710 = vmatprep.subr.mxu0 0.0
  %2711 = vmatpush2.xpose.msra.mxu0 0.0
  %2712 = vmatprep.subr.mxu0 0.0
  %2713 = vmatpush2.xpose.msra.mxu0 0.0
  %2714 = vmatprep.subr.mxu0 0.0
  %2715 = vmatpush2.xpose.msra.mxu0 0.0
  %2716 = vmatprep.subr.mxu0 0.0
  %2717 = vmatpush2.xpose.msra.mxu0 0.0
  %2718 = vmatprep.mubr.f32.mxu0 0.0
  %2719 = vmatmul.mubr.f32.gmra.mxu0 %v2650
  %v2720 = vpop.f32.mrf.mxu0
  %v2721 = vadd.f32 0.0, %v2720
  %v2722 = vpop.f32.mrf.mxu0
  %2723 = vdwg.mxu0
  %v2724 = vmul.f32 %v2721, 0.35355338
  %v2725 = vadd.f32 %v2724, %v370
  %v2726 = vsel %vm291, %v2725, -inf
  %2727 = vmax.xlane.f32.xlu0 %v2726
  %v2728 = vpop.xlane.xlu0 %2727
  %v2729 = vsub.f32 %v2725, %v2728
  %v2730 = vmul.f32 %v2729, 1.442695
  %v2731 = vpow.pop %v2730
  %v2732 = vsel %vm291, %v2731, 0.0
  %2733 = vadd.xlane.f32.xlu0 %v2732
  %v2734 = vpop.xlane.xlu0 %2733
  %v2735 = vrcp.pop %v2734
  %v2736 = vmul.f32 %v2731, %v2735
  %2737 = vrot.lane.b32.xlu0 %v2138, 40
  %v2738 = vpop.permute.xlu0 %2737
  %v2741 = vsel %vm291, %v2736, 0
  %2743 = vmatprep.subr.mxu0 0.0
  %2744 = vmatpush1.msra.mxu0 0.0
  %2745 = vmatprep.subr.mxu0 0.0
  %2746 = vmatpush1.msra.mxu0 0.0
  %2747 = vmatprep.subr.mxu0 0.0
  %2748 = vmatpush1.msra.mxu0 0.0
  %2749 = vmatprep.subr.mxu0 0.0
  %2750 = vmatpush1.msra.mxu0 0.0
  %2751 = vmatprep.subr.mxu0 0.0
  %2752 = vmatpush1.msra.mxu0 0.0
  %2753 = vmatprep.subr.mxu0 0.0
  %2754 = vmatpush1.msra.mxu0 0.0
  %2755 = vmatprep.subr.mxu0 0.0
  %2756 = vmatpush1.msra.mxu0 0.0
  %2757 = vmatprep.subr.mxu0 0.0
  %2758 = vmatpush1.msra.mxu0 0.0
  %2759 = vmatprep.subr.mxu0 0.0
  %2760 = vmatpush1.msra.mxu0 0.0
  %2761 = vmatprep.subr.mxu0 0.0
  %2762 = vmatpush1.msra.mxu0 0.0
  %2763 = vmatprep.subr.mxu0 0.0
  %2764 = vmatpush1.msra.mxu0 0.0
  %2765 = vmatprep.subr.mxu0 0.0
  %2766 = vmatpush1.msra.mxu0 0.0
  %2767 = vmatprep.subr.mxu0 0.0
  %2768 = vmatpush1.msra.mxu0 0.0
  %2769 = vmatprep.subr.mxu0 0.0
  %2770 = vmatpush1.msra.mxu0 0.0
  %2771 = vmatprep.subr.mxu0 0.0
  %2772 = vmatpush1.msra.mxu0 0.0
  %2773 = vmatprep.subr.mxu0 0.0
  %2774 = vmatpush1.msra.mxu0 %v2738
  %2775 = vmatprep.subr.mxu0 0.0
  %2776 = vmatpush2.msra.mxu0 0.0
  %2777 = vmatprep.subr.mxu0 0.0
  %2778 = vmatpush2.msra.mxu0 0.0
  %2779 = vmatprep.subr.mxu0 0.0
  %2780 = vmatpush2.msra.mxu0 0.0
  %2781 = vmatprep.subr.mxu0 0.0
  %2782 = vmatpush2.msra.mxu0 0.0
  %2783 = vmatprep.subr.mxu0 0.0
  %2784 = vmatpush2.msra.mxu0 0.0
  %2785 = vmatprep.subr.mxu0 0.0
  %2786 = vmatpush2.msra.mxu0 0.0
  %2787 = vmatprep.subr.mxu0 0.0
  %2788 = vmatpush2.msra.mxu0 0.0
  %2789 = vmatprep.subr.mxu0 0.0
  %2790 = vmatpush2.msra.mxu0 0.0
  %2791 = vmatprep.subr.mxu0 0.0
  %2792 = vmatpush2.msra.mxu0 0.0
  %2793 = vmatprep.subr.mxu0 0.0
  %2794 = vmatpush2.msra.mxu0 0.0
  %2795 = vmatprep.subr.mxu0 0.0
  %2796 = vmatpush2.msra.mxu0 0.0
  %2797 = vmatprep.subr.mxu0 0.0
  %2798 = vmatpush2.msra.mxu0 0.0
  %2799 = vmatprep.subr.mxu0 0.0
  %2800 = vmatpush2.msra.mxu0 0.0
  %2801 = vmatprep.subr.mxu0 0.0
  %2802 = vmatpush2.msra.mxu0 0.0
  %2803 = vmatprep.subr.mxu0 0.0
  %2804 = vmatpush2.msra.mxu0 0.0
  %2805 = vmatprep.subr.mxu0 0.0
  %2806 = vmatpush2.msra.mxu0 0.0
  %2807 = vmatprep.mubr.f32.mxu0 0.0
  %2808 = vmatmul.mubr.f32.gmra.mxu0 %v2741
  %v2809 = vpop.f32.mrf.mxu0
  %v2810 = vadd.f32 0.0, %v2809
  %v2811 = vpop.f32.mrf.mxu0
  %2812 = vdwg.mxu0
  %2814 = vrot.lane.b32.xlu0 %v2476, 8
  %v2815 = vpop.permute.xlu0 %2814
  %2818 = vrot.lane.b32.xlu0 %v2643, 16
  %v2819 = vpop.permute.xlu0 %2818
  %2822 = vrot.lane.b32.xlu0 %v2810, 24
  %v2823 = vpop.permute.xlu0 %2822
  %v2825 = vsel %vm291, %v2309, %v2815
  %v2826 = vsel %vm973, %v2825, %v2819
  %v2827 = vsel %vm975, %v2826, %v2823
  %2829 = vrot.lane.b32.xlu0 %v2143, 96
  %v2830 = vpop.permute.xlu0 %2829
  %v2831 = vsel %vm291, %v2143, 0
  %v2833 = vsel %vm291, %v2830, 0
  %2835 = vmatprep.subr.mxu0 0.0
  %2836 = vmatpush1.xpose.msra.mxu0 0.0
  %2837 = vmatprep.subr.mxu0 0.0
  %2838 = vmatpush1.xpose.msra.mxu0 0.0
  %2839 = vmatprep.subr.mxu0 0.0
  %2840 = vmatpush1.xpose.msra.mxu0 0.0
  %2841 = vmatprep.subr.mxu0 0.0
  %2842 = vmatpush1.xpose.msra.mxu0 0.0
  %2843 = vmatprep.subr.mxu0 0.0
  %2844 = vmatpush1.xpose.msra.mxu0 0.0
  %2845 = vmatprep.subr.mxu0 0.0
  %2846 = vmatpush1.xpose.msra.mxu0 0.0
  %2847 = vmatprep.subr.mxu0 0.0
  %2848 = vmatpush1.xpose.msra.mxu0 0.0
  %2849 = vmatprep.subr.mxu0 0.0
  %2850 = vmatpush1.xpose.msra.mxu0 0.0
  %2851 = vmatprep.subr.mxu0 0.0
  %2852 = vmatpush1.xpose.msra.mxu0 0.0
  %2853 = vmatprep.subr.mxu0 0.0
  %2854 = vmatpush1.xpose.msra.mxu0 0.0
  %2855 = vmatprep.subr.mxu0 0.0
  %2856 = vmatpush1.xpose.msra.mxu0 0.0
  %2857 = vmatprep.subr.mxu0 0.0
  %2858 = vmatpush1.xpose.msra.mxu0 0.0
  %2859 = vmatprep.subr.mxu0 0.0
  %2860 = vmatpush1.xpose.msra.mxu0 0.0
  %2861 = vmatprep.subr.mxu0 0.0
  %2862 = vmatpush1.xpose.msra.mxu0 0.0
  %2863 = vmatprep.subr.mxu0 0.0
  %2864 = vmatpush1.xpose.msra.mxu0 0.0
  %2865 = vmatprep.subr.mxu0 0.0
  %2866 = vmatpush1.xpose.msra.mxu0 %v2833
  %2867 = vmatprep.subr.mxu0 0.0
  %2868 = vmatpush2.xpose.msra.mxu0 0.0
  %2869 = vmatprep.subr.mxu0 0.0
  %2870 = vmatpush2.xpose.msra.mxu0 0.0
  %2871 = vmatprep.subr.mxu0 0.0
  %2872 = vmatpush2.xpose.msra.mxu0 0.0
  %2873 = vmatprep.subr.mxu0 0.0
  %2874 = vmatpush2.xpose.msra.mxu0 0.0
  %2875 = vmatprep.subr.mxu0 0.0
  %2876 = vmatpush2.xpose.msra.mxu0 0.0
  %2877 = vmatprep.subr.mxu0 0.0
  %2878 = vmatpush2.xpose.msra.mxu0 0.0
  %2879 = vmatprep.subr.mxu0 0.0
  %2880 = vmatpush2.xpose.msra.mxu0 0.0
  %2881 = vmatprep.subr.mxu0 0.0
  %2882 = vmatpush2.xpose.msra.mxu0 0.0
  %2883 = vmatprep.subr.mxu0 0.0
  %2884 = vmatpush2.xpose.msra.mxu0 0.0
  %2885 = vmatprep.subr.mxu0 0.0
  %2886 = vmatpush2.xpose.msra.mxu0 0.0
  %2887 = vmatprep.subr.mxu0 0.0
  %2888 = vmatpush2.xpose.msra.mxu0 0.0
  %2889 = vmatprep.subr.mxu0 0.0
  %2890 = vmatpush2.xpose.msra.mxu0 0.0
  %2891 = vmatprep.subr.mxu0 0.0
  %2892 = vmatpush2.xpose.msra.mxu0 0.0
  %2893 = vmatprep.subr.mxu0 0.0
  %2894 = vmatpush2.xpose.msra.mxu0 0.0
  %2895 = vmatprep.subr.mxu0 0.0
  %2896 = vmatpush2.xpose.msra.mxu0 0.0
  %2897 = vmatprep.subr.mxu0 0.0
  %2898 = vmatpush2.xpose.msra.mxu0 0.0
  %2899 = vmatprep.mubr.f32.mxu0 0.0
  %2900 = vmatmul.mubr.f32.gmra.mxu0 %v2831
  %v2901 = vpop.f32.mrf.mxu0
  %v2902 = vadd.f32 0.0, %v2901
  %v2903 = vpop.f32.mrf.mxu0
  %2904 = vdwg.mxu0
  %v2905 = vmul.f32 %v2902, 0.35355338
  %v2906 = vadd.f32 %v2905, %v1058
  %v2907 = vsel %vm291, %v2906, -inf
  %2908 = vmax.xlane.f32.xlu0 %v2907
  %v2909 = vpop.xlane.xlu0 %2908
  %v2910 = vsub.f32 %v2906, %v2909
  %v2911 = vmul.f32 %v2910, 1.442695
  %v2912 = vpow.pop %v2911
  %v2913 = vsel %vm291, %v2912, 0.0
  %2914 = vadd.xlane.f32.xlu0 %v2913
  %v2915 = vpop.xlane.xlu0 %2914
  %v2916 = vrcp.pop %v2915
  %v2917 = vmul.f32 %v2912, %v2916
  %2918 = vrot.lane.b32.xlu0 %v2143, 64
  %v2919 = vpop.permute.xlu0 %2918
  %v2922 = vsel %vm291, %v2917, 0
  %2924 = vmatprep.subr.mxu0 0.0
  %2925 = vmatpush1.msra.mxu0 0.0
  %2926 = vmatprep.subr.mxu0 0.0
  %2927 = vmatpush1.msra.mxu0 0.0
  %2928 = vmatprep.subr.mxu0 0.0
  %2929 = vmatpush1.msra.mxu0 0.0
  %2930 = vmatprep.subr.mxu0 0.0
  %2931 = vmatpush1.msra.mxu0 0.0
  %2932 = vmatprep.subr.mxu0 0.0
  %2933 = vmatpush1.msra.mxu0 0.0
  %2934 = vmatprep.subr.mxu0 0.0
  %2935 = vmatpush1.msra.mxu0 0.0
  %2936 = vmatprep.subr.mxu0 0.0
  %2937 = vmatpush1.msra.mxu0 0.0
  %2938 = vmatprep.subr.mxu0 0.0
  %2939 = vmatpush1.msra.mxu0 0.0
  %2940 = vmatprep.subr.mxu0 0.0
  %2941 = vmatpush1.msra.mxu0 0.0
  %2942 = vmatprep.subr.mxu0 0.0
  %2943 = vmatpush1.msra.mxu0 0.0
  %2944 = vmatprep.subr.mxu0 0.0
  %2945 = vmatpush1.msra.mxu0 0.0
  %2946 = vmatprep.subr.mxu0 0.0
  %2947 = vmatpush1.msra.mxu0 0.0
  %2948 = vmatprep.subr.mxu0 0.0
  %2949 = vmatpush1.msra.mxu0 0.0
  %2950 = vmatprep.subr.mxu0 0.0
  %2951 = vmatpush1.msra.mxu0 0.0
  %2952 = vmatprep.subr.mxu0 0.0
  %2953 = vmatpush1.msra.mxu0 0.0
  %2954 = vmatprep.subr.mxu0 0.0
  %2955 = vmatpush1.msra.mxu0 %v2919
  %2956 = vmatprep.subr.mxu0 0.0
  %2957 = vmatpush2.msra.mxu0 0.0
  %2958 = vmatprep.subr.mxu0 0.0
  %2959 = vmatpush2.msra.mxu0 0.0
  %2960 = vmatprep.subr.mxu0 0.0
  %2961 = vmatpush2.msra.mxu0 0.0
  %2962 = vmatprep.subr.mxu0 0.0
  %2963 = vmatpush2.msra.mxu0 0.0
  %2964 = vmatprep.subr.mxu0 0.0
  %2965 = vmatpush2.msra.mxu0 0.0
  %2966 = vmatprep.subr.mxu0 0.0
  %2967 = vmatpush2.msra.mxu0 0.0
  %2968 = vmatprep.subr.mxu0 0.0
  %2969 = vmatpush2.msra.mxu0 0.0
  %2970 = vmatprep.subr.mxu0 0.0
  %2971 = vmatpush2.msra.mxu0 0.0
  %2972 = vmatprep.subr.mxu0 0.0
  %2973 = vmatpush2.msra.mxu0 0.0
  %2974 = vmatprep.subr.mxu0 0.0
  %2975 = vmatpush2.msra.mxu0 0.0
  %2976 = vmatprep.subr.mxu0 0.0
  %2977 = vmatpush2.msra.mxu0 0.0
  %2978 = vmatprep.subr.mxu0 0.0
  %2979 = vmatpush2.msra.mxu0 0.0
  %2980 = vmatprep.subr.mxu0 0.0
  %2981 = vmatpush2.msra.mxu0 0.0
  %2982 = vmatprep.subr.mxu0 0.0
  %2983 = vmatpush2.msra.mxu0 0.0
  %2984 = vmatprep.subr.mxu0 0.0
  %2985 = vmatpush2.msra.mxu0 0.0
  %2986 = vmatprep.subr.mxu0 0.0
  %2987 = vmatpush2.msra.mxu0 0.0
  %2988 = vmatprep.mubr.f32.mxu0 0.0
  %2989 = vmatmul.mubr.f32.gmra.mxu0 %v2922
  %v2990 = vpop.f32.mrf.mxu0
  %v2991 = vadd.f32 0.0, %v2990
  %v2992 = vpop.f32.mrf.mxu0
  %2993 = vdwg.mxu0
  %2994 = vrot.lane.b32.xlu0 %v2143, 120
  %v2995 = vpop.permute.xlu0 %2994
  %2996 = vrot.lane.b32.xlu0 %v2143, 88
  %v2997 = vpop.permute.xlu0 %2996
  %v2998 = vsel %vm291, %v2995, 0
  %v3000 = vsel %vm291, %v2997, 0
  %3002 = vmatprep.subr.mxu0 0.0
  %3003 = vmatpush1.xpose.msra.mxu0 0.0
  %3004 = vmatprep.subr.mxu0 0.0
  %3005 = vmatpush1.xpose.msra.mxu0 0.0
  %3006 = vmatprep.subr.mxu0 0.0
  %3007 = vmatpush1.xpose.msra.mxu0 0.0
  %3008 = vmatprep.subr.mxu0 0.0
  %3009 = vmatpush1.xpose.msra.mxu0 0.0
  %3010 = vmatprep.subr.mxu0 0.0
  %3011 = vmatpush1.xpose.msra.mxu0 0.0
  %3012 = vmatprep.subr.mxu0 0.0
  %3013 = vmatpush1.xpose.msra.mxu0 0.0
  %3014 = vmatprep.subr.mxu0 0.0
  %3015 = vmatpush1.xpose.msra.mxu0 0.0
  %3016 = vmatprep.subr.mxu0 0.0
  %3017 = vmatpush1.xpose.msra.mxu0 0.0
  %3018 = vmatprep.subr.mxu0 0.0
  %3019 = vmatpush1.xpose.msra.mxu0 0.0
  %3020 = vmatprep.subr.mxu0 0.0
  %3021 = vmatpush1.xpose.msra.mxu0 0.0
  %3022 = vmatprep.subr.mxu0 0.0
  %3023 = vmatpush1.xpose.msra.mxu0 0.0
  %3024 = vmatprep.subr.mxu0 0.0
  %3025 = vmatpush1.xpose.msra.mxu0 0.0
  %3026 = vmatprep.subr.mxu0 0.0
  %3027 = vmatpush1.xpose.msra.mxu0 0.0
  %3028 = vmatprep.subr.mxu0 0.0
  %3029 = vmatpush1.xpose.msra.mxu0 0.0
  %3030 = vmatprep.subr.mxu0 0.0
  %3031 = vmatpush1.xpose.msra.mxu0 0.0
  %3032 = vmatprep.subr.mxu0 0.0
  %3033 = vmatpush1.xpose.msra.mxu0 %v3000
  %3034 = vmatprep.subr.mxu0 0.0
  %3035 = vmatpush2.xpose.msra.mxu0 0.0
  %3036 = vmatprep.subr.mxu0 0.0
  %3037 = vmatpush2.xpose.msra.mxu0 0.0
  %3038 = vmatprep.subr.mxu0 0.0
  %3039 = vmatpush2.xpose.msra.mxu0 0.0
  %3040 = vmatprep.subr.mxu0 0.0
  %3041 = vmatpush2.xpose.msra.mxu0 0.0
  %3042 = vmatprep.subr.mxu0 0.0
  %3043 = vmatpush2.xpose.msra.mxu0 0.0
  %3044 = vmatprep.subr.mxu0 0.0
  %3045 = vmatpush2.xpose.msra.mxu0 0.0
  %3046 = vmatprep.subr.mxu0 0.0
  %3047 = vmatpush2.xpose.msra.mxu0 0.0
  %3048 = vmatprep.subr.mxu0 0.0
  %3049 = vmatpush2.xpose.msra.mxu0 0.0
  %3050 = vmatprep.subr.mxu0 0.0
  %3051 = vmatpush2.xpose.msra.mxu0 0.0
  %3052 = vmatprep.subr.mxu0 0.0
  %3053 = vmatpush2.xpose.msra.mxu0 0.0
  %3054 = vmatprep.subr.mxu0 0.0
  %3055 = vmatpush2.xpose.msra.mxu0 0.0
  %3056 = vmatprep.subr.mxu0 0.0
  %3057 = vmatpush2.xpose.msra.mxu0 0.0
  %3058 = vmatprep.subr.mxu0 0.0
  %3059 = vmatpush2.xpose.msra.mxu0 0.0
  %3060 = vmatprep.subr.mxu0 0.0
  %3061 = vmatpush2.xpose.msra.mxu0 0.0
  %3062 = vmatprep.subr.mxu0 0.0
  %3063 = vmatpush2.xpose.msra.mxu0 0.0
  %3064 = vmatprep.subr.mxu0 0.0
  %3065 = vmatpush2.xpose.msra.mxu0 0.0
  %3066 = vmatprep.mubr.f32.mxu0 0.0
  %3067 = vmatmul.mubr.f32.gmra.mxu0 %v2998
  %v3068 = vpop.f32.mrf.mxu0
  %v3069 = vadd.f32 0.0, %v3068
  %v3070 = vpop.f32.mrf.mxu0
  %3071 = vdwg.mxu0
  %v3072 = vmul.f32 %v3069, 0.35355338
  %v3073 = vadd.f32 %v3072, %v1058
  %v3074 = vsel %vm291, %v3073, -inf
  %3075 = vmax.xlane.f32.xlu0 %v3074
  %v3076 = vpop.xlane.xlu0 %3075
  %v3077 = vsub.f32 %v3073, %v3076
  %v3078 = vmul.f32 %v3077, 1.442695
  %v3079 = vpow.pop %v3078
  %v3080 = vsel %vm291, %v3079, 0.0
  %3081 = vadd.xlane.f32.xlu0 %v3080
  %v3082 = vpop.xlane.xlu0 %3081
  %v3083 = vrcp.pop %v3082
  %v3084 = vmul.f32 %v3079, %v3083
  %3085 = vrot.lane.b32.xlu0 %v2143, 56
  %v3086 = vpop.permute.xlu0 %3085
  %v3089 = vsel %vm291, %v3084, 0
  %3091 = vmatprep.subr.mxu0 0.0
  %3092 = vmatpush1.msra.mxu0 0.0
  %3093 = vmatprep.subr.mxu0 0.0
  %3094 = vmatpush1.msra.mxu0 0.0
  %3095 = vmatprep.subr.mxu0 0.0
  %3096 = vmatpush1.msra.mxu0 0.0
  %3097 = vmatprep.subr.mxu0 0.0
  %3098 = vmatpush1.msra.mxu0 0.0
  %3099 = vmatprep.subr.mxu0 0.0
  %3100 = vmatpush1.msra.mxu0 0.0
  %3101 = vmatprep.subr.mxu0 0.0
  %3102 = vmatpush1.msra.mxu0 0.0
  %3103 = vmatprep.subr.mxu0 0.0
  %3104 = vmatpush1.msra.mxu0 0.0
  %3105 = vmatprep.subr.mxu0 0.0
  %3106 = vmatpush1.msra.mxu0 0.0
  %3107 = vmatprep.subr.mxu0 0.0
  %3108 = vmatpush1.msra.mxu0 0.0
  %3109 = vmatprep.subr.mxu0 0.0
  %3110 = vmatpush1.msra.mxu0 0.0
  %3111 = vmatprep.subr.mxu0 0.0
  %3112 = vmatpush1.msra.mxu0 0.0
  %3113 = vmatprep.subr.mxu0 0.0
  %3114 = vmatpush1.msra.mxu0 0.0
  %3115 = vmatprep.subr.mxu0 0.0
  %3116 = vmatpush1.msra.mxu0 0.0
  %3117 = vmatprep.subr.mxu0 0.0
  %3118 = vmatpush1.msra.mxu0 0.0
  %3119 = vmatprep.subr.mxu0 0.0
  %3120 = vmatpush1.msra.mxu0 0.0
  %3121 = vmatprep.subr.mxu0 0.0
  %3122 = vmatpush1.msra.mxu0 %v3086
  %3123 = vmatprep.subr.mxu0 0.0
  %3124 = vmatpush2.msra.mxu0 0.0
  %3125 = vmatprep.subr.mxu0 0.0
  %3126 = vmatpush2.msra.mxu0 0.0
  %3127 = vmatprep.subr.mxu0 0.0
  %3128 = vmatpush2.msra.mxu0 0.0
  %3129 = vmatprep.subr.mxu0 0.0
  %3130 = vmatpush2.msra.mxu0 0.0
  %3131 = vmatprep.subr.mxu0 0.0
  %3132 = vmatpush2.msra.mxu0 0.0
  %3133 = vmatprep.subr.mxu0 0.0
  %3134 = vmatpush2.msra.mxu0 0.0
  %3135 = vmatprep.subr.mxu0 0.0
  %3136 = vmatpush2.msra.mxu0 0.0
  %3137 = vmatprep.subr.mxu0 0.0
  %3138 = vmatpush2.msra.mxu0 0.0
  %3139 = vmatprep.subr.mxu0 0.0
  %3140 = vmatpush2.msra.mxu0 0.0
  %3141 = vmatprep.subr.mxu0 0.0
  %3142 = vmatpush2.msra.mxu0 0.0
  %3143 = vmatprep.subr.mxu0 0.0
  %3144 = vmatpush2.msra.mxu0 0.0
  %3145 = vmatprep.subr.mxu0 0.0
  %3146 = vmatpush2.msra.mxu0 0.0
  %3147 = vmatprep.subr.mxu0 0.0
  %3148 = vmatpush2.msra.mxu0 0.0
  %3149 = vmatprep.subr.mxu0 0.0
  %3150 = vmatpush2.msra.mxu0 0.0
  %3151 = vmatprep.subr.mxu0 0.0
  %3152 = vmatpush2.msra.mxu0 0.0
  %3153 = vmatprep.subr.mxu0 0.0
  %3154 = vmatpush2.msra.mxu0 0.0
  %3155 = vmatprep.mubr.f32.mxu0 0.0
  %3156 = vmatmul.mubr.f32.gmra.mxu0 %v3089
  %v3157 = vpop.f32.mrf.mxu0
  %v3158 = vadd.f32 0.0, %v3157
  %v3159 = vpop.f32.mrf.mxu0
  %3160 = vdwg.mxu0
  %3161 = vrot.lane.b32.xlu0 %v2143, 112
  %v3162 = vpop.permute.xlu0 %3161
  %3163 = vrot.lane.b32.xlu0 %v2143, 80
  %v3164 = vpop.permute.xlu0 %3163
  %v3165 = vsel %vm291, %v3162, 0
  %v3167 = vsel %vm291, %v3164, 0
  %3169 = vmatprep.subr.mxu0 0.0
  %3170 = vmatpush1.xpose.msra.mxu0 0.0
  %3171 = vmatprep.subr.mxu0 0.0
  %3172 = vmatpush1.xpose.msra.mxu0 0.0
  %3173 = vmatprep.subr.mxu0 0.0
  %3174 = vmatpush1.xpose.msra.mxu0 0.0
  %3175 = vmatprep.subr.mxu0 0.0
  %3176 = vmatpush1.xpose.msra.mxu0 0.0
  %3177 = vmatprep.subr.mxu0 0.0
  %3178 = vmatpush1.xpose.msra.mxu0 0.0
  %3179 = vmatprep.subr.mxu0 0.0
  %3180 = vmatpush1.xpose.msra.mxu0 0.0
  %3181 = vmatprep.subr.mxu0 0.0
  %3182 = vmatpush1.xpose.msra.mxu0 0.0
  %3183 = vmatprep.subr.mxu0 0.0
  %3184 = vmatpush1.xpose.msra.mxu0 0.0
  %3185 = vmatprep.subr.mxu0 0.0
  %3186 = vmatpush1.xpose.msra.mxu0 0.0
  %3187 = vmatprep.subr.mxu0 0.0
  %3188 = vmatpush1.xpose.msra.mxu0 0.0
  %3189 = vmatprep.subr.mxu0 0.0
  %3190 = vmatpush1.xpose.msra.mxu0 0.0
  %3191 = vmatprep.subr.mxu0 0.0
  %3192 = vmatpush1.xpose.msra.mxu0 0.0
  %3193 = vmatprep.subr.mxu0 0.0
  %3194 = vmatpush1.xpose.msra.mxu0 0.0
  %3195 = vmatprep.subr.mxu0 0.0
  %3196 = vmatpush1.xpose.msra.mxu0 0.0
  %3197 = vmatprep.subr.mxu0 0.0
  %3198 = vmatpush1.xpose.msra.mxu0 0.0
  %3199 = vmatprep.subr.mxu0 0.0
  %3200 = vmatpush1.xpose.msra.mxu0 %v3167
  %3201 = vmatprep.subr.mxu0 0.0
  %3202 = vmatpush2.xpose.msra.mxu0 0.0
  %3203 = vmatprep.subr.mxu0 0.0
  %3204 = vmatpush2.xpose.msra.mxu0 0.0
  %3205 = vmatprep.subr.mxu0 0.0
  %3206 = vmatpush2.xpose.msra.mxu0 0.0
  %3207 = vmatprep.subr.mxu0 0.0
  %3208 = vmatpush2.xpose.msra.mxu0 0.0
  %3209 = vmatprep.subr.mxu0 0.0
  %3210 = vmatpush2.xpose.msra.mxu0 0.0
  %3211 = vmatprep.subr.mxu0 0.0
  %3212 = vmatpush2.xpose.msra.mxu0 0.0
  %3213 = vmatprep.subr.mxu0 0.0
  %3214 = vmatpush2.xpose.msra.mxu0 0.0
  %3215 = vmatprep.subr.mxu0 0.0
  %3216 = vmatpush2.xpose.msra.mxu0 0.0
  %3217 = vmatprep.subr.mxu0 0.0
  %3218 = vmatpush2.xpose.msra.mxu0 0.0
  %3219 = vmatprep.subr.mxu0 0.0
  %3220 = vmatpush2.xpose.msra.mxu0 0.0
  %3221 = vmatprep.subr.mxu0 0.0
  %3222 = vmatpush2.xpose.msra.mxu0 0.0
  %3223 = vmatprep.subr.mxu0 0.0
  %3224 = vmatpush2.xpose.msra.mxu0 0.0
  %3225 = vmatprep.subr.mxu0 0.0
  %3226 = vmatpush2.xpose.msra.mxu0 0.0
  %3227 = vmatprep.subr.mxu0 0.0
  %3228 = vmatpush2.xpose.msra.mxu0 0.0
  %3229 = vmatprep.subr.mxu0 0.0
  %3230 = vmatpush2.xpose.msra.mxu0 0.0
  %3231 = vmatprep.subr.mxu0 0.0
  %3232 = vmatpush2.xpose.msra.mxu0 0.0
  %3233 = vmatprep.mubr.f32.mxu0 0.0
  %3234 = vmatmul.mubr.f32.gmra.mxu0 %v3165
  %v3235 = vpop.f32.mrf.mxu0
  %v3236 = vadd.f32 0.0, %v3235
  %v3237 = vpop.f32.mrf.mxu0
  %3238 = vdwg.mxu0
  %v3239 = vmul.f32 %v3236, 0.35355338
  %v3240 = vadd.f32 %v3239, %v1058
  %v3241 = vsel %vm291, %v3240, -inf
  %3242 = vmax.xlane.f32.xlu0 %v3241
  %v3243 = vpop.xlane.xlu0 %3242
  %v3244 = vsub.f32 %v3240, %v3243
  %v3245 = vmul.f32 %v3244, 1.442695
  %v3246 = vpow.pop %v3245
  %v3247 = vsel %vm291, %v3246, 0.0
  %3248 = vadd.xlane.f32.xlu0 %v3247
  %v3249 = vpop.xlane.xlu0 %3248
  %v3250 = vrcp.pop %v3249
  %v3251 = vmul.f32 %v3246, %v3250
  %3252 = vrot.lane.b32.xlu0 %v2143, 48
  %v3253 = vpop.permute.xlu0 %3252
  %v3256 = vsel %vm291, %v3251, 0
  %3258 = vmatprep.subr.mxu0 0.0
  %3259 = vmatpush1.msra.mxu0 0.0
  %3260 = vmatprep.subr.mxu0 0.0
  %3261 = vmatpush1.msra.mxu0 0.0
  %3262 = vmatprep.subr.mxu0 0.0
  %3263 = vmatpush1.msra.mxu0 0.0
  %3264 = vmatprep.subr.mxu0 0.0
  %3265 = vmatpush1.msra.mxu0 0.0
  %3266 = vmatprep.subr.mxu0 0.0
  %3267 = vmatpush1.msra.mxu0 0.0
  %3268 = vmatprep.subr.mxu0 0.0
  %3269 = vmatpush1.msra.mxu0 0.0
  %3270 = vmatprep.subr.mxu0 0.0
  %3271 = vmatpush1.msra.mxu0 0.0
  %3272 = vmatprep.subr.mxu0 0.0
  %3273 = vmatpush1.msra.mxu0 0.0
  %3274 = vmatprep.subr.mxu0 0.0
  %3275 = vmatpush1.msra.mxu0 0.0
  %3276 = vmatprep.subr.mxu0 0.0
  %3277 = vmatpush1.msra.mxu0 0.0
  %3278 = vmatprep.subr.mxu0 0.0
  %3279 = vmatpush1.msra.mxu0 0.0
  %3280 = vmatprep.subr.mxu0 0.0
  %3281 = vmatpush1.msra.mxu0 0.0
  %3282 = vmatprep.subr.mxu0 0.0
  %3283 = vmatpush1.msra.mxu0 0.0
  %3284 = vmatprep.subr.mxu0 0.0
  %3285 = vmatpush1.msra.mxu0 0.0
  %3286 = vmatprep.subr.mxu0 0.0
  %3287 = vmatpush1.msra.mxu0 0.0
  %3288 = vmatprep.subr.mxu0 0.0
  %3289 = vmatpush1.msra.mxu0 %v3253
  %3290 = vmatprep.subr.mxu0 0.0
  %3291 = vmatpush2.msra.mxu0 0.0
  %3292 = vmatprep.subr.mxu0 0.0
  %3293 = vmatpush2.msra.mxu0 0.0
  %3294 = vmatprep.subr.mxu0 0.0
  %3295 = vmatpush2.msra.mxu0 0.0
  %3296 = vmatprep.subr.mxu0 0.0
  %3297 = vmatpush2.msra.mxu0 0.0
  %3298 = vmatprep.subr.mxu0 0.0
  %3299 = vmatpush2.msra.mxu0 0.0
  %3300 = vmatprep.subr.mxu0 0.0
  %3301 = vmatpush2.msra.mxu0 0.0
  %3302 = vmatprep.subr.mxu0 0.0
  %3303 = vmatpush2.msra.mxu0 0.0
  %3304 = vmatprep.subr.mxu0 0.0
  %3305 = vmatpush2.msra.mxu0 0.0
  %3306 = vmatprep.subr.mxu0 0.0
  %3307 = vmatpush2.msra.mxu0 0.0
  %3308 = vmatprep.subr.mxu0 0.0
  %3309 = vmatpush2.msra.mxu0 0.0
  %3310 = vmatprep.subr.mxu0 0.0
  %3311 = vmatpush2.msra.mxu0 0.0
  %3312 = vmatprep.subr.mxu0 0.0
  %3313 = vmatpush2.msra.mxu0 0.0
  %3314 = vmatprep.subr.mxu0 0.0
  %3315 = vmatpush2.msra.mxu0 0.0
  %3316 = vmatprep.subr.mxu0 0.0
  %3317 = vmatpush2.msra.mxu0 0.0
  %3318 = vmatprep.subr.mxu0 0.0
  %3319 = vmatpush2.msra.mxu0 0.0
  %3320 = vmatprep.subr.mxu0 0.0
  %3321 = vmatpush2.msra.mxu0 0.0
  %3322 = vmatprep.mubr.f32.mxu0 0.0
  %3323 = vmatmul.mubr.f32.gmra.mxu0 %v3256
  %v3324 = vpop.f32.mrf.mxu0
  %v3325 = vadd.f32 0.0, %v3324
  %v3326 = vpop.f32.mrf.mxu0
  %3327 = vdwg.mxu0
  %3328 = vrot.lane.b32.xlu0 %v2143, 104
  %v3329 = vpop.permute.xlu0 %3328
  %3330 = vrot.lane.b32.xlu0 %v2143, 72
  %v3331 = vpop.permute.xlu0 %3330
  %v3332 = vsel %vm291, %v3329, 0
  %v3334 = vsel %vm291, %v3331, 0
  %3336 = vmatprep.subr.mxu0 0.0
  %3337 = vmatpush1.xpose.msra.mxu0 0.0
  %3338 = vmatprep.subr.mxu0 0.0
  %3339 = vmatpush1.xpose.msra.mxu0 0.0
  %3340 = vmatprep.subr.mxu0 0.0
  %3341 = vmatpush1.xpose.msra.mxu0 0.0
  %3342 = vmatprep.subr.mxu0 0.0
  %3343 = vmatpush1.xpose.msra.mxu0 0.0
  %3344 = vmatprep.subr.mxu0 0.0
  %3345 = vmatpush1.xpose.msra.mxu0 0.0
  %3346 = vmatprep.subr.mxu0 0.0
  %3347 = vmatpush1.xpose.msra.mxu0 0.0
  %3348 = vmatprep.subr.mxu0 0.0
  %3349 = vmatpush1.xpose.msra.mxu0 0.0
  %3350 = vmatprep.subr.mxu0 0.0
  %3351 = vmatpush1.xpose.msra.mxu0 0.0
  %3352 = vmatprep.subr.mxu0 0.0
  %3353 = vmatpush1.xpose.msra.mxu0 0.0
  %3354 = vmatprep.subr.mxu0 0.0
  %3355 = vmatpush1.xpose.msra.mxu0 0.0
  %3356 = vmatprep.subr.mxu0 0.0
  %3357 = vmatpush1.xpose.msra.mxu0 0.0
  %3358 = vmatprep.subr.mxu0 0.0
  %3359 = vmatpush1.xpose.msra.mxu0 0.0
  %3360 = vmatprep.subr.mxu0 0.0
  %3361 = vmatpush1.xpose.msra.mxu0 0.0
  %3362 = vmatprep.subr.mxu0 0.0
  %3363 = vmatpush1.xpose.msra.mxu0 0.0
  %3364 = vmatprep.subr.mxu0 0.0
  %3365 = vmatpush1.xpose.msra.mxu0 0.0
  %3366 = vmatprep.subr.mxu0 0.0
  %3367 = vmatpush1.xpose.msra.mxu0 %v3334
  %3368 = vmatprep.subr.mxu0 0.0
  %3369 = vmatpush2.xpose.msra.mxu0 0.0
  %3370 = vmatprep.subr.mxu0 0.0
  %3371 = vmatpush2.xpose.msra.mxu0 0.0
  %3372 = vmatprep.subr.mxu0 0.0
  %3373 = vmatpush2.xpose.msra.mxu0 0.0
  %3374 = vmatprep.subr.mxu0 0.0
  %3375 = vmatpush2.xpose.msra.mxu0 0.0
  %3376 = vmatprep.subr.mxu0 0.0
  %3377 = vmatpush2.xpose.msra.mxu0 0.0
  %3378 = vmatprep.subr.mxu0 0.0
  %3379 = vmatpush2.xpose.msra.mxu0 0.0
  %3380 = vmatprep.subr.mxu0 0.0
  %3381 = vmatpush2.xpose.msra.mxu0 0.0
  %3382 = vmatprep.subr.mxu0 0.0
  %3383 = vmatpush2.xpose.msra.mxu0 0.0
  %3384 = vmatprep.subr.mxu0 0.0
  %3385 = vmatpush2.xpose.msra.mxu0 0.0
  %3386 = vmatprep.subr.mxu0 0.0
  %3387 = vmatpush2.xpose.msra.mxu0 0.0
  %3388 = vmatprep.subr.mxu0 0.0
  %3389 = vmatpush2.xpose.msra.mxu0 0.0
  %3390 = vmatprep.subr.mxu0 0.0
  %3391 = vmatpush2.xpose.msra.mxu0 0.0
  %3392 = vmatprep.subr.mxu0 0.0
  %3393 = vmatpush2.xpose.msra.mxu0 0.0
  %3394 = vmatprep.subr.mxu0 0.0
  %3395 = vmatpush2.xpose.msra.mxu0 0.0
  %3396 = vmatprep.subr.mxu0 0.0
  %3397 = vmatpush2.xpose.msra.mxu0 0.0
  %3398 = vmatprep.subr.mxu0 0.0
  %3399 = vmatpush2.xpose.msra.mxu0 0.0
  %3400 = vmatprep.mubr.f32.mxu0 0.0
  %3401 = vmatmul.mubr.f32.gmra.mxu0 %v3332
  %v3402 = vpop.f32.mrf.mxu0
  %v3403 = vadd.f32 0.0, %v3402
  %v3404 = vpop.f32.mrf.mxu0
  %3405 = vdwg.mxu0
  %v3406 = vmul.f32 %v3403, 0.35355338
  %v3407 = vadd.f32 %v3406, %v1058
  %v3408 = vsel %vm291, %v3407, -inf
  %3409 = vmax.xlane.f32.xlu0 %v3408
  %v3410 = vpop.xlane.xlu0 %3409
  %v3411 = vsub.f32 %v3407, %v3410
  %v3412 = vmul.f32 %v3411, 1.442695
  %v3413 = vpow.pop %v3412
  %v3414 = vsel %vm291, %v3413, 0.0
  %3415 = vadd.xlane.f32.xlu0 %v3414
  %v3416 = vpop.xlane.xlu0 %3415
  %v3417 = vrcp.pop %v3416
  %v3418 = vmul.f32 %v3413, %v3417
  %3419 = vrot.lane.b32.xlu0 %v2143, 40
  %v3420 = vpop.permute.xlu0 %3419
  %v3423 = vsel %vm291, %v3418, 0
  %3425 = vmatprep.subr.mxu0 0.0
  %3426 = vmatpush1.msra.mxu0 0.0
  %3427 = vmatprep.subr.mxu0 0.0
  %3428 = vmatpush1.msra.mxu0 0.0
  %3429 = vmatprep.subr.mxu0 0.0
  %3430 = vmatpush1.msra.mxu0 0.0
  %3431 = vmatprep.subr.mxu0 0.0
  %3432 = vmatpush1.msra.mxu0 0.0
  %3433 = vmatprep.subr.mxu0 0.0
  %3434 = vmatpush1.msra.mxu0 0.0
  %3435 = vmatprep.subr.mxu0 0.0
  %3436 = vmatpush1.msra.mxu0 0.0
  %3437 = vmatprep.subr.mxu0 0.0
  %3438 = vmatpush1.msra.mxu0 0.0
  %3439 = vmatprep.subr.mxu0 0.0
  %3440 = vmatpush1.msra.mxu0 0.0
  %3441 = vmatprep.subr.mxu0 0.0
  %3442 = vmatpush1.msra.mxu0 0.0
  %3443 = vmatprep.subr.mxu0 0.0
  %3444 = vmatpush1.msra.mxu0 0.0
  %3445 = vmatprep.subr.mxu0 0.0
  %3446 = vmatpush1.msra.mxu0 0.0
  %3447 = vmatprep.subr.mxu0 0.0
  %3448 = vmatpush1.msra.mxu0 0.0
  %3449 = vmatprep.subr.mxu0 0.0
  %3450 = vmatpush1.msra.mxu0 0.0
  %3451 = vmatprep.subr.mxu0 0.0
  %3452 = vmatpush1.msra.mxu0 0.0
  %3453 = vmatprep.subr.mxu0 0.0
  %3454 = vmatpush1.msra.mxu0 0.0
  %3455 = vmatprep.subr.mxu0 0.0
  %3456 = vmatpush1.msra.mxu0 %v3420
  %3457 = vmatprep.subr.mxu0 0.0
  %3458 = vmatpush2.msra.mxu0 0.0
  %3459 = vmatprep.subr.mxu0 0.0
  %3460 = vmatpush2.msra.mxu0 0.0
  %3461 = vmatprep.subr.mxu0 0.0
  %3462 = vmatpush2.msra.mxu0 0.0
  %3463 = vmatprep.subr.mxu0 0.0
  %3464 = vmatpush2.msra.mxu0 0.0
  %3465 = vmatprep.subr.mxu0 0.0
  %3466 = vmatpush2.msra.mxu0 0.0
  %3467 = vmatprep.subr.mxu0 0.0
  %3468 = vmatpush2.msra.mxu0 0.0
  %3469 = vmatprep.subr.mxu0 0.0
  %3470 = vmatpush2.msra.mxu0 0.0
  %3471 = vmatprep.subr.mxu0 0.0
  %3472 = vmatpush2.msra.mxu0 0.0
  %3473 = vmatprep.subr.mxu0 0.0
  %3474 = vmatpush2.msra.mxu0 0.0
  %3475 = vmatprep.subr.mxu0 0.0
  %3476 = vmatpush2.msra.mxu0 0.0
  %3477 = vmatprep.subr.mxu0 0.0
  %3478 = vmatpush2.msra.mxu0 0.0
  %3479 = vmatprep.subr.mxu0 0.0
  %3480 = vmatpush2.msra.mxu0 0.0
  %3481 = vmatprep.subr.mxu0 0.0
  %3482 = vmatpush2.msra.mxu0 0.0
  %3483 = vmatprep.subr.mxu0 0.0
  %3484 = vmatpush2.msra.mxu0 0.0
  %3485 = vmatprep.subr.mxu0 0.0
  %3486 = vmatpush2.msra.mxu0 0.0
  %3487 = vmatprep.subr.mxu0 0.0
  %3488 = vmatpush2.msra.mxu0 0.0
  %3489 = vmatprep.mubr.f32.mxu0 0.0
  %3490 = vmatmul.mubr.f32.gmra.mxu0 %v3423
  %v3491 = vpop.f32.mrf.mxu0
  %v3492 = vadd.f32 0.0, %v3491
  %v3493 = vpop.f32.mrf.mxu0
  %3494 = vdwg.mxu0
  %3496 = vrot.lane.b32.xlu0 %v3158, 8
  %v3497 = vpop.permute.xlu0 %3496
  %3500 = vrot.lane.b32.xlu0 %v3325, 16
  %v3501 = vpop.permute.xlu0 %3500
  %3504 = vrot.lane.b32.xlu0 %v3492, 24
  %v3505 = vpop.permute.xlu0 %3504
  %v3507 = vsel %vm291, %v2991, %v3497
  %v3508 = vsel %vm973, %v3507, %v3501
  %v3509 = vsel %vm975, %v3508, %v3505
  %v3510 = vld [vmem:[%s39] sm:$0xff]
  %v3511 = vld [vmem:[%s39 + $0x8] sm:$0xff]
  %v3512 = vld [vmem:[%s39 + $0x10] sm:$0xff]
  %v3513 = vld [vmem:[%s39 + $0x18] sm:$0xff]
  %v3514 = vld [vmem:[%s41] sm:$0x1]
  %v3516 = vlaneseq
  %v3517 = vshrl.u32 %v3516, 7
  %v3518 = vsub.s32 0, %v3517
  %v3519 = vrot.slane %v3514, %v3518
  %v3522 = vsel %vm144, %v2827, 0
  %v3525 = vsel %vm144, %v3509, 0
  %3527 = vmatprep.subr.mxu0 0.0
  %3528 = vmatpush1.msra.mxu0 0.0
  %3529 = vmatprep.subr.mxu0 0.0
  %3530 = vmatpush1.msra.mxu0 0.0
  %3531 = vmatprep.subr.mxu0 0.0
  %3532 = vmatpush1.msra.mxu0 0.0
  %3533 = vmatprep.subr.mxu0 0.0
  %3534 = vmatpush1.msra.mxu0 0.0
  %3535 = vmatprep.subr.mxu0 0.0
  %3536 = vmatpush1.msra.mxu0 0.0
  %3537 = vmatprep.subr.mxu0 0.0
  %3538 = vmatpush1.msra.mxu0 0.0
  %3539 = vmatprep.subr.mxu0 0.0
  %3540 = vmatpush1.msra.mxu0 0.0
  %3541 = vmatprep.subr.mxu0 0.0
  %3542 = vmatpush1.msra.mxu0 0.0
  %3543 = vmatprep.subr.mxu0 0.0
  %3544 = vmatpush1.msra.mxu0 0.0
  %3545 = vmatprep.subr.mxu0 0.0
  %3546 = vmatpush1.msra.mxu0 0.0
  %3547 = vmatprep.subr.mxu0 0.0
  %3548 = vmatpush1.msra.mxu0 0.0
  %3549 = vmatprep.subr.mxu0 0.0
  %3550 = vmatpush1.msra.mxu0 0.0
  %3551 = vmatprep.subr.mxu0 0.0
  %3552 = vmatpush1.msra.mxu0 %v3513
  %3553 = vmatprep.subr.mxu0 0.0
  %3554 = vmatpush1.msra.mxu0 %v3512
  %3555 = vmatprep.subr.mxu0 0.0
  %3556 = vmatpush1.msra.mxu0 %v3511
  %3557 = vmatprep.subr.mxu0 0.0
  %3558 = vmatpush1.msra.mxu0 %v3510
  %3559 = vmatprep.subr.mxu0 0.0
  %3560 = vmatpush2.msra.mxu0 0.0
  %3561 = vmatprep.subr.mxu0 0.0
  %3562 = vmatpush2.msra.mxu0 0.0
  %3563 = vmatprep.subr.mxu0 0.0
  %3564 = vmatpush2.msra.mxu0 0.0
  %3565 = vmatprep.subr.mxu0 0.0
  %3566 = vmatpush2.msra.mxu0 0.0
  %3567 = vmatprep.subr.mxu0 0.0
  %3568 = vmatpush2.msra.mxu0 0.0
  %3569 = vmatprep.subr.mxu0 0.0
  %3570 = vmatpush2.msra.mxu0 0.0
  %3571 = vmatprep.subr.mxu0 0.0
  %3572 = vmatpush2.msra.mxu0 0.0
  %3573 = vmatprep.subr.mxu0 0.0
  %3574 = vmatpush2.msra.mxu0 0.0
  %3575 = vmatprep.subr.mxu0 0.0
  %3576 = vmatpush2.msra.mxu0 0.0
  %3577 = vmatprep.subr.mxu0 0.0
  %3578 = vmatpush2.msra.mxu0 0.0
  %3579 = vmatprep.subr.mxu0 0.0
  %3580 = vmatpush2.msra.mxu0 0.0
  %3581 = vmatprep.subr.mxu0 0.0
  %3582 = vmatpush2.msra.mxu0 0.0
  %3583 = vmatprep.subr.mxu0 0.0
  %3584 = vmatpush2.msra.mxu0 0.0
  %3585 = vmatprep.subr.mxu0 0.0
  %3586 = vmatpush2.msra.mxu0 0.0
  %3587 = vmatprep.subr.mxu0 0.0
  %3588 = vmatpush2.msra.mxu0 0.0
  %3589 = vmatprep.subr.mxu0 0.0
  %3590 = vmatpush2.msra.mxu0 0.0
  %3591 = vmatprep.mubr.f32.mxu0 0.0
  %3592 = vmatmul.mubr.f32.gmra.mxu0 %v3522
  %v3593 = vpop.f32.mrf.mxu0
  %v3594 = vadd.f32 %v3519, %v3593
  %v3595 = vpop.f32.mrf.mxu0
  %3596 = vmatprep.mubr.f32.mxu0 0.0
  %3597 = vmatmul.mubr.f32.gmra.mxu0 %v3525
  %v3598 = vpop.f32.mrf.mxu0
  %v3599 = vadd.f32 %v3519, %v3598
  %v3600 = vpop.f32.mrf.mxu0
  %3601 = vdwg.mxu0
  %v3602 = vadd.f32 %v3594, %v2052
  %v3603 = vadd.f32 %v3599, %v2053
  %v3604 = vsel %vm144, %v3602, 0.0
  %3605 = vadd.xlane.f32.xlu0 %v3604
  %v3606 = vpop.xlane.xlu0 %3605
  %v3607 = vsel %vm144, %v3603, 0.0
  %3608 = vadd.xlane.f32.xlu0 %v3607
  %v3609 = vpop.xlane.xlu0 %3608
  %v3610 = vmul.f32 %v3606, %v151
  %v3611 = vmul.f32 %v3609, %v151
  %v3612 = vsub.f32 %v3602, %v3610
  %v3613 = vsub.f32 %v3603, %v3611
  %v3614 = vmul.f32 %v3612, %v3612
  %v3615 = vmul.f32 %v3613, %v3613
  %v3616 = vsel %vm144, %v3614, 0.0
  %3617 = vadd.xlane.f32.xlu0 %v3616
  %v3618 = vpop.xlane.xlu0 %3617
  %v3619 = vsel %vm144, %v3615, 0.0
  %3620 = vadd.xlane.f32.xlu0 %v3619
  %v3621 = vpop.xlane.xlu0 %3620
  %v3622 = vmul.f32 %v3618, %v151
  %v3623 = vmul.f32 %v3621, %v151
  %v3624 = vadd.f32 %v3622, 1e-12
  %v3625 = vadd.f32 %v3623, 1e-12
  %v3626 = vrsqrt.pop %v3624
  %v3627 = vrsqrt.pop %v3625
  %v3628 = vmul.f32 %v3612, %v3626
  %v3629 = vmul.f32 %v3613, %v3627
  %v3630 = vld [vmem:[%s43] sm:$0x1]
  %v3632 = vlaneseq
  %v3633 = vshrl.u32 %v3632, 7
  %v3634 = vsub.s32 0, %v3633
  %v3635 = vrot.slane %v3630, %v3634
  %v3637 = vmul.f32 %v3628, %v3635
  %v3638 = vmul.f32 %v3629, %v3635
  %v3639 = vld [vmem:[%s45] sm:$0x1]
  %v3641 = vlaneseq
  %v3642 = vshrl.u32 %v3641, 7
  %v3643 = vsub.s32 0, %v3642
  %v3644 = vrot.slane %v3639, %v3643
  %v3646 = vadd.f32 %v3637, %v3644
  %v3647 = vadd.f32 %v3638, %v3644
  %v3648 = vld [vmem:[%s47] sm:$0xff]
  %v3649 = vld [vmem:[%s47 + $0x8] sm:$0xff]
  %v3650 = vld [vmem:[%s47 + $0x10] sm:$0xff]
  %v3651 = vld [vmem:[%s47 + $0x18] sm:$0xff]
  %v3652 = vld [vmem:[%s49] sm:$0x1]
  %v3654 = vlaneseq
  %v3655 = vshrl.u32 %v3654, 7
  %v3656 = vsub.s32 0, %v3655
  %v3657 = vrot.slane %v3652, %v3656
  %v3660 = vsel %vm144, %v3646, 0
  %v3663 = vsel %vm144, %v3647, 0
  %3665 = vmatprep.subr.mxu0 0.0
  %3666 = vmatpush1.msra.mxu0 0.0
  %3667 = vmatprep.subr.mxu0 0.0
  %3668 = vmatpush1.msra.mxu0 0.0
  %3669 = vmatprep.subr.mxu0 0.0
  %3670 = vmatpush1.msra.mxu0 0.0
  %3671 = vmatprep.subr.mxu0 0.0
  %3672 = vmatpush1.msra.mxu0 0.0
  %3673 = vmatprep.subr.mxu0 0.0
  %3674 = vmatpush1.msra.mxu0 0.0
  %3675 = vmatprep.subr.mxu0 0.0
  %3676 = vmatpush1.msra.mxu0 0.0
  %3677 = vmatprep.subr.mxu0 0.0
  %3678 = vmatpush1.msra.mxu0 0.0
  %3679 = vmatprep.subr.mxu0 0.0
  %3680 = vmatpush1.msra.mxu0 0.0
  %3681 = vmatprep.subr.mxu0 0.0
  %3682 = vmatpush1.msra.mxu0 0.0
  %3683 = vmatprep.subr.mxu0 0.0
  %3684 = vmatpush1.msra.mxu0 0.0
  %3685 = vmatprep.subr.mxu0 0.0
  %3686 = vmatpush1.msra.mxu0 0.0
  %3687 = vmatprep.subr.mxu0 0.0
  %3688 = vmatpush1.msra.mxu0 0.0
  %3689 = vmatprep.subr.mxu0 0.0
  %3690 = vmatpush1.msra.mxu0 %v3651
  %3691 = vmatprep.subr.mxu0 0.0
  %3692 = vmatpush1.msra.mxu0 %v3650
  %3693 = vmatprep.subr.mxu0 0.0
  %3694 = vmatpush1.msra.mxu0 %v3649
  %3695 = vmatprep.subr.mxu0 0.0
  %3696 = vmatpush1.msra.mxu0 %v3648
  %3697 = vmatprep.subr.mxu0 0.0
  %3698 = vmatpush2.msra.mxu0 0.0
  %3699 = vmatprep.subr.mxu0 0.0
  %3700 = vmatpush2.msra.mxu0 0.0
  %3701 = vmatprep.subr.mxu0 0.0
  %3702 = vmatpush2.msra.mxu0 0.0
  %3703 = vmatprep.subr.mxu0 0.0
  %3704 = vmatpush2.msra.mxu0 0.0
  %3705 = vmatprep.subr.mxu0 0.0
  %3706 = vmatpush2.msra.mxu0 0.0
  %3707 = vmatprep.subr.mxu0 0.0
  %3708 = vmatpush2.msra.mxu0 0.0
  %3709 = vmatprep.subr.mxu0 0.0
  %3710 = vmatpush2.msra.mxu0 0.0
  %3711 = vmatprep.subr.mxu0 0.0
  %3712 = vmatpush2.msra.mxu0 0.0
  %3713 = vmatprep.subr.mxu0 0.0
  %3714 = vmatpush2.msra.mxu0 0.0
  %3715 = vmatprep.subr.mxu0 0.0
  %3716 = vmatpush2.msra.mxu0 0.0
  %3717 = vmatprep.subr.mxu0 0.0
  %3718 = vmatpush2.msra.mxu0 0.0
  %3719 = vmatprep.subr.mxu0 0.0
  %3720 = vmatpush2.msra.mxu0 0.0
  %3721 = vmatprep.subr.mxu0 0.0
  %3722 = vmatpush2.msra.mxu0 0.0
  %3723 = vmatprep.subr.mxu0 0.0
  %3724 = vmatpush2.msra.mxu0 0.0
  %3725 = vmatprep.subr.mxu0 0.0
  %3726 = vmatpush2.msra.mxu0 0.0
  %3727 = vmatprep.subr.mxu0 0.0
  %3728 = vmatpush2.msra.mxu0 0.0
  %3729 = vmatprep.mubr.f32.mxu0 0.0
  %3730 = vmatmul.mubr.f32.gmra.mxu0 %v3660
  %v3731 = vpop.f32.mrf.mxu0
  %v3732 = vadd.f32 %v3657, %v3731
  %v3733 = vpop.f32.mrf.mxu0
  %3734 = vmatprep.mubr.f32.mxu0 0.0
  %3735 = vmatmul.mubr.f32.gmra.mxu0 %v3663
  %v3736 = vpop.f32.mrf.mxu0
  %v3737 = vadd.f32 %v3657, %v3736
  %v3738 = vpop.f32.mrf.mxu0
  %3739 = vdwg.mxu0
  %v3740 = vmul.f32 %v3732, %v3732
  %v3741 = vmul.f32 %v3737, %v3737
  %v3742 = vmul.f32 %v3732, %v3740
  %v3743 = vmul.f32 %v3737, %v3741
  %v3744 = vmul.f32 %v3742, 0.044715
  %v3745 = vmul.f32 %v3743, 0.044715
  %v3746 = vadd.f32 %v3732, %v3744
  %v3747 = vadd.f32 %v3737, %v3745
  %v3748 = vmul.f32 %v3746, 0.7978846
  %v3749 = vmul.f32 %v3747, 0.7978846
  %v3750 = vtanh.pop %v3748
  %v3751 = vtanh.pop %v3749
  %v3752 = vadd.f32 %v3750, 1.0
  %v3753 = vadd.f32 %v3751, 1.0
  %v3754 = vmul.f32 %v3752, 0.5
  %v3755 = vmul.f32 %v3753, 0.5
  %v3756 = vmul.f32 %v3732, %v3754
  %v3757 = vmul.f32 %v3737, %v3755
  %v3758 = vld [vmem:[%s51] sm:$0xff]
  %v3759 = vld [vmem:[%s51 + $0x8] sm:$0xff]
  %v3760 = vld [vmem:[%s51 + $0x10] sm:$0xff]
  %v3761 = vld [vmem:[%s51 + $0x18] sm:$0xff]
  %v3762 = vld [vmem:[%s51 + $0x20] sm:$0xff]
  %v3763 = vld [vmem:[%s51 + $0x28] sm:$0xff]
  %v3764 = vld [vmem:[%s51 + $0x30] sm:$0xff]
  %v3765 = vld [vmem:[%s51 + $0x38] sm:$0xff]
  %v3766 = vld [vmem:[%s53] sm:$0x1]
  %v3768 = vlaneseq
  %v3769 = vshrl.u32 %v3768, 7
  %v3770 = vsub.s32 0, %v3769
  %v3771 = vrot.slane %v3766, %v3770
  %v3774 = vsel %vm1926, %v3756, 0
  %v3777 = vsel %vm1926, %v3757, 0
  %3779 = vmatprep.subr.mxu0 0.0
  %3780 = vmatpush1.msra.mxu0 0.0
  %3781 = vmatprep.subr.mxu0 0.0
  %3782 = vmatpush1.msra.mxu0 0.0
  %3783 = vmatprep.subr.mxu0 0.0
  %3784 = vmatpush1.msra.mxu0 0.0
  %3785 = vmatprep.subr.mxu0 0.0
  %3786 = vmatpush1.msra.mxu0 0.0
  %3787 = vmatprep.subr.mxu0 0.0
  %3788 = vmatpush1.msra.mxu0 0.0
  %3789 = vmatprep.subr.mxu0 0.0
  %3790 = vmatpush1.msra.mxu0 0.0
  %3791 = vmatprep.subr.mxu0 0.0
  %3792 = vmatpush1.msra.mxu0 0.0
  %3793 = vmatprep.subr.mxu0 0.0
  %3794 = vmatpush1.msra.mxu0 0.0
  %3795 = vmatprep.subr.mxu0 0.0
  %3796 = vmatpush1.msra.mxu0 %v3765
  %3797 = vmatprep.subr.mxu0 0.0
  %3798 = vmatpush1.msra.mxu0 %v3764
  %3799 = vmatprep.subr.mxu0 0.0
  %3800 = vmatpush1.msra.mxu0 %v3763
  %3801 = vmatprep.subr.mxu0 0.0
  %3802 = vmatpush1.msra.mxu0 %v3762
  %3803 = vmatprep.subr.mxu0 0.0
  %3804 = vmatpush1.msra.mxu0 %v3761
  %3805 = vmatprep.subr.mxu0 0.0
  %3806 = vmatpush1.msra.mxu0 %v3760
  %3807 = vmatprep.subr.mxu0 0.0
  %3808 = vmatpush1.msra.mxu0 %v3759
  %3809 = vmatprep.subr.mxu0 0.0
  %3810 = vmatpush1.msra.mxu0 %v3758
  %3811 = vmatprep.subr.mxu0 0.0
  %3812 = vmatpush2.msra.mxu0 0.0
  %3813 = vmatprep.subr.mxu0 0.0
  %3814 = vmatpush2.msra.mxu0 0.0
  %3815 = vmatprep.subr.mxu0 0.0
  %3816 = vmatpush2.msra.mxu0 0.0
  %3817 = vmatprep.subr.mxu0 0.0
  %3818 = vmatpush2.msra.mxu0 0.0
  %3819 = vmatprep.subr.mxu0 0.0
  %3820 = vmatpush2.msra.mxu0 0.0
  %3821 = vmatprep.subr.mxu0 0.0
  %3822 = vmatpush2.msra.mxu0 0.0
  %3823 = vmatprep.subr.mxu0 0.0
  %3824 = vmatpush2.msra.mxu0 0.0
  %3825 = vmatprep.subr.mxu0 0.0
  %3826 = vmatpush2.msra.mxu0 0.0
  %3827 = vmatprep.subr.mxu0 0.0
  %3828 = vmatpush2.msra.mxu0 0.0
  %3829 = vmatprep.subr.mxu0 0.0
  %3830 = vmatpush2.msra.mxu0 0.0
  %3831 = vmatprep.subr.mxu0 0.0
  %3832 = vmatpush2.msra.mxu0 0.0
  %3833 = vmatprep.subr.mxu0 0.0
  %3834 = vmatpush2.msra.mxu0 0.0
  %3835 = vmatprep.subr.mxu0 0.0
  %3836 = vmatpush2.msra.mxu0 0.0
  %3837 = vmatprep.subr.mxu0 0.0
  %3838 = vmatpush2.msra.mxu0 0.0
  %3839 = vmatprep.subr.mxu0 0.0
  %3840 = vmatpush2.msra.mxu0 0.0
  %3841 = vmatprep.subr.mxu0 0.0
  %3842 = vmatpush2.msra.mxu0 0.0
  %3843 = vmatprep.mubr.f32.mxu0 0.0
  %3844 = vmatmul.mubr.f32.gmra.mxu0 %v3774
  %v3845 = vpop.f32.mrf.mxu0
  %v3846 = vadd.f32 %v3771, %v3845
  %v3847 = vpop.f32.mrf.mxu0
  %3848 = vmatprep.mubr.f32.mxu0 0.0
  %3849 = vmatmul.mubr.f32.gmra.mxu0 %v3777
  %v3850 = vpop.f32.mrf.mxu0
  %v3851 = vadd.f32 %v3771, %v3850
  %v3852 = vpop.f32.mrf.mxu0
  %3853 = vdwg.mxu0
  %v3854 = vadd.f32 %v3846, %v3646
  %v3855 = vadd.f32 %v3851, %v3647
  %v3856 = vsel %vm144, %v3854, 0.0
  %3857 = vadd.xlane.f32.xlu0 %v3856
  %v3858 = vpop.xlane.xlu0 %3857
  %v3859 = vsel %vm144, %v3855, 0.0
  %3860 = vadd.xlane.f32.xlu0 %v3859
  %v3861 = vpop.xlane.xlu0 %3860
  %v3862 = vmul.f32 %v3858, %v151
  %v3863 = vmul.f32 %v3861, %v151
  %v3864 = vsub.f32 %v3854, %v3862
  %v3865 = vsub.f32 %v3855, %v3863
  %v3866 = vmul.f32 %v3864, %v3864
  %v3867 = vmul.f32 %v3865, %v3865
  %v3868 = vsel %vm144, %v3866, 0.0
  %3869 = vadd.xlane.f32.xlu0 %v3868
  %v3870 = vpop.xlane.xlu0 %3869
  %v3871 = vsel %vm144, %v3867, 0.0
  %3872 = vadd.xlane.f32.xlu0 %v3871
  %v3873 = vpop.xlane.xlu0 %3872
  %v3874 = vmul.f32 %v3870, %v151
  %v3875 = vmul.f32 %v3873, %v151
  %v3876 = vadd.f32 %v3874, 1e-12
  %v3877 = vadd.f32 %v3875, 1e-12
  %v3878 = vrsqrt.pop %v3876
  %v3879 = vrsqrt.pop %v3877
  %v3880 = vmul.f32 %v3864, %v3878
  %v3881 = vmul.f32 %v3865, %v3879
  %v3882 = vld [vmem:[%s55] sm:$0x1]
  %v3884 = vlaneseq
  %v3885 = vshrl.u32 %v3884, 7
  %v3886 = vsub.s32 0, %v3885
  %v3887 = vrot.slane %v3882, %v3886
  %v3889 = vmul.f32 %v3880, %v3887
  %v3890 = vmul.f32 %v3881, %v3887
  %v3891 = vld [vmem:[%s57] sm:$0x1]
  %v3893 = vlaneseq
  %v3894 = vshrl.u32 %v3893, 7
  %v3895 = vsub.s32 0, %v3894
  %v3896 = vrot.slane %v3891, %v3895
  %v3898 = vadd.f32 %v3889, %v3896
  %v3899 = vadd.f32 %v3890, %v3896
  %v3901 = vrot.slane %v3899, 7
  %vm3903 = vcmask 1040384
  %v3904 = vsel %vm3903, %v3898, %v3901
  %v3905 = vld [vmem:[%s59] sm:$0xff]
  %v3906 = vld [vmem:[%s59 + $0x8] sm:$0xff]
  %v3907 = vld [vmem:[%s59 + $0x10] sm:$0xff]
  %v3908 = vld [vmem:[%s59 + $0x18] sm:$0xff]
  %v3909 = vld [vmem:[%s61] sm:$0x1]
  %v3911 = vlaneseq
  %v3912 = vshrl.u32 %v3911, 7
  %v3913 = vsub.s32 0, %v3912
  %v3914 = vrot.slane %v3909, %v3913
  %v3917 = vsel %vm144, %v3904, 0
  %3919 = vmatprep.subr.mxu0 0.0
  %3920 = vmatpush1.msra.mxu0 0.0
  %3921 = vmatprep.subr.mxu0 0.0
  %3922 = vmatpush1.msra.mxu0 0.0
  %3923 = vmatprep.subr.mxu0 0.0
  %3924 = vmatpush1.msra.mxu0 0.0
  %3925 = vmatprep.subr.mxu0 0.0
  %3926 = vmatpush1.msra.mxu0 0.0
  %3927 = vmatprep.subr.mxu0 0.0
  %3928 = vmatpush1.msra.mxu0 0.0
  %3929 = vmatprep.subr.mxu0 0.0
  %3930 = vmatpush1.msra.mxu0 0.0
  %3931 = vmatprep.subr.mxu0 0.0
  %3932 = vmatpush1.msra.mxu0 0.0
  %3933 = vmatprep.subr.mxu0 0.0
  %3934 = vmatpush1.msra.mxu0 0.0
  %3935 = vmatprep.subr.mxu0 0.0
  %3936 = vmatpush1.msra.mxu0 0.0
  %3937 = vmatprep.subr.mxu0 0.0
  %3938 = vmatpush1.msra.mxu0 0.0
  %3939 = vmatprep.subr.mxu0 0.0
  %3940 = vmatpush1.msra.mxu0 0.0
  %3941 = vmatprep.subr.mxu0 0.0
  %3942 = vmatpush1.msra.mxu0 0.0
  %3943 = vmatprep.subr.mxu0 0.0
  %3944 = vmatpush1.msra.mxu0 %v3908
  %3945 = vmatprep.subr.mxu0 0.0
  %3946 = vmatpush1.msra.mxu0 %v3907
  %3947 = vmatprep.subr.mxu0 0.0
  %3948 = vmatpush1.msra.mxu0 %v3906
  %3949 = vmatprep.subr.mxu0 0.0
  %3950 = vmatpush1.msra.mxu0 %v3905
  %3951 = vmatprep.subr.mxu0 0.0
  %3952 = vmatpush2.msra.mxu0 0.0
  %3953 = vmatprep.subr.mxu0 0.0
  %3954 = vmatpush2.msra.mxu0 0.0
  %3955 = vmatprep.subr.mxu0 0.0
  %3956 = vmatpush2.msra.mxu0 0.0
  %3957 = vmatprep.subr.mxu0 0.0
  %3958 = vmatpush2.msra.mxu0 0.0
  %3959 = vmatprep.subr.mxu0 0.0
  %3960 = vmatpush2.msra.mxu0 0.0
  %3961 = vmatprep.subr.mxu0 0.0
  %3962 = vmatpush2.msra.mxu0 0.0
  %3963 = vmatprep.subr.mxu0 0.0
  %3964 = vmatpush2.msra.mxu0 0.0
  %3965 = vmatprep.subr.mxu0 0.0
  %3966 = vmatpush2.msra.mxu0 0.0
  %3967 = vmatprep.subr.mxu0 0.0
  %3968 = vmatpush2.msra.mxu0 0.0
  %3969 = vmatprep.subr.mxu0 0.0
  %3970 = vmatpush2.msra.mxu0 0.0
  %3971 = vmatprep.subr.mxu0 0.0
  %3972 = vmatpush2.msra.mxu0 0.0
  %3973 = vmatprep.subr.mxu0 0.0
  %3974 = vmatpush2.msra.mxu0 0.0
  %3975 = vmatprep.subr.mxu0 0.0
  %3976 = vmatpush2.msra.mxu0 0.0
  %3977 = vmatprep.subr.mxu0 0.0
  %3978 = vmatpush2.msra.mxu0 0.0
  %3979 = vmatprep.subr.mxu0 0.0
  %3980 = vmatpush2.msra.mxu0 0.0
  %3981 = vmatprep.subr.mxu0 0.0
  %3982 = vmatpush2.msra.mxu0 0.0
  %3983 = vmatprep.mubr.f32.mxu0 0.0
  %3984 = vmatmul.mubr.f32.gmra.mxu0 %v3917
  %v3985 = vpop.f32.mrf.mxu0
  %v3986 = vadd.f32 %v3914, %v3985
  %v3987 = vpop.f32.mrf.mxu0
  %3988 = vdwg.mxu0
  %v3989 = vtanh.pop %v3986
  %v3990 = vld [vmem:[%s63] sm:$0xff]
  %v3991 = vld [vmem:[%s63 + $0x8] sm:$0xff]
  %v3992 = vld [vmem:[%s63 + $0x10] sm:$0xff]
  %v3993 = vld [vmem:[%s63 + $0x18] sm:$0xff]
  %v3994 = vld [vmem:[%s5] sm:$0x3]
  %v3995 = vld [vmem:[%s65] sm:$0x1]
  %3997 = vset.pattern.permute.xlu0 0
  %3998 = vperm.xlu0 %3997, %v3994
  %v3999 = vpop.permute.xlu0 %3998
  %v4002 = vlaneseq
  %v4003 = vshrl.u32 %v4002, 7
  %v4004 = vsub.s32 0, %v4003
  %v4005 = vrot.slane %v3995, %v4004
  %v4007 = vmul.f32 %v3999, %v4005
  %v4009 = vsel %vm144, %v3989, 0
  %4011 = vmatprep.subr.mxu0 0.0
  %4012 = vmatpush1.msra.mxu0 0.0
  %4013 = vmatprep.subr.mxu0 0.0
  %4014 = vmatpush1.msra.mxu0 0.0
  %4015 = vmatprep.subr.mxu0 0.0
  %4016 = vmatpush1.msra.mxu0 0.0
  %4017 = vmatprep.subr.mxu0 0.0
  %4018 = vmatpush1.msra.mxu0 0.0
  %4019 = vmatprep.subr.mxu0 0.0
  %4020 = vmatpush1.msra.mxu0 0.0
  %4021 = vmatprep.subr.mxu0 0.0
  %4022 = vmatpush1.msra.mxu0 0.0
  %4023 = vmatprep.subr.mxu0 0.0
  %4024 = vmatpush1.msra.mxu0 0.0
  %4025 = vmatprep.subr.mxu0 0.0
  %4026 = vmatpush1.msra.mxu0 0.0
  %4027 = vmatprep.subr.mxu0 0.0
  %4028 = vmatpush1.msra.mxu0 0.0
  %4029 = vmatprep.subr.mxu0 0.0
  %4030 = vmatpush1.msra.mxu0 0.0
  %4031 = vmatprep.subr.mxu0 0.0
  %4032 = vmatpush1.msra.mxu0 0.0
  %4033 = vmatprep.subr.mxu0 0.0
  %4034 = vmatpush1.msra.mxu0 0.0
  %4035 = vmatprep.subr.mxu0 0.0
  %4036 = vmatpush1.msra.mxu0 %v3993
  %4037 = vmatprep.subr.mxu0 0.0
  %4038 = vmatpush1.msra.mxu0 %v3992
  %4039 = vmatprep.subr.mxu0 0.0
  %4040 = vmatpush1.msra.mxu0 %v3991
  %4041 = vmatprep.subr.mxu0 0.0
  %4042 = vmatpush1.msra.mxu0 %v3990
  %4043 = vmatprep.subr.mxu0 0.0
  %4044 = vmatpush2.msra.mxu0 0.0
  %4045 = vmatprep.subr.mxu0 0.0
  %4046 = vmatpush2.msra.mxu0 0.0
  %4047 = vmatprep.subr.mxu0 0.0
  %4048 = vmatpush2.msra.mxu0 0.0
  %4049 = vmatprep.subr.mxu0 0.0
  %4050 = vmatpush2.msra.mxu0 0.0
  %4051 = vmatprep.subr.mxu0 0.0
  %4052 = vmatpush2.msra.mxu0 0.0
  %4053 = vmatprep.subr.mxu0 0.0
  %4054 = vmatpush2.msra.mxu0 0.0
  %4055 = vmatprep.subr.mxu0 0.0
  %4056 = vmatpush2.msra.mxu0 0.0
  %4057 = vmatprep.subr.mxu0 0.0
  %4058 = vmatpush2.msra.mxu0 0.0
  %4059 = vmatprep.subr.mxu0 0.0
  %4060 = vmatpush2.msra.mxu0 0.0
  %4061 = vmatprep.subr.mxu0 0.0
  %4062 = vmatpush2.msra.mxu0 0.0
  %4063 = vmatprep.subr.mxu0 0.0
  %4064 = vmatpush2.msra.mxu0 0.0
  %4065 = vmatprep.subr.mxu0 0.0
  %4066 = vmatpush2.msra.mxu0 0.0
  %4067 = vmatprep.subr.mxu0 0.0
  %4068 = vmatpush2.msra.mxu0 0.0
  %4069 = vmatprep.subr.mxu0 0.0
  %4070 = vmatpush2.msra.mxu0 0.0
  %4071 = vmatprep.subr.mxu0 0.0
  %4072 = vmatpush2.msra.mxu0 0.0
  %4073 = vmatprep.subr.mxu0 0.0
  %4074 = vmatpush2.msra.mxu0 0.0
  %4075 = vmatprep.mubr.f32.mxu0 0.0
  %4076 = vmatmul.mubr.f32.gmra.mxu0 %v4009
  %v4077 = vpop.f32.mrf.mxu0
  %v4078 = vadd.f32 %v4007, %v4077
  %v4079 = vpop.f32.mrf.mxu0
  %4080 = vdwg.mxu0
  %v4081 = vld [vmem:[%s67] sm:$0x1]
  %v4083 = vlaneseq
  %v4084 = vshrl.u32 %v4083, 7
  %v4085 = vsub.s32 0, %v4084
  %v4086 = vrot.slane %v4081, %v4085
  %v4088 = vadd.f32 %v4078, %v4086
  %vm4089 = vcmask 17408
  %4090 = vst.msk [vmem:[%s69] sm:$0x3] %vm4089, %v4088
  // Predicated region
  $region138: #{multitask_forward.1} parent=0 // pred_check
    _
  $region139: #{multitask_forward.1} parent=0 // pred_check_branch
    %4092 = sbr.rel (0) target = $region141
  $region140: #{multitask_forward.1} parent=0 // pred_region
    _
  $region141: #{multitask_forward.1} parent=0 // pred_fallthru
    _
  // Predicated region
  $region142: #{multitask_forward.1} parent=0 // pred_check
    _
  $region143: #{multitask_forward.1} parent=0 // pred_check_branch
    %4094 = sbr.rel (0) target = $region145
  $region144: #{multitask_forward.1} parent=0 // pred_region
    _
  $region145: #{multitask_forward.1} parent=0 // pred_fallthru
    _

</llo_original>
